<compile_context>
chip_gen: v6e
topology: v6e:2x2x1
jax: 0.10.0
libtpu: 0.0.40
codegen_flags: <defaults>
</compile_context>

<pallas_src>
import jax
import jax.numpy as jnp
from jax.experimental import pallas as pl
from jax.experimental.pallas import tpu as pltpu

NUM_NOTES = 88
FEAT_DIM = 1280
H1 = 256
H2 = 128
PATCH = 8
FC_PAD = 128           # lane-dense FC output (88 -> 128), sliced back in the wrapper
VMEM_LIMIT = 32 * 1024 * 1024


def _round_up(x, m):
    return ((x + m - 1) // m) * m


# ----------------------------------------------------------------------------
# Tiled matmul + bias (bf16 operands, f32 accumulation)
# ----------------------------------------------------------------------------
def _matmul_bias_kernel(x_ref, w_ref, b_ref, o_ref, acc_ref):
    k = pl.program_id(2)

    @pl.when(k == 0)
    def _init():
        acc_ref[...] = jnp.zeros_like(acc_ref)

    acc_ref[...] += jnp.dot(
        x_ref[...], w_ref[...], preferred_element_type=jnp.float32
    )

    @pl.when(k == pl.num_programs(2) - 1)
    def _finalize():
        o_ref[...] = (acc_ref[...] + b_ref[...]).astype(o_ref.dtype)


def pallas_matmul_bias(x, w, b, *, tm=256, tk=256, tn=256):
    """x: (M, K) f32, w: (K, N) f32, b: (1, N) f32 -> (M, N) f32."""
    M, K = x.shape
    _, N = w.shape

    tm = min(tm, _round_up(M, 8))
    tk = min(tk, _round_up(K, 128))
    tn = min(tn, _round_up(N, 128))
    Mp, Kp, Np = _round_up(M, tm), _round_up(K, tk), _round_up(N, tn)

    x_p = x if (Mp, Kp) == (M, K) else jnp.pad(x, ((0, Mp - M), (0, Kp - K)))
    w_p = w if (Kp, Np) == (K, N) else jnp.pad(w, ((0, Kp - K), (0, Np - N)))
    b_p = b if Np == N else jnp.pad(b, ((0, 0), (0, Np - N)))
    x_p = x_p.astype(jnp.bfloat16)
    w_p = w_p.astype(jnp.bfloat16)

    out = pl.pallas_call(
        _matmul_bias_kernel,
        out_shape=jax.ShapeDtypeStruct((Mp, Np), jnp.float32),
        grid=(Mp // tm, Np // tn, Kp // tk),
        in_specs=[
            pl.BlockSpec((tm, tk), lambda i, j, k: (i, k)),
            pl.BlockSpec((tk, tn), lambda i, j, k: (k, j)),
            pl.BlockSpec((1, tn), lambda i, j, k: (0, j)),
        ],
        out_specs=pl.BlockSpec((tm, tn), lambda i, j, k: (i, j)),
        scratch_shapes=[pltpu.VMEM((tm, tn), jnp.float32)],
        compiler_params=pltpu.CompilerParams(
            dimension_semantics=("parallel", "parallel", "arbitrary"),
            vmem_limit_bytes=VMEM_LIMIT,
        ),
    )(x_p, w_p, b_p)

    if (Mp, Np) != (M, N):
        out = out[:M, :N]
    return out


# ----------------------------------------------------------------------------
# Fused LSTM1 + LSTM2 + FC(+sigmoid) sequential kernel over T
# ----------------------------------------------------------------------------
def _lstm_cell(gates, c_prev, H):
    """PyTorch gate order (i, f, g, o); gates: (B, 4H) f32."""
    i_g = jax.nn.sigmoid(gates[:, 0 * H:1 * H])
    f_g = jax.nn.sigmoid(gates[:, 1 * H:2 * H])
    g_g = jnp.tanh(gates[:, 2 * H:3 * H])
    o_g = jax.nn.sigmoid(gates[:, 3 * H:4 * H])
    c_new = f_g * c_prev + i_g * g_g
    h_new = o_g * jnp.tanh(c_new)
    return h_new, c_new


def _fused_rnn_head_kernel(gx1_ref, whh1_ref, wih2_ref, whh2_ref, b2_ref,
                           fcw_ref, fcb_ref, out_ref,
                           h1_scr, c1_scr, h2_scr, c2_scr):
    t = pl.program_id(0)

    @pl.when(t == 0)
    def _init():
        h1_scr[...] = jnp.zeros_like(h1_scr)
        c1_scr[...] = jnp.zeros_like(c1_scr)
        h2_scr[...] = jnp.zeros_like(h2_scr)
        c2_scr[...] = jnp.zeros_like(c2_scr)

    # --- LSTM layer 1: x-projection precomputed (gx1), only h @ W_hh here.
    gates1 = gx1_ref[t] + jnp.dot(
        h1_scr[...].astype(jnp.bfloat16), whh1_ref[...],
        preferred_element_type=jnp.float32)
    h1_new, c1_new = _lstm_cell(gates1, c1_scr[...], H1)
    h1_scr[...] = h1_new
    c1_scr[...] = c1_new

    # --- LSTM layer 2 (consumes layer-1 output at the same timestep).
    h1_b16 = h1_new.astype(jnp.bfloat16)
    gates2 = (
        jnp.dot(h1_b16, wih2_ref[...], preferred_element_type=jnp.float32)
        + jnp.dot(h2_scr[...].astype(jnp.bfloat16), whh2_ref[...],
                  preferred_element_type=jnp.float32)
        + b2_ref[...]
    )
    h2_new, c2_new = _lstm_cell(gates2, c2_scr[...], H2)
    h2_scr[...] = h2_new
    c2_scr[...] = c2_new

    # --- FC + sigmoid head (output lane-padded to 128 for dense stores).
    logits = jnp.dot(h2_new.astype(jnp.bfloat16), fcw_ref[...],
                     preferred_element_type=jnp.float32) + fcb_ref[...]
    out_ref[0] = jax.nn.sigmoid(logits)


def pallas_fused_lstm_head(gx1, w_hh1, w_ih2, w_hh2, b2, fc_w_p, fc_b_p):
    """gx1: (T, B, 4*H1) f32 precomputed x-projection; weights bf16; biases f32."""
    T, B, G1 = gx1.shape
    n_pad = fc_w_p.shape[1]
    return pl.pallas_call(
        _fused_rnn_head_kernel,
        out_shape=jax.ShapeDtypeStruct((T, B, n_pad), jnp.float32),
        grid=(T,),
        in_specs=[
            # Constant index_maps -> one DMA, then VMEM-resident across all T steps.
            pl.BlockSpec((T, B, G1), lambda t: (0, 0, 0)),
            pl.BlockSpec((H1, 4 * H1), lambda t: (0, 0)),
            pl.BlockSpec((H1, 4 * H2), lambda t: (0, 0)),
            pl.BlockSpec((H2, 4 * H2), lambda t: (0, 0)),
            pl.BlockSpec((1, 4 * H2), lambda t: (0, 0)),
            pl.BlockSpec((H2, n_pad), lambda t: (0, 0)),
            pl.BlockSpec((1, n_pad), lambda t: (0, 0)),
        ],
        out_specs=pl.BlockSpec((1, B, n_pad), lambda t: (t, 0, 0)),
        scratch_shapes=[
            pltpu.VMEM((B, H1), jnp.float32),  # h1
            pltpu.VMEM((B, H1), jnp.float32),  # c1
            pltpu.VMEM((B, H2), jnp.float32),  # h2
            pltpu.VMEM((B, H2), jnp.float32),  # c2
        ],
        compiler_params=pltpu.CompilerParams(
            dimension_semantics=("arbitrary",),   # true recurrence over T
            vmem_limit_bytes=VMEM_LIMIT,
        ),
    )(gx1, w_hh1, w_ih2, w_hh2, b2, fc_w_p, fc_b_p)


# ----------------------------------------------------------------------------
# Parameter initialization (deterministic, synthetic)
# ----------------------------------------------------------------------------
def init_params(key, in_channels):
    ks = jax.random.split(key, 10)
    s = 0.02

    def norm(k, shape, scale=s):
        return scale * jax.random.normal(k, shape, dtype=jnp.float32)

    return {
        # patch-embed "feature extractor": conv(C -> 1280, k=PATCH, stride=PATCH)
        "stem_w": norm(ks[0], (in_channels * PATCH * PATCH, FEAT_DIM)),
        "stem_b": norm(ks[1], (1, FEAT_DIM)),
        # LSTM1: 1280 -> 256  (weights stored transposed for matmul; gate order i,f,g,o)
        "w_ih1": norm(ks[2], (FEAT_DIM, 4 * H1)),
        "w_hh1": norm(ks[3], (H1, 4 * H1)),
        "b1": norm(ks[4], (1, 4 * H1)),      # b_ih + b_hh combined
        # LSTM2: 256 -> 128
        "w_ih2": norm(ks[5], (H1, 4 * H2)),
        "w_hh2": norm(ks[6], (H2, 4 * H2)),
        "b2": norm(ks[7], (1, 4 * H2)),
        # FC: 128 -> 88
        "fc_w": norm(ks[8], (H2, NUM_NOTES)),
        "fc_b": norm(ks[9], (1, NUM_NOTES)),
    }


# ----------------------------------------------------------------------------
# Forward pass
# ----------------------------------------------------------------------------
@jax.jit
def music_transcription_forward(x, params):
    B, C, H, W = x.shape
    p = PATCH
    Hp, Wp = H // p, W // p
    n_patch = Hp * Wp

    # --- im2col for the stride==kernel stem conv: (B*Np, C*p*p), K padded 192->256
    #     automatically by the tiled matmul wrapper.
    patches = (
        x.reshape(B, C, Hp, p, Wp, p)
        .transpose(0, 2, 4, 1, 3, 5)
        .reshape(B * n_patch, C * p * p)
    )
    feat = pallas_matmul_bias(patches, params["stem_w"], params["stem_b"])  # (B*Np, 1280)

    # NCHW feature map, then the PyTorch x.view(B, -1, 1280) quirk (kept faithfully).
    feat_nchw = feat.reshape(B, Hp, Wp, FEAT_DIM).transpose(0, 3, 1, 2)
    seq = feat_nchw.reshape(B, -1, FEAT_DIM)            # (B, T, 1280)
    T = seq.shape[1]

    # --- LSTM1 input projection hoisted out of the recurrence: one big MXU matmul.
    gx1 = pallas_matmul_bias(
        seq.reshape(B * T, FEAT_DIM), params["w_ih1"], params["b1"])  # (B*T, 4*H1)
    gx1 = gx1.reshape(B, T, 4 * H1).transpose(1, 0, 2)   # time-major (T, B, 4*H1)

    # --- fused LSTM1 + LSTM2 + FC(+sigmoid) sequential kernel.
    fc_w_p = jnp.pad(params["fc_w"], ((0, 0), (0, FC_PAD - NUM_NOTES)))
    fc_b_p = jnp.pad(params["fc_b"], ((0, 0), (0, FC_PAD - NUM_NOTES)))
    probs_tb = pallas_fused_lstm_head(
        gx1,
        params["w_hh1"].astype(jnp.bfloat16),
        params["w_ih2"].astype(jnp.bfloat16),
        params["w_hh2"].astype(jnp.bfloat16),
        params["b2"],
        fc_w_p.astype(jnp.bfloat16),
        fc_b_p,
    )                                                    # (T, B, 128)

    # slice padded notes back to 88 and permute -> (B, num_notes, T)
    out = probs_tb[:, :, :NUM_NOTES].transpose(1, 2, 0)
    return out


# ----------------------------------------------------------------------------
# Main
# ----------------------------------------------------------------------------
if __name__ == "__main__":
    key = jax.random.PRNGKey(0)
    k_x, k_p = jax.random.split(key)

    B, C, H, W = 2, 3, 32, 32          # 32/PATCH = 4 -> 16 patches -> T = 16
    x = jax.random.normal(k_x, (B, C, H, W), dtype=jnp.float32)
    params = init_params(k_p, C)

    out = music_transcription_forward(x, params)
    out = jax.block_until_ready(out)

    expected_T = (H // PATCH) * (W // PATCH)
    assert out.shape == (B, NUM_NOTES, expected_T), out.shape
    assert bool(jnp.all((out >= 0.0) & (out <= 1.0)))
    assert bool(jnp.all(jnp.isfinite(out)))
    print("KERNEL_OK")
</pallas_src>

<mosaic_0001>
module attributes {stable_mosaic.version = 11 : i64} {
  func.func @_matmul_bias_kernel(%arg0: i32, %arg1: i32, %arg2: i32, %arg3: memref<32x256xbf16, #tpu.memory_space<vmem>>, %arg4: memref<256x256xbf16, #tpu.memory_space<vmem>>, %arg5: memref<1x256xf32, #tpu.memory_space<vmem>>, %arg6: memref<32x256xf32, #tpu.memory_space<vmem>>, %arg7: memref<32x256xf32, #tpu.memory_space<vmem>>) attributes {dimension_semantics = [#tpu.dimension_semantics<parallel>, #tpu.dimension_semantics<parallel>, #tpu.dimension_semantics<arbitrary>], iteration_bounds = array<i64: 1, 5, 1>, scalar_prefetch = 0 : i64, scratch_operands = 1 : i64, tpu.core_type = #tpu.core_type<tc>, window_params = [{transform_indices = @transform_0, window_bounds = array<i64: 32, 256>}, {transform_indices = @transform_1, window_bounds = array<i64: 256, 256>}, {transform_indices = @transform_2, window_bounds = array<i64: 1, 256>}, {transform_indices = @transform_3, window_bounds = array<i64: 32, 256>}]} {
    %c0_i32 = arith.constant 0 : i32
    %0 = arith.cmpi eq, %arg2, %c0_i32 : i32
    %1 = arith.extui %0 : i1 to i32
    %c0_i32_0 = arith.constant 0 : i32
    %2 = arith.cmpi ne, %1, %c0_i32_0 : i32
    scf.if %2 {
      %cst_10 = arith.constant 0.000000e+00 : f32
      %12 = vector.broadcast %cst_10 : f32 to vector<32x256xf32>
      %c0_11 = arith.constant 0 : index
      %c0_12 = arith.constant 0 : index
      %13 = vector.load %arg7[%c0_11, %c0_12] : memref<32x256xf32, #tpu.memory_space<vmem>>, vector<32x256xf32>
      tpu.vector_store %arg7[%c0_11, %c0_12], %12 {strides = array<i32>} : memref<32x256xf32, #tpu.memory_space<vmem>>, vector<32x256xf32>,
    } else {
    }
    %c0 = arith.constant 0 : index
    %c0_1 = arith.constant 0 : index
    %3 = vector.load %arg7[%c0, %c0_1] : memref<32x256xf32, #tpu.memory_space<vmem>>, vector<32x256xf32>
    %c0_2 = arith.constant 0 : index
    %c0_3 = arith.constant 0 : index
    %4 = vector.load %arg3[%c0_2, %c0_3] : memref<32x256xbf16, #tpu.memory_space<vmem>>, vector<32x256xbf16>
    %c0_4 = arith.constant 0 : index
    %c0_5 = arith.constant 0 : index
    %5 = vector.load %arg4[%c0_4, %c0_5] : memref<256x256xbf16, #tpu.memory_space<vmem>>, vector<256x256xbf16>
    %cst = arith.constant dense<0.000000e+00> : vector<32x256xf32>
    %6 = tpu.matmul %4, %5, %cst {dimension_numbers = #tpu.dot_dimension_numbers<[1], [0], [0], [1], [0, 0, 1, 1], [], []>} : vector<32x256xbf16>, vector<256x256xbf16>, vector<32x256xf32> -> vector<32x256xf32>
    %7 = arith.addf %3, %6 : vector<32x256xf32>
    %c0_6 = arith.constant 0 : index
    %c0_7 = arith.constant 0 : index
    %8 = vector.load %arg7[%c0_6, %c0_7] : memref<32x256xf32, #tpu.memory_space<vmem>>, vector<32x256xf32>
    tpu.vector_store %arg7[%c0_6, %c0_7], %7 {strides = array<i32>} : memref<32x256xf32, #tpu.memory_space<vmem>>, vector<32x256xf32>,
    %c0_i32_8 = arith.constant 0 : i32
    %9 = arith.cmpi eq, %arg2, %c0_i32_8 : i32
    %10 = arith.extui %9 : i1 to i32
    %c0_i32_9 = arith.constant 0 : i32
    %11 = arith.cmpi ne, %10, %c0_i32_9 : i32
    scf.if %11 {
      %c0_10 = arith.constant 0 : index
      %c0_11 = arith.constant 0 : index
      %12 = vector.load %arg7[%c0_10, %c0_11] : memref<32x256xf32, #tpu.memory_space<vmem>>, vector<32x256xf32>
      %c0_12 = arith.constant 0 : index
      %c0_13 = arith.constant 0 : index
      %13 = vector.load %arg5[%c0_12, %c0_13] : memref<1x256xf32, #tpu.memory_space<vmem>>, vector<1x256xf32>
      %14 = vector.broadcast %13 : vector<1x256xf32> to vector<32x256xf32>
      %15 = arith.addf %12, %14 : vector<32x256xf32>
      %c0_14 = arith.constant 0 : index
      %c0_15 = arith.constant 0 : index
      %16 = vector.load %arg6[%c0_14, %c0_15] : memref<32x256xf32, #tpu.memory_space<vmem>>, vector<32x256xf32>
      tpu.vector_store %arg6[%c0_14, %c0_15], %15 {strides = array<i32>} : memref<32x256xf32, #tpu.memory_space<vmem>>, vector<32x256xf32>,
    } else {
    }
    return
  }
  func.func @transform_0(%arg0: i32, %arg1: i32, %arg2: i32) -> (i32, i32) {
    %c0_i32 = arith.constant 0 : i32
    return %arg0, %arg2 : i32, i32
  }
  func.func @transform_1(%arg0: i32, %arg1: i32, %arg2: i32) -> (i32, i32) {
    %c0_i32 = arith.constant 0 : i32
    return %arg2, %arg1 : i32, i32
  }
  func.func @transform_2(%arg0: i32, %arg1: i32, %arg2: i32) -> (i32, i32) {
    %c0_i32 = arith.constant 0 : i32
    %c0_i32_0 = arith.constant 0 : i32
    return %c0_i32, %arg1 : i32, i32
  }
  func.func @transform_3(%arg0: i32, %arg1: i32, %arg2: i32) -> (i32, i32) {
    %c0_i32 = arith.constant 0 : i32
    return %arg0, %arg1 : i32, i32
  }
}

module attributes {stable_mosaic.version = 11 : i64} {
  func.func @_matmul_bias_kernel(%arg0: i32, %arg1: i32, %arg2: i32, %arg3: memref<32x256xbf16, #tpu.memory_space<vmem>>, %arg4: memref<256x256xbf16, #tpu.memory_space<vmem>>, %arg5: memref<1x256xf32, #tpu.memory_space<vmem>>, %arg6: memref<32x256xf32, #tpu.memory_space<vmem>>, %arg7: memref<32x256xf32, #tpu.memory_space<vmem>>) attributes {dimension_semantics = [#tpu.dimension_semantics<parallel>, #tpu.dimension_semantics<parallel>, #tpu.dimension_semantics<arbitrary>], iteration_bounds = array<i64: 1, 4, 5>, scalar_prefetch = 0 : i64, scratch_operands = 1 : i64, tpu.core_type = #tpu.core_type<tc>, window_params = [{transform_indices = @transform_0, window_bounds = array<i64: 32, 256>}, {transform_indices = @transform_1, window_bounds = array<i64: 256, 256>}, {transform_indices = @transform_2, window_bounds = array<i64: 1, 256>}, {transform_indices = @transform_3, window_bounds = array<i64: 32, 256>}]} {
    %c0_i32 = arith.constant 0 : i32
    %0 = arith.cmpi eq, %arg2, %c0_i32 : i32
    %1 = arith.extui %0 : i1 to i32
    %c0_i32_0 = arith.constant 0 : i32
    %2 = arith.cmpi ne, %1, %c0_i32_0 : i32
    scf.if %2 {
      %cst_9 = arith.constant 0.000000e+00 : f32
      %12 = vector.broadcast %cst_9 : f32 to vector<32x256xf32>
      %c0_10 = arith.constant 0 : index
      %c0_11 = arith.constant 0 : index
      %13 = vector.load %arg7[%c0_10, %c0_11] : memref<32x256xf32, #tpu.memory_space<vmem>>, vector<32x256xf32>
      tpu.vector_store %arg7[%c0_10, %c0_11], %12 {strides = array<i32>} : memref<32x256xf32, #tpu.memory_space<vmem>>, vector<32x256xf32>,
    } else {
    }
    %c0 = arith.constant 0 : index
    %c0_1 = arith.constant 0 : index
    %3 = vector.load %arg7[%c0, %c0_1] : memref<32x256xf32, #tpu.memory_space<vmem>>, vector<32x256xf32>
    %c0_2 = arith.constant 0 : index
    %c0_3 = arith.constant 0 : index
    %4 = vector.load %arg3[%c0_2, %c0_3] : memref<32x256xbf16, #tpu.memory_space<vmem>>, vector<32x256xbf16>
    %c0_4 = arith.constant 0 : index
    %c0_5 = arith.constant 0 : index
    %5 = vector.load %arg4[%c0_4, %c0_5] : memref<256x256xbf16, #tpu.memory_space<vmem>>, vector<256x256xbf16>
    %cst = arith.constant dense<0.000000e+00> : vector<32x256xf32>
    %6 = tpu.matmul %4, %5, %cst {dimension_numbers = #tpu.dot_dimension_numbers<[1], [0], [0], [1], [0, 0, 1, 1], [], []>} : vector<32x256xbf16>, vector<256x256xbf16>, vector<32x256xf32> -> vector<32x256xf32>
    %7 = arith.addf %3, %6 : vector<32x256xf32>
    %c0_6 = arith.constant 0 : index
    %c0_7 = arith.constant 0 : index
    %8 = vector.load %arg7[%c0_6, %c0_7] : memref<32x256xf32, #tpu.memory_space<vmem>>, vector<32x256xf32>
    tpu.vector_store %arg7[%c0_6, %c0_7], %7 {strides = array<i32>} : memref<32x256xf32, #tpu.memory_space<vmem>>, vector<32x256xf32>,
    %c4_i32 = arith.constant 4 : i32
    %9 = arith.cmpi eq, %arg2, %c4_i32 : i32
    %10 = arith.extui %9 : i1 to i32
    %c0_i32_8 = arith.constant 0 : i32
    %11 = arith.cmpi ne, %10, %c0_i32_8 : i32
    scf.if %11 {
      %c0_9 = arith.constant 0 : index
      %c0_10 = arith.constant 0 : index
      %12 = vector.load %arg7[%c0_9, %c0_10] : memref<32x256xf32, #tpu.memory_space<vmem>>, vector<32x256xf32>
      %c0_11 = arith.constant 0 : index
      %c0_12 = arith.constant 0 : index
      %13 = vector.load %arg5[%c0_11, %c0_12] : memref<1x256xf32, #tpu.memory_space<vmem>>, vector<1x256xf32>
      %14 = vector.broadcast %13 : vector<1x256xf32> to vector<32x256xf32>
      %15 = arith.addf %12, %14 : vector<32x256xf32>
      %c0_13 = arith.constant 0 : index
      %c0_14 = arith.constant 0 : index
      %16 = vector.load %arg6[%c0_13, %c0_14] : memref<32x256xf32, #tpu.memory_space<vmem>>, vector<32x256xf32>
      tpu.vector_store %arg6[%c0_13, %c0_14], %15 {strides = array<i32>} : memref<32x256xf32, #tpu.memory_space<vmem>>, vector<32x256xf32>,
    } else {
    }
    return
  }
  func.func @transform_0(%arg0: i32, %arg1: i32, %arg2: i32) -> (i32, i32) {
    %c0_i32 = arith.constant 0 : i32
    return %arg0, %arg2 : i32, i32
  }
  func.func @transform_1(%arg0: i32, %arg1: i32, %arg2: i32) -> (i32, i32) {
    %c0_i32 = arith.constant 0 : i32
    return %arg2, %arg1 : i32, i32
  }
  func.func @transform_2(%arg0: i32, %arg1: i32, %arg2: i32) -> (i32, i32) {
    %c0_i32 = arith.constant 0 : i32
    %c0_i32_0 = arith.constant 0 : i32
    return %c0_i32, %arg1 : i32, i32
  }
  func.func @transform_3(%arg0: i32, %arg1: i32, %arg2: i32) -> (i32, i32) {
    %c0_i32 = arith.constant 0 : i32
    return %arg0, %arg1 : i32, i32
  }
}

module attributes {stable_mosaic.version = 11 : i64} {
  func.func @_fused_rnn_head_kernel(%arg0: i32, %arg1: memref<16x2x1024xf32, #tpu.memory_space<vmem>>, %arg2: memref<256x1024xbf16, #tpu.memory_space<vmem>>, %arg3: memref<256x512xbf16, #tpu.memory_space<vmem>>, %arg4: memref<128x512xbf16, #tpu.memory_space<vmem>>, %arg5: memref<1x512xf32, #tpu.memory_space<vmem>>, %arg6: memref<128x128xbf16, #tpu.memory_space<vmem>>, %arg7: memref<1x128xf32, #tpu.memory_space<vmem>>, %arg8: memref<1x2x128xf32, #tpu.memory_space<vmem>>, %arg9: memref<2x256xf32, #tpu.memory_space<vmem>>, %arg10: memref<2x256xf32, #tpu.memory_space<vmem>>, %arg11: memref<2x128xf32, #tpu.memory_space<vmem>>, %arg12: memref<2x128xf32, #tpu.memory_space<vmem>>) attributes {dimension_semantics = [#tpu.dimension_semantics<arbitrary>], iteration_bounds = array<i64: 16>, scalar_prefetch = 0 : i64, scratch_operands = 4 : i64, tpu.core_type = #tpu.core_type<tc>, window_params = [{pipeline_mode = #tpu.pipeline_mode<synchronous>, transform_indices = @transform_0, window_bounds = array<i64: 16, 2, 1024>}, {pipeline_mode = #tpu.pipeline_mode<synchronous>, transform_indices = @transform_1, window_bounds = array<i64: 256, 1024>}, {pipeline_mode = #tpu.pipeline_mode<synchronous>, transform_indices = @transform_2, window_bounds = array<i64: 256, 512>}, {pipeline_mode = #tpu.pipeline_mode<synchronous>, transform_indices = @transform_3, window_bounds = array<i64: 128, 512>}, {pipeline_mode = #tpu.pipeline_mode<synchronous>, transform_indices = @transform_4, window_bounds = array<i64: 1, 512>}, {pipeline_mode = #tpu.pipeline_mode<synchronous>, transform_indices = @transform_5, window_bounds = array<i64: 128, 128>}, {pipeline_mode = #tpu.pipeline_mode<synchronous>, transform_indices = @transform_6, window_bounds = array<i64: 1, 128>}, {transform_indices = @transform_7, window_bounds = array<i64: 1, 2, 128>}]} {
    %c0_i32 = arith.constant 0 : i32
    %0 = arith.cmpi eq, %arg0, %c0_i32 : i32
    %1 = arith.extui %0 : i1 to i32
    %c0_i32_0 = arith.constant 0 : i32
    %2 = arith.cmpi ne, %1, %c0_i32_0 : i32
    scf.if %2 {
      %cst_43 = arith.constant 0.000000e+00 : f32
      %92 = vector.broadcast %cst_43 : f32 to vector<2x256xf32>
      %c0_44 = arith.constant 0 : index
      %c0_45 = arith.constant 0 : index
      %93 = vector.load %arg9[%c0_44, %c0_45] : memref<2x256xf32, #tpu.memory_space<vmem>>, vector<2x256xf32>
      tpu.vector_store %arg9[%c0_44, %c0_45], %92 {strides = array<i32>} : memref<2x256xf32, #tpu.memory_space<vmem>>, vector<2x256xf32>,
      %cst_46 = arith.constant 0.000000e+00 : f32
      %94 = vector.broadcast %cst_46 : f32 to vector<2x256xf32>
      %c0_47 = arith.constant 0 : index
      %c0_48 = arith.constant 0 : index
      %95 = vector.load %arg10[%c0_47, %c0_48] : memref<2x256xf32, #tpu.memory_space<vmem>>, vector<2x256xf32>
      tpu.vector_store %arg10[%c0_47, %c0_48], %94 {strides = array<i32>} : memref<2x256xf32, #tpu.memory_space<vmem>>, vector<2x256xf32>,
      %cst_49 = arith.constant 0.000000e+00 : f32
      %96 = vector.broadcast %cst_49 : f32 to vector<2x128xf32>
      %c0_50 = arith.constant 0 : index
      %c0_51 = arith.constant 0 : index
      %97 = vector.load %arg11[%c0_50, %c0_51] : memref<2x128xf32, #tpu.memory_space<vmem>>, vector<2x128xf32>
      tpu.vector_store %arg11[%c0_50, %c0_51], %96 {strides = array<i32>} : memref<2x128xf32, #tpu.memory_space<vmem>>, vector<2x128xf32>,
      %cst_52 = arith.constant 0.000000e+00 : f32
      %98 = vector.broadcast %cst_52 : f32 to vector<2x128xf32>
      %c0_53 = arith.constant 0 : index
      %c0_54 = arith.constant 0 : index
      %99 = vector.load %arg12[%c0_53, %c0_54] : memref<2x128xf32, #tpu.memory_space<vmem>>, vector<2x128xf32>
      tpu.vector_store %arg12[%c0_53, %c0_54], %98 {strides = array<i32>} : memref<2x128xf32, #tpu.memory_space<vmem>>, vector<2x128xf32>,
    } else {
    }
    %3 = arith.index_cast %arg0 : i32 to index
    %c0 = arith.constant 0 : index
    %c0_1 = arith.constant 0 : index
    %4 = vector.load %arg1[%3, %c0, %c0_1] : memref<16x2x1024xf32, #tpu.memory_space<vmem>>, vector<1x2x1024xf32>
    %5 = vector.shape_cast %4 : vector<1x2x1024xf32> to vector<2x1024xf32>
    %c0_2 = arith.constant 0 : index
    %c0_3 = arith.constant 0 : index
    %6 = vector.load %arg9[%c0_2, %c0_3] : memref<2x256xf32, #tpu.memory_space<vmem>>, vector<2x256xf32>
    %7 = arith.truncf %6 : vector<2x256xf32> to vector<2x256xbf16>
    %c0_4 = arith.constant 0 : index
    %c0_5 = arith.constant 0 : index
    %8 = vector.load %arg2[%c0_4, %c0_5] : memref<256x1024xbf16, #tpu.memory_space<vmem>>, vector<256x1024xbf16>
    %cst = arith.constant dense<0.000000e+00> : vector<2x1024xf32>
    %9 = tpu.matmul %7, %8, %cst {dimension_numbers = #tpu.dot_dimension_numbers<[1], [0], [0], [1], [0, 0, 1, 1], [], []>} : vector<2x256xbf16>, vector<256x1024xbf16>, vector<2x1024xf32> -> vector<2x1024xf32>
    %10 = arith.addf %5, %9 : vector<2x1024xf32>
    %c0_6 = arith.constant 0 : index
    %c0_7 = arith.constant 0 : index
    %11 = vector.load %arg10[%c0_6, %c0_7] : memref<2x256xf32, #tpu.memory_space<vmem>>, vector<2x256xf32>
    %12 = vector.extract_strided_slice %10 {offsets = [0, 0], sizes = [2, 256], strides = [1, 1]} : vector<2x1024xf32> to vector<2x256xf32>
    %13 = arith.negf %12 : vector<2x256xf32>
    %14 = math.exp %13 : vector<2x256xf32>
    %cst_8 = arith.constant 1.000000e+00 : f32
    %15 = vector.broadcast %cst_8 : f32 to vector<2x256xf32>
    %16 = arith.addf %15, %14 : vector<2x256xf32>
    %17 = arith.divf %15, %16 : vector<2x256xf32>
    %18 = vector.extract_strided_slice %10 {offsets = [0, 256], sizes = [2, 256], strides = [1, 1]} : vector<2x1024xf32> to vector<2x256xf32>
    %19 = arith.negf %18 : vector<2x256xf32>
    %20 = math.exp %19 : vector<2x256xf32>
    %cst_9 = arith.constant 1.000000e+00 : f32
    %21 = vector.broadcast %cst_9 : f32 to vector<2x256xf32>
    %22 = arith.addf %21, %20 : vector<2x256xf32>
    %23 = arith.divf %21, %22 : vector<2x256xf32>
    %24 = vector.extract_strided_slice %10 {offsets = [0, 512], sizes = [2, 256], strides = [1, 1]} : vector<2x1024xf32> to vector<2x256xf32>
    %25 = math.tanh %24 : vector<2x256xf32>
    %26 = vector.extract_strided_slice %10 {offsets = [0, 768], sizes = [2, 256], strides = [1, 1]} : vector<2x1024xf32> to vector<2x256xf32>
    %27 = arith.negf %26 : vector<2x256xf32>
    %28 = math.exp %27 : vector<2x256xf32>
    %cst_10 = arith.constant 1.000000e+00 : f32
    %29 = vector.broadcast %cst_10 : f32 to vector<2x256xf32>
    %30 = arith.addf %29, %28 : vector<2x256xf32>
    %31 = arith.divf %29, %30 : vector<2x256xf32>
    %32 = arith.mulf %23, %11 : vector<2x256xf32>
    %33 = arith.mulf %17, %25 : vector<2x256xf32>
    %34 = arith.addf %32, %33 : vector<2x256xf32>
    %35 = math.tanh %34 : vector<2x256xf32>
    %36 = arith.mulf %31, %35 : vector<2x256xf32>
    %c0_11 = arith.constant 0 : index
    %c0_12 = arith.constant 0 : index
    %37 = vector.load %arg9[%c0_11, %c0_12] : memref<2x256xf32, #tpu.memory_space<vmem>>, vector<2x256xf32>
    tpu.vector_store %arg9[%c0_11, %c0_12], %36 {strides = array<i32>} : memref<2x256xf32, #tpu.memory_space<vmem>>, vector<2x256xf32>,
    %c0_13 = arith.constant 0 : index
    %c0_14 = arith.constant 0 : index
    %38 = vector.load %arg10[%c0_13, %c0_14] : memref<2x256xf32, #tpu.memory_space<vmem>>, vector<2x256xf32>
    tpu.vector_store %arg10[%c0_13, %c0_14], %34 {strides = array<i32>} : memref<2x256xf32, #tpu.memory_space<vmem>>, vector<2x256xf32>,
    %39 = arith.truncf %36 : vector<2x256xf32> to vector<2x256xbf16>
    %c0_15 = arith.constant 0 : index
    %c0_16 = arith.constant 0 : index
    %40 = vector.load %arg3[%c0_15, %c0_16] : memref<256x512xbf16, #tpu.memory_space<vmem>>, vector<256x512xbf16>
    %cst_17 = arith.constant dense<0.000000e+00> : vector<2x512xf32>
    %41 = tpu.matmul %39, %40, %cst_17 {dimension_numbers = #tpu.dot_dimension_numbers<[1], [0], [0], [1], [0, 0, 1, 1], [], []>} : vector<2x256xbf16>, vector<256x512xbf16>, vector<2x512xf32> -> vector<2x512xf32>
    %c0_18 = arith.constant 0 : index
    %c0_19 = arith.constant 0 : index
    %42 = vector.load %arg11[%c0_18, %c0_19] : memref<2x128xf32, #tpu.memory_space<vmem>>, vector<2x128xf32>
    %43 = arith.truncf %42 : vector<2x128xf32> to vector<2x128xbf16>
    %c0_20 = arith.constant 0 : index
    %c0_21 = arith.constant 0 : index
    %44 = vector.load %arg4[%c0_20, %c0_21] : memref<128x512xbf16, #tpu.memory_space<vmem>>, vector<128x512xbf16>
    %cst_22 = arith.constant dense<0.000000e+00> : vector<2x512xf32>
    %45 = tpu.matmul %43, %44, %cst_22 {dimension_numbers = #tpu.dot_dimension_numbers<[1], [0], [0], [1], [0, 0, 1, 1], [], []>} : vector<2x128xbf16>, vector<128x512xbf16>, vector<2x512xf32> -> vector<2x512xf32>
    %46 = arith.addf %41, %45 : vector<2x512xf32>
    %c0_23 = arith.constant 0 : index
    %c0_24 = arith.constant 0 : index
    %47 = vector.load %arg5[%c0_23, %c0_24] : memref<1x512xf32, #tpu.memory_space<vmem>>, vector<1x512xf32>
    %48 = vector.broadcast %47 : vector<1x512xf32> to vector<2x512xf32>
    %49 = arith.addf %46, %48 : vector<2x512xf32>
    %c0_25 = arith.constant 0 : index
    %c0_26 = arith.constant 0 : index
    %50 = vector.load %arg12[%c0_25, %c0_26] : memref<2x128xf32, #tpu.memory_space<vmem>>, vector<2x128xf32>
    %51 = vector.extract_strided_slice %49 {offsets = [0, 0], sizes = [2, 128], strides = [1, 1]} : vector<2x512xf32> to vector<2x128xf32>
    %52 = arith.negf %51 : vector<2x128xf32>
    %53 = math.exp %52 : vector<2x128xf32>
    %cst_27 = arith.constant 1.000000e+00 : f32
    %54 = vector.broadcast %cst_27 : f32 to vector<2x128xf32>
    %55 = arith.addf %54, %53 : vector<2x128xf32>
    %56 = arith.divf %54, %55 : vector<2x128xf32>
    %57 = vector.extract_strided_slice %49 {offsets = [0, 128], sizes = [2, 128], strides = [1, 1]} : vector<2x512xf32> to vector<2x128xf32>
    %58 = arith.negf %57 : vector<2x128xf32>
    %59 = math.exp %58 : vector<2x128xf32>
    %cst_28 = arith.constant 1.000000e+00 : f32
    %60 = vector.broadcast %cst_28 : f32 to vector<2x128xf32>
    %61 = arith.addf %60, %59 : vector<2x128xf32>
    %62 = arith.divf %60, %61 : vector<2x128xf32>
    %63 = vector.extract_strided_slice %49 {offsets = [0, 256], sizes = [2, 128], strides = [1, 1]} : vector<2x512xf32> to vector<2x128xf32>
    %64 = math.tanh %63 : vector<2x128xf32>
    %65 = vector.extract_strided_slice %49 {offsets = [0, 384], sizes = [2, 128], strides = [1, 1]} : vector<2x512xf32> to vector<2x128xf32>
    %66 = arith.negf %65 : vector<2x128xf32>
    %67 = math.exp %66 : vector<2x128xf32>
    %cst_29 = arith.constant 1.000000e+00 : f32
    %68 = vector.broadcast %cst_29 : f32 to vector<2x128xf32>
    %69 = arith.addf %68, %67 : vector<2x128xf32>
    %70 = arith.divf %68, %69 : vector<2x128xf32>
    %71 = arith.mulf %62, %50 : vector<2x128xf32>
    %72 = arith.mulf %56, %64 : vector<2x128xf32>
    %73 = arith.addf %71, %72 : vector<2x128xf32>
    %74 = math.tanh %73 : vector<2x128xf32>
    %75 = arith.mulf %70, %74 : vector<2x128xf32>
    %c0_30 = arith.constant 0 : index
    %c0_31 = arith.constant 0 : index
    %76 = vector.load %arg11[%c0_30, %c0_31] : memref<2x128xf32, #tpu.memory_space<vmem>>, vector<2x128xf32>
    tpu.vector_store %arg11[%c0_30, %c0_31], %75 {strides = array<i32>} : memref<2x128xf32, #tpu.memory_space<vmem>>, vector<2x128xf32>,
    %c0_32 = arith.constant 0 : index
    %c0_33 = arith.constant 0 : index
    %77 = vector.load %arg12[%c0_32, %c0_33] : memref<2x128xf32, #tpu.memory_space<vmem>>, vector<2x128xf32>
    tpu.vector_store %arg12[%c0_32, %c0_33], %73 {strides = array<i32>} : memref<2x128xf32, #tpu.memory_space<vmem>>, vector<2x128xf32>,
    %78 = arith.truncf %75 : vector<2x128xf32> to vector<2x128xbf16>
    %c0_34 = arith.constant 0 : index
    %c0_35 = arith.constant 0 : index
    %79 = vector.load %arg6[%c0_34, %c0_35] : memref<128x128xbf16, #tpu.memory_space<vmem>>, vector<128x128xbf16>
    %cst_36 = arith.constant dense<0.000000e+00> : vector<2x128xf32>
    %80 = tpu.matmul %78, %79, %cst_36 {dimension_numbers = #tpu.dot_dimension_numbers<[1], [0], [0], [1], [0, 0, 1, 1], [], []>} : vector<2x128xbf16>, vector<128x128xbf16>, vector<2x128xf32> -> vector<2x128xf32>
    %c0_37 = arith.constant 0 : index
    %c0_38 = arith.constant 0 : index
    %81 = vector.load %arg7[%c0_37, %c0_38] : memref<1x128xf32, #tpu.memory_space<vmem>>, vector<1x128xf32>
    %82 = vector.broadcast %81 : vector<1x128xf32> to vector<2x128xf32>
    %83 = arith.addf %80, %82 : vector<2x128xf32>
    %84 = arith.negf %83 : vector<2x128xf32>
    %85 = math.exp %84 : vector<2x128xf32>
    %cst_39 = arith.constant 1.000000e+00 : f32
    %86 = vector.broadcast %cst_39 : f32 to vector<2x128xf32>
    %87 = arith.addf %86, %85 : vector<2x128xf32>
    %88 = arith.divf %86, %87 : vector<2x128xf32>
    %c0_40 = arith.constant 0 : index
    %c0_41 = arith.constant 0 : index
    %c0_42 = arith.constant 0 : index
    %89 = vector.load %arg8[%c0_40, %c0_41, %c0_42] : memref<1x2x128xf32, #tpu.memory_space<vmem>>, vector<1x2x128xf32>
    %90 = vector.shape_cast %89 : vector<1x2x128xf32> to vector<2x128xf32>
    %91 = vector.shape_cast %88 : vector<2x128xf32> to vector<1x2x128xf32>
    tpu.vector_store %arg8[%c0_40, %c0_41, %c0_42], %91 {strides = array<i32>} : memref<1x2x128xf32, #tpu.memory_space<vmem>>, vector<1x2x128xf32>,
    return
  }
  func.func @transform_0(%arg0: i32) -> (i32, i32, i32) {
    %c0_i32 = arith.constant 0 : i32
    %c0_i32_0 = arith.constant 0 : i32
    %c0_i32_1 = arith.constant 0 : i32
    %c0_i32_2 = arith.constant 0 : i32
    return %c0_i32, %c0_i32_0, %c0_i32_1 : i32, i32, i32
  }
  func.func @transform_1(%arg0: i32) -> (i32, i32) {
    %c0_i32 = arith.constant 0 : i32
    %c0_i32_0 = arith.constant 0 : i32
    %c0_i32_1 = arith.constant 0 : i32
    return %c0_i32, %c0_i32_0 : i32, i32
  }
  func.func @transform_2(%arg0: i32) -> (i32, i32) {
    %c0_i32 = arith.constant 0 : i32
    %c0_i32_0 = arith.constant 0 : i32
    %c0_i32_1 = arith.constant 0 : i32
    return %c0_i32, %c0_i32_0 : i32, i32
  }
  func.func @transform_3(%arg0: i32) -> (i32, i32) {
    %c0_i32 = arith.constant 0 : i32
    %c0_i32_0 = arith.constant 0 : i32
    %c0_i32_1 = arith.constant 0 : i32
    return %c0_i32, %c0_i32_0 : i32, i32
  }
  func.func @transform_4(%arg0: i32) -> (i32, i32) {
    %c0_i32 = arith.constant 0 : i32
    %c0_i32_0 = arith.constant 0 : i32
    %c0_i32_1 = arith.constant 0 : i32
    return %c0_i32, %c0_i32_0 : i32, i32
  }
  func.func @transform_5(%arg0: i32) -> (i32, i32) {
    %c0_i32 = arith.constant 0 : i32
    %c0_i32_0 = arith.constant 0 : i32
    %c0_i32_1 = arith.constant 0 : i32
    return %c0_i32, %c0_i32_0 : i32, i32
  }
  func.func @transform_6(%arg0: i32) -> (i32, i32) {
    %c0_i32 = arith.constant 0 : i32
    %c0_i32_0 = arith.constant 0 : i32
    %c0_i32_1 = arith.constant 0 : i32
    return %c0_i32, %c0_i32_0 : i32, i32
  }
  func.func @transform_7(%arg0: i32) -> (i32, i32, i32) {
    %c0_i32 = arith.constant 0 : i32
    %c0_i32_0 = arith.constant 0 : i32
    %c0_i32_1 = arith.constant 0 : i32
    return %arg0, %c0_i32, %c0_i32_0 : i32, i32, i32
  }
}

</mosaic_0001>

<llo_original>
// kernel: music_transcription_forward.3
$region0: #{music_transcription_forward.3}
  #allocation0 [shape = 'u32[]', space=smem, size = 0x4, offset = 0x4, fixed_abs, tag = 'smem constant byte address 0x4 - core index']
  #allocation1 [shape = 'u32[144,128]{1,0:T(1,128)}', space=vmem, size = 0x12000, scoped, tag = 'internal scratch']
  #allocation2 [shape = 'f32[32,256]{1,0:T(8,128)}', space=vmem, size = 0x8000, scoped, tag = 'scratch operand']
  %s0 = inlined_call_operand.vmem [shape: bf16[32,256], index: 0, kind: input, shape index: {}]
  %s1 = inlined_call_operand.vmem [shape: bf16[256,1280], index: 1, kind: input, shape index: {}]
  %s2 = inlined_call_operand.vmem [shape: f32[1,1280], index: 2, kind: input, shape index: {}]
  %s3 = inlined_call_operand.vmem [shape: f32[32,1280], index: 3, kind: output, shape index: {}]
  %s4 = sld [smem:[#allocation0]]
  $region110: #{music_transcription_forward.3} parent=0
    _
  %s6 = ssub.s32 1, %s4
  %s7 = scalar_select 0, %s6, %s4
  $region1: #{music_transcription_forward.3} parent=0
    #allocation3 [shape = 'u8[262144]{0}', space=vmem, size = 0x40000, scoped, tag = 'input window, operand 1']
    #allocation4 [shape = 'u8[65536]{0}', space=vmem, size = 0x10000, scoped, tag = 'output window, operand 0']
    loop: start=0, step=1, limit=7
    $region2: #{music_transcription_forward.3} parent=1 // loop_pre_header
      _
    $region3: #{music_transcription_forward.3} parent=1 // loop_header
      %s9 = sphi 0, %s13
      %p10 = scmp.ge.s32.totalorder %s9, 7
      %s16 = sphi 0, %s35
      %s17 = sphi 0, %s31
      %s18 = sphi 0, %s27
      %s19 = sphi 0, %s16
      %s20 = sphi 0, %s17
      %s21 = sphi 0, %s18
      %s22 = sphi 0, %s19
      %s23 = sphi 0, %s20
      %s24 = sphi 0, %s21
      %s40 = sphi 0, %s42
      %s43 = sphi 0, %s40
      %s44 = sphi 0, %s43
      %s60 = sphi 0, %s44
      %s68 = sphi 0, %s70
      %s71 = sphi 0, %s68
      %s72 = sphi 0, %s71
      %s88 = sphi 0, %s72
      %s94 = sphi 0, %s96
      %s97 = sphi 0, %s94
      %s98 = sphi 0, %s97
      %s114 = sphi 0, %s98
      %s122 = sphi 0, %s124
      %s125 = sphi 0, %s122
      %s126 = sphi 0, %s125
      %s142 = sphi 0, %s126
    $region4: #{music_transcription_forward.3} parent=1 // loop_header_branch
      %12 = sbr.rel (%p10) target = $region8
    $region5: #{music_transcription_forward.3} parent=1 // loop_body
      %s14 = ssub.s32 %s9, 1
      %s15 = ssub.s32 %s9, 2
      %s25 = sadd.s32 1, %s18
      %p26 = scmp.ge.s32.totalorder %s25, 1
      %s27 = scalar_select %p26, 0, %s25
      %s28 = sadd.s32 1, %s17
      %s29 = scalar_select %p26, %s28, %s17
      %p30 = scmp.ge.s32.totalorder %s29, 5
      %s31 = scalar_select %p30, 0, %s29
      %s32 = sadd.s32 1, %s16
      %s33 = scalar_select %p30, %s32, %s16
      %p34 = scmp.ge.s32.totalorder %s33, 1
      %s35 = scalar_select %p34, 0, %s33
      %s36 = ssub.s32 %s16, %s35
      %s37 = ssub.s32 %s18, %s27
      %s38 = sor.u32 %s36, %s37
      %p39 = scmp.eq.s32.totalorder %s38, 0
      %s41 = sadd.s32 %s40, 1
      %s42 = scalar_select %p39, %s40, %s41
      %p45 = pneg %p39
      %p46 = scmp.eq.s32.totalorder %s9, 4
      %p47 = por %p45, %p46
      %p48 = scmp.ne.s32.totalorder %s40, %s43
      %p49 = scmp.eq.s32.totalorder %s9, 0
      %p50 = por %p48, %p49
      %p51 = scmp.ne.s32.totalorder %s40, %s43
      %p52 = scmp.eq.s32.totalorder %s14, 4
      %p53 = por %p51, %p52
      %p54 = scmp.ne.s32.totalorder %s43, %s44
      %p55 = scmp.eq.s32.totalorder %s14, 0
      %p56 = por %p54, %p55
      %p57 = scmp.ne.s32.totalorder %s43, %s44
      %p58 = scmp.eq.s32.totalorder %s15, 4
      %p59 = por %p57, %p58
      %p61 = scmp.ne.s32.totalorder %s44, %s60
      %p62 = scmp.eq.s32.totalorder %s15, 0
      %p63 = por %p61, %p62
      %s64 = ssub.s32 %s18, %s27
      %s65 = ssub.s32 %s17, %s31
      %s66 = sor.u32 %s64, %s65
      %p67 = scmp.eq.s32.totalorder %s66, 0
      %s69 = sadd.s32 %s68, 1
      %s70 = scalar_select %p67, %s68, %s69
      %p73 = pneg %p67
      %p74 = scmp.eq.s32.totalorder %s9, 4
      %p75 = por %p73, %p74
      %p76 = scmp.ne.s32.totalorder %s68, %s71
      %p77 = scmp.eq.s32.totalorder %s9, 0
      %p78 = por %p76, %p77
      %p79 = scmp.ne.s32.totalorder %s68, %s71
      %p80 = scmp.eq.s32.totalorder %s14, 4
      %p81 = por %p79, %p80
      %p82 = scmp.ne.s32.totalorder %s71, %s72
      %p83 = scmp.eq.s32.totalorder %s14, 0
      %p84 = por %p82, %p83
      %p85 = scmp.ne.s32.totalorder %s71, %s72
      %p86 = scmp.eq.s32.totalorder %s15, 4
      %p87 = por %p85, %p86
      %p89 = scmp.ne.s32.totalorder %s72, %s88
      %p90 = scmp.eq.s32.totalorder %s15, 0
      %p91 = por %p89, %p90
      %s92 = ssub.s32 %s17, %s31
      %p93 = scmp.eq.s32.totalorder %s92, 0
      %s95 = sadd.s32 %s94, 1
      %s96 = scalar_select %p93, %s94, %s95
      %p99 = pneg %p93
      %p100 = scmp.eq.s32.totalorder %s9, 4
      %p101 = por %p99, %p100
      %p102 = scmp.ne.s32.totalorder %s94, %s97
      %p103 = scmp.eq.s32.totalorder %s9, 0
      %p104 = por %p102, %p103
      %p105 = scmp.ne.s32.totalorder %s94, %s97
      %p106 = scmp.eq.s32.totalorder %s14, 4
      %p107 = por %p105, %p106
      %p108 = scmp.ne.s32.totalorder %s97, %s98
      %p109 = scmp.eq.s32.totalorder %s14, 0
      %p110 = por %p108, %p109
      %p111 = scmp.ne.s32.totalorder %s97, %s98
      %p112 = scmp.eq.s32.totalorder %s15, 4
      %p113 = por %p111, %p112
      %p115 = scmp.ne.s32.totalorder %s98, %s114
      %p116 = scmp.eq.s32.totalorder %s15, 0
      %p117 = por %p115, %p116
      %s118 = ssub.s32 %s16, %s35
      %s119 = ssub.s32 %s17, %s31
      %s120 = sor.u32 %s118, %s119
      %p121 = scmp.eq.s32.totalorder %s120, 0
      %s123 = sadd.s32 %s122, 1
      %s124 = scalar_select %p121, %s122, %s123
      %p127 = pneg %p121
      %p128 = scmp.eq.s32.totalorder %s9, 4
      %p129 = por %p127, %p128
      %p130 = scmp.ne.s32.totalorder %s122, %s125
      %p131 = scmp.eq.s32.totalorder %s9, 0
      %p132 = por %p130, %p131
      %p133 = scmp.ne.s32.totalorder %s122, %s125
      %p134 = scmp.eq.s32.totalorder %s14, 4
      %p135 = por %p133, %p134
      %p136 = scmp.ne.s32.totalorder %s125, %s126
      %p137 = scmp.eq.s32.totalorder %s14, 0
      %p138 = por %p136, %p137
      %p139 = scmp.ne.s32.totalorder %s125, %s126
      %p140 = scmp.eq.s32.totalorder %s15, 4
      %p141 = por %p139, %p140
      %p143 = scmp.ne.s32.totalorder %s126, %s142
      %p144 = scmp.eq.s32.totalorder %s15, 0
      %p145 = por %p143, %p144
      %p146 = scmp.le.s32.totalorder 1, %s9
      %p147 = scmp.lt.s32.totalorder %s9, 6
      %p148 = pnand %p146, %p147
      %p149 = pneg %p148
      // Predicated region
      $region9: #{music_transcription_forward.3} parent=5 // pred_check
        _
      $region10: #{music_transcription_forward.3} parent=5 // pred_check_branch
        %151 = sbr.rel (%p148) target = $region12
      $region11: #{music_transcription_forward.3} parent=5 // pred_region
        %s152 = ssub.s32 %s9, 1
        // Predicated region
        $region13: #{music_transcription_forward.3} parent=11 // pred_check
          %p153 = pneg %p56
        $region14: #{music_transcription_forward.3} parent=11 // pred_check_branch
          %155 = sbr.rel (%p153) target = $region16
        $region15: #{music_transcription_forward.3} parent=11 // pred_region
          %s156 = smul.u32 4, %s19
          %s157 = smul.u32 2, %s21
          %p158 = scmp.lt.s32.totalorder %s156, 3
          %s159 = scalar_select %p158, %s156, 3
          %p160 = scmp.lt.s32.totalorder %s157, 1
          %s161 = scalar_select %p160, %s157, 1
          %s162 = smul.addr %s159, 2
          %s163 = sadd.s32 %s161, %s162
          %s164 = smul.addr %s163, 4
          %s165 = scalar_lea.vmem %s0, %s164
          %s166 = smul.u32 4, %s19
          %s167 = smul.u32 2, %s21
        $region16: #{music_transcription_forward.3} parent=11 // pred_fallthru
          _
      $region12: #{music_transcription_forward.3} parent=5 // pred_fallthru
        _
      %p168 = scmp.lt.s32.totalorder %s9, 5
      // Predicated region
      $region17: #{music_transcription_forward.3} parent=5 // pred_check
        %p169 = pneg %p168
      $region18: #{music_transcription_forward.3} parent=5 // pred_check_branch
        %171 = sbr.rel (%p169) target = $region20
      $region19: #{music_transcription_forward.3} parent=5 // pred_region
        // Predicated region
        $region21: #{music_transcription_forward.3} parent=19 // pred_check
          %p172 = pneg %p78
        $region22: #{music_transcription_forward.3} parent=19 // pred_check_branch
          %174 = sbr.rel (%p172) target = $region24
        $region23: #{music_transcription_forward.3} parent=19 // pred_region
          %s175 = sand.u32 %s68, 1
          %s176 = sand.u32 %s68, 1
          %s177 = smul.addr %s176, 256
          %s178 = scalar_lea.vmem [#allocation3], %s177
          %s179 = smul.u32 32, %s18
          %s180 = smul.u32 2, %s17
          %s181 = smul.addr %s179, 10
          %s182 = sadd.s32 %s180, %s181
          %s183 = smul.addr %s182, 4
          %s184 = scalar_lea.vmem %s1, %s183
          // Predicated region
          $region25: #{music_transcription_forward.3} parent=23 // pred_check
            _
          $region26: #{music_transcription_forward.3} parent=23 // pred_check_branch
            %186 = sbr.rel (0) target = $region28
          $region27: #{music_transcription_forward.3} parent=23 // pred_region
            // Predicated region
            $region29: #{music_transcription_forward.3} parent=27 // pred_check
              _
            $region30: #{music_transcription_forward.3} parent=27 // pred_check_branch
              %188 = sbr.rel (0) target = $region32
            $region31: #{music_transcription_forward.3} parent=27 // pred_region
              // Predicated region
              $region44: #{music_transcription_forward.3} parent=31 // pred_check
                _
              $region45: #{music_transcription_forward.3} parent=31 // pred_check_branch
                %266 = sbr.rel (0) target = $region47
              $region46: #{music_transcription_forward.3} parent=31 // pred_region
                loop: start=0, step=1, limit=1
                $region48: #{music_transcription_forward.3} parent=46 // loop_pre_header
                  _
                $region49: #{music_transcription_forward.3} parent=46 // loop_header
                  %s268 = sphi 0, %s272
                  %p269 = scmp.ge.s32.totalorder %s268, 1
                  %s273 = sphi %s184, %s184
                  %s274 = sphi %s178, %s178
                $region50: #{music_transcription_forward.3} parent=46 // loop_header_branch
                  %271 = sbr.rel (%p269) target = $region54
                $region51: #{music_transcription_forward.3} parent=46 // loop_body
                  %v275 = vld [vmem:[%s273] sm:$0xff]
                  %276 = vst [vmem:[%s274] sm:$0xff] %v275
                  %v277 = vld [vmem:[%s273 + $0x28] sm:$0xff]
                  %278 = vst [vmem:[%s274 + $0x8] sm:$0xff] %v277
                  %v279 = vld [vmem:[%s273 + $0x50] sm:$0xff]
                  %280 = vst [vmem:[%s274 + $0x10] sm:$0xff] %v279
                  %v281 = vld [vmem:[%s273 + $0x78] sm:$0xff]
                  %282 = vst [vmem:[%s274 + $0x18] sm:$0xff] %v281
                  %v283 = vld [vmem:[%s273 + $0xa0] sm:$0xff]
                  %284 = vst [vmem:[%s274 + $0x20] sm:$0xff] %v283
                  %v285 = vld [vmem:[%s273 + $0xc8] sm:$0xff]
                  %286 = vst [vmem:[%s274 + $0x28] sm:$0xff] %v285
                  %v287 = vld [vmem:[%s273 + $0xf0] sm:$0xff]
                  %288 = vst [vmem:[%s274 + $0x30] sm:$0xff] %v287
                  %v289 = vld [vmem:[%s273 + $0x118] sm:$0xff]
                  %290 = vst [vmem:[%s274 + $0x38] sm:$0xff] %v289
                  %v291 = vld [vmem:[%s273 + $0x140] sm:$0xff]
                  %292 = vst [vmem:[%s274 + $0x40] sm:$0xff] %v291
                  %v293 = vld [vmem:[%s273 + $0x168] sm:$0xff]
                  %294 = vst [vmem:[%s274 + $0x48] sm:$0xff] %v293
                  %v295 = vld [vmem:[%s273 + $0x190] sm:$0xff]
                  %296 = vst [vmem:[%s274 + $0x50] sm:$0xff] %v295
                  %v297 = vld [vmem:[%s273 + $0x1b8] sm:$0xff]
                  %298 = vst [vmem:[%s274 + $0x58] sm:$0xff] %v297
                  %v299 = vld [vmem:[%s273 + $0x1e0] sm:$0xff]
                  %300 = vst [vmem:[%s274 + $0x60] sm:$0xff] %v299
                  %v301 = vld [vmem:[%s273 + $0x208] sm:$0xff]
                  %302 = vst [vmem:[%s274 + $0x68] sm:$0xff] %v301
                  %v303 = vld [vmem:[%s273 + $0x230] sm:$0xff]
                  %304 = vst [vmem:[%s274 + $0x70] sm:$0xff] %v303
                  %v305 = vld [vmem:[%s273 + $0x258] sm:$0xff]
                  %306 = vst [vmem:[%s274 + $0x78] sm:$0xff] %v305
                  %v307 = vld [vmem:[%s273 + $0x280] sm:$0xff]
                  %308 = vst [vmem:[%s274 + $0x80] sm:$0xff] %v307
                  %v309 = vld [vmem:[%s273 + $0x2a8] sm:$0xff]
                  %310 = vst [vmem:[%s274 + $0x88] sm:$0xff] %v309
                  %v311 = vld [vmem:[%s273 + $0x2d0] sm:$0xff]
                  %312 = vst [vmem:[%s274 + $0x90] sm:$0xff] %v311
                  %v313 = vld [vmem:[%s273 + $0x2f8] sm:$0xff]
                  %314 = vst [vmem:[%s274 + $0x98] sm:$0xff] %v313
                  %v315 = vld [vmem:[%s273 + $0x320] sm:$0xff]
                  %316 = vst [vmem:[%s274 + $0xa0] sm:$0xff] %v315
                  %v317 = vld [vmem:[%s273 + $0x348] sm:$0xff]
                  %318 = vst [vmem:[%s274 + $0xa8] sm:$0xff] %v317
                  %v319 = vld [vmem:[%s273 + $0x370] sm:$0xff]
                  %320 = vst [vmem:[%s274 + $0xb0] sm:$0xff] %v319
                  %v321 = vld [vmem:[%s273 + $0x398] sm:$0xff]
                  %322 = vst [vmem:[%s274 + $0xb8] sm:$0xff] %v321
                  %v323 = vld [vmem:[%s273 + $0x3c0] sm:$0xff]
                  %324 = vst [vmem:[%s274 + $0xc0] sm:$0xff] %v323
                  %v325 = vld [vmem:[%s273 + $0x3e8] sm:$0xff]
                  %326 = vst [vmem:[%s274 + $0xc8] sm:$0xff] %v325
                  %v327 = vld [vmem:[%s273 + $0x410] sm:$0xff]
                  %328 = vst [vmem:[%s274 + $0xd0] sm:$0xff] %v327
                  %v329 = vld [vmem:[%s273 + $0x438] sm:$0xff]
                  %330 = vst [vmem:[%s274 + $0xd8] sm:$0xff] %v329
                  %v331 = vld [vmem:[%s273 + $0x460] sm:$0xff]
                  %332 = vst [vmem:[%s274 + $0xe0] sm:$0xff] %v331
                  %v333 = vld [vmem:[%s273 + $0x488] sm:$0xff]
                  %334 = vst [vmem:[%s274 + $0xe8] sm:$0xff] %v333
                  %v335 = vld [vmem:[%s273 + $0x4b0] sm:$0xff]
                  %336 = vst [vmem:[%s274 + $0xf0] sm:$0xff] %v335
                  %v337 = vld [vmem:[%s273 + $0x4d8] sm:$0xff]
                  %338 = vst [vmem:[%s274 + $0xf8] sm:$0xff] %v337
                $region52: #{music_transcription_forward.3} parent=46 // loop_footer
                  %s272 = sadd.s32 1, %s268
                $region53: #{music_transcription_forward.3} parent=46 // loop_footer_branch
                  %267 = sbr.rel target = $region49
                $region54: #{music_transcription_forward.3} parent=46 // loop_exit
                  _
              $region47: #{music_transcription_forward.3} parent=31 // pred_fallthru
                _
              // Predicated region
              $region55: #{music_transcription_forward.3} parent=31 // pred_check
                _
              $region56: #{music_transcription_forward.3} parent=31 // pred_check_branch
                %340 = sbr.rel target = $region58
              $region57: #{music_transcription_forward.3} parent=31 // pred_region
                _
              $region58: #{music_transcription_forward.3} parent=31 // pred_fallthru
                _
            $region32: #{music_transcription_forward.3} parent=27 // pred_fallthru
              _
            // Predicated region
            $region33: #{music_transcription_forward.3} parent=27 // pred_check
              _
            $region34: #{music_transcription_forward.3} parent=27 // pred_check_branch
              %190 = sbr.rel target = $region36
            $region35: #{music_transcription_forward.3} parent=27 // pred_region
              %s192 = ssub.s32 256, 1
              loop: start=0, step=1, limit=1
              $region37: #{music_transcription_forward.3} parent=35 // loop_pre_header
                _
              $region38: #{music_transcription_forward.3} parent=35 // loop_header
                %s194 = sphi 0, %s198
                %p195 = scmp.ge.s32.totalorder %s194, 1
                %s199 = sphi %s184, %s184
                %s200 = sphi %s178, %s178
              $region39: #{music_transcription_forward.3} parent=35 // loop_header_branch
                %197 = sbr.rel (%p195) target = $region43
              $region40: #{music_transcription_forward.3} parent=35 // loop_body
                %v201 = vld [vmem:[%s199] sm:%s192]
                %202 = vst [vmem:[%s200] sm:%s192] %v201
                %v203 = vld [vmem:[%s199 + $0x28] sm:%s192]
                %204 = vst [vmem:[%s200 + $0x8] sm:%s192] %v203
                %v205 = vld [vmem:[%s199 + $0x50] sm:%s192]
                %206 = vst [vmem:[%s200 + $0x10] sm:%s192] %v205
                %v207 = vld [vmem:[%s199 + $0x78] sm:%s192]
                %208 = vst [vmem:[%s200 + $0x18] sm:%s192] %v207
                %v209 = vld [vmem:[%s199 + $0xa0] sm:%s192]
                %210 = vst [vmem:[%s200 + $0x20] sm:%s192] %v209
                %v211 = vld [vmem:[%s199 + $0xc8] sm:%s192]
                %212 = vst [vmem:[%s200 + $0x28] sm:%s192] %v211
                %v213 = vld [vmem:[%s199 + $0xf0] sm:%s192]
                %214 = vst [vmem:[%s200 + $0x30] sm:%s192] %v213
                %v215 = vld [vmem:[%s199 + $0x118] sm:%s192]
                %216 = vst [vmem:[%s200 + $0x38] sm:%s192] %v215
                %v217 = vld [vmem:[%s199 + $0x140] sm:%s192]
                %218 = vst [vmem:[%s200 + $0x40] sm:%s192] %v217
                %v219 = vld [vmem:[%s199 + $0x168] sm:%s192]
                %220 = vst [vmem:[%s200 + $0x48] sm:%s192] %v219
                %v221 = vld [vmem:[%s199 + $0x190] sm:%s192]
                %222 = vst [vmem:[%s200 + $0x50] sm:%s192] %v221
                %v223 = vld [vmem:[%s199 + $0x1b8] sm:%s192]
                %224 = vst [vmem:[%s200 + $0x58] sm:%s192] %v223
                %v225 = vld [vmem:[%s199 + $0x1e0] sm:%s192]
                %226 = vst [vmem:[%s200 + $0x60] sm:%s192] %v225
                %v227 = vld [vmem:[%s199 + $0x208] sm:%s192]
                %228 = vst [vmem:[%s200 + $0x68] sm:%s192] %v227
                %v229 = vld [vmem:[%s199 + $0x230] sm:%s192]
                %230 = vst [vmem:[%s200 + $0x70] sm:%s192] %v229
                %v231 = vld [vmem:[%s199 + $0x258] sm:%s192]
                %232 = vst [vmem:[%s200 + $0x78] sm:%s192] %v231
                %v233 = vld [vmem:[%s199 + $0x280] sm:%s192]
                %234 = vst [vmem:[%s200 + $0x80] sm:%s192] %v233
                %v235 = vld [vmem:[%s199 + $0x2a8] sm:%s192]
                %236 = vst [vmem:[%s200 + $0x88] sm:%s192] %v235
                %v237 = vld [vmem:[%s199 + $0x2d0] sm:%s192]
                %238 = vst [vmem:[%s200 + $0x90] sm:%s192] %v237
                %v239 = vld [vmem:[%s199 + $0x2f8] sm:%s192]
                %240 = vst [vmem:[%s200 + $0x98] sm:%s192] %v239
                %v241 = vld [vmem:[%s199 + $0x320] sm:%s192]
                %242 = vst [vmem:[%s200 + $0xa0] sm:%s192] %v241
                %v243 = vld [vmem:[%s199 + $0x348] sm:%s192]
                %244 = vst [vmem:[%s200 + $0xa8] sm:%s192] %v243
                %v245 = vld [vmem:[%s199 + $0x370] sm:%s192]
                %246 = vst [vmem:[%s200 + $0xb0] sm:%s192] %v245
                %v247 = vld [vmem:[%s199 + $0x398] sm:%s192]
                %248 = vst [vmem:[%s200 + $0xb8] sm:%s192] %v247
                %v249 = vld [vmem:[%s199 + $0x3c0] sm:%s192]
                %250 = vst [vmem:[%s200 + $0xc0] sm:%s192] %v249
                %v251 = vld [vmem:[%s199 + $0x3e8] sm:%s192]
                %252 = vst [vmem:[%s200 + $0xc8] sm:%s192] %v251
                %v253 = vld [vmem:[%s199 + $0x410] sm:%s192]
                %254 = vst [vmem:[%s200 + $0xd0] sm:%s192] %v253
                %v255 = vld [vmem:[%s199 + $0x438] sm:%s192]
                %256 = vst [vmem:[%s200 + $0xd8] sm:%s192] %v255
                %v257 = vld [vmem:[%s199 + $0x460] sm:%s192]
                %258 = vst [vmem:[%s200 + $0xe0] sm:%s192] %v257
                %v259 = vld [vmem:[%s199 + $0x488] sm:%s192]
                %260 = vst [vmem:[%s200 + $0xe8] sm:%s192] %v259
                %v261 = vld [vmem:[%s199 + $0x4b0] sm:%s192]
                %262 = vst [vmem:[%s200 + $0xf0] sm:%s192] %v261
                %v263 = vld [vmem:[%s199 + $0x4d8] sm:%s192]
                %264 = vst [vmem:[%s200 + $0xf8] sm:%s192] %v263
              $region41: #{music_transcription_forward.3} parent=35 // loop_footer
                %s198 = sadd.s32 1, %s194
              $region42: #{music_transcription_forward.3} parent=35 // loop_footer_branch
                %193 = sbr.rel target = $region38
              $region43: #{music_transcription_forward.3} parent=35 // loop_exit
                _
            $region36: #{music_transcription_forward.3} parent=27 // pred_fallthru
              _
          $region28: #{music_transcription_forward.3} parent=23 // pred_fallthru
            _
          %341 = vnop
        $region24: #{music_transcription_forward.3} parent=19 // pred_fallthru
          _
        // Predicated region
        $region59: #{music_transcription_forward.3} parent=19 // pred_check
          %p342 = pneg %p104
        $region60: #{music_transcription_forward.3} parent=19 // pred_check_branch
          %344 = sbr.rel (%p342) target = $region62
        $region61: #{music_transcription_forward.3} parent=19 // pred_region
          %s345 = smul.u32 2, %s17
          %p346 = scmp.lt.s32.totalorder %s345, 9
          %s347 = scalar_select %p346, %s345, 9
          %s348 = scalar_lea.vmem %s2, %s347
          %s349 = smul.u32 2, %s17
        $region62: #{music_transcription_forward.3} parent=19 // pred_fallthru
          _
      $region20: #{music_transcription_forward.3} parent=5 // pred_fallthru
        _
      %p350 = scmp.le.s32.totalorder 1, %s9
      %p351 = scmp.lt.s32.totalorder %s9, 6
      %p352 = pnand %p350, %p351
      %p353 = pneg %p352
      // Predicated region
      $region63: #{music_transcription_forward.3} parent=5 // pred_check
        _
      $region64: #{music_transcription_forward.3} parent=5 // pred_check_branch
        %355 = sbr.rel (%p352) target = $region66
      $region65: #{music_transcription_forward.3} parent=5 // pred_region
        %s356 = ssub.s32 %s9, 1
        %s357 = sand.u32 %s71, 1
        %s358 = sand.u32 %s71, 1
        %s359 = smul.addr %s358, 256
        %s360 = scalar_lea.vmem [#allocation3], %s359
        // Predicated region
        $region67: #{music_transcription_forward.3} parent=65 // pred_check
          %p361 = pneg %p84
        $region68: #{music_transcription_forward.3} parent=65 // pred_check_branch
          %363 = sbr.rel (%p361) target = $region70
        $region69: #{music_transcription_forward.3} parent=65 // pred_region
          _
        $region70: #{music_transcription_forward.3} parent=65 // pred_fallthru
          _
        %s364 = smul.u32 4, %s19
        %s365 = smul.u32 2, %s21
        %p366 = scmp.lt.s32.totalorder %s364, 3
        %s367 = scalar_select %p366, %s364, 3
        %p368 = scmp.lt.s32.totalorder %s365, 1
        %s369 = scalar_select %p368, %s365, 1
        %s370 = smul.addr %s367, 2
        %s371 = sadd.s32 %s369, %s370
        %s372 = smul.addr %s371, 4
        %s373 = scalar_lea.vmem %s0, %s372
        %p374 = pneg %p56
        %p375 = pneg %p53
        %s376 = sand.u32 %s71, 1
        %s377 = sand.u32 %s71, 1
        %s378 = smul.addr %s377, 256
        %s379 = scalar_lea.vmem [#allocation3], %s378
        %p380 = pneg %p84
        %p381 = pneg %p81
        %s382 = smul.u32 2, %s20
        %p383 = scmp.lt.s32.totalorder %s382, 9
        %s384 = scalar_select %p383, %s382, 9
        %s385 = scalar_lea.vmem %s2, %s384
        %p386 = pneg %p110
        %p387 = pneg %p107
        %p388 = pneg %p138
        %p389 = pneg %p135
        %s390 = sand.u32 %s125, 1
        %s391 = sand.u32 %s125, 1
        %s392 = smul.addr %s391, 64
        %s393 = scalar_lea.vmem [#allocation4], %s392
        %s394 = smul.u32 4, %s19
        %s395 = smul.u32 2, %s21
        %p396 = scmp.lt.s32.totalorder %s394, 3
        %s397 = scalar_select %p396, %s394, 3
        %p398 = scmp.lt.s32.totalorder %s395, 1
        %s399 = scalar_select %p398, %s395, 1
        %s400 = smul.addr %s397, 2
        %s401 = sadd.s32 %s399, %s400
        %s402 = smul.addr %s401, 4
        %s403 = scalar_lea.vmem %s0, %s402
        %s404 = smul.u32 4, %s19
        %s405 = smul.u32 2, %s21
        %s406 = smul.u32 32, %s21
        %s407 = smul.u32 2, %s20
        %s408 = smul.u32 2, %s20
        %p409 = scmp.lt.s32.totalorder %s408, 9
        %s410 = scalar_select %p409, %s408, 9
        %s411 = scalar_lea.vmem %s2, %s410
        %s412 = smul.u32 2, %s20
        %s413 = smul.u32 4, %s19
        %s414 = smul.u32 2, %s20
        %p415 = scmp.eq.s32.totalorder %s21, 0
        // Predicated region
        $region71: #{music_transcription_forward.3} parent=65 // pred_check
          %p416 = pneg %p415
        $region72: #{music_transcription_forward.3} parent=65 // pred_check_branch
          %418 = sbr.rel (%p416) target = $region74
        $region73: #{music_transcription_forward.3} parent=65 // pred_region
          %419 = vst [vmem:[#allocation2] sm:$0xff] 0.0
          %420 = vst [vmem:[#allocation2 + $0x8] sm:$0xff] 0.0
          %421 = vst [vmem:[#allocation2 + $0x10] sm:$0xff] 0.0
          %422 = vst [vmem:[#allocation2 + $0x18] sm:$0xff] 0.0
          %423 = vst [vmem:[#allocation2 + $0x20] sm:$0xff] 0.0
          %424 = vst [vmem:[#allocation2 + $0x28] sm:$0xff] 0.0
          %425 = vst [vmem:[#allocation2 + $0x30] sm:$0xff] 0.0
          %426 = vst [vmem:[#allocation2 + $0x38] sm:$0xff] 0.0
        $region74: #{music_transcription_forward.3} parent=65 // pred_fallthru
          _
        %v427 = vld [vmem:[#allocation2] sm:$0xff]
        %v428 = vld [vmem:[#allocation2 + $0x8] sm:$0xff]
        %v429 = vld [vmem:[#allocation2 + $0x10] sm:$0xff]
        %v430 = vld [vmem:[#allocation2 + $0x18] sm:$0xff]
        %v431 = vld [vmem:[#allocation2 + $0x20] sm:$0xff]
        %v432 = vld [vmem:[#allocation2 + $0x28] sm:$0xff]
        %v433 = vld [vmem:[#allocation2 + $0x30] sm:$0xff]
        %v434 = vld [vmem:[#allocation2 + $0x38] sm:$0xff]
        %v435 = vld [vmem:[%s403] sm:$0xff]
        %v436 = vld [vmem:[%s403 + $0x8] sm:$0xff]
        %v437 = vld [vmem:[%s403 + $0x10] sm:$0xff]
        %v438 = vld [vmem:[%s403 + $0x18] sm:$0xff]
        %v439 = vld [vmem:[%s360] sm:$0xff]
        %v440 = vld [vmem:[%s360 + $0x8] sm:$0xff]
        %v441 = vld [vmem:[%s360 + $0x10] sm:$0xff]
        %v442 = vld [vmem:[%s360 + $0x18] sm:$0xff]
        %v443 = vld [vmem:[%s360 + $0x20] sm:$0xff]
        %v444 = vld [vmem:[%s360 + $0x28] sm:$0xff]
        %v445 = vld [vmem:[%s360 + $0x30] sm:$0xff]
        %v446 = vld [vmem:[%s360 + $0x38] sm:$0xff]
        %v447 = vld [vmem:[%s360 + $0x40] sm:$0xff]
        %v448 = vld [vmem:[%s360 + $0x48] sm:$0xff]
        %v449 = vld [vmem:[%s360 + $0x50] sm:$0xff]
        %v450 = vld [vmem:[%s360 + $0x58] sm:$0xff]
        %v451 = vld [vmem:[%s360 + $0x60] sm:$0xff]
        %v452 = vld [vmem:[%s360 + $0x68] sm:$0xff]
        %v453 = vld [vmem:[%s360 + $0x70] sm:$0xff]
        %v454 = vld [vmem:[%s360 + $0x78] sm:$0xff]
        %v455 = vld [vmem:[%s360 + $0x80] sm:$0xff]
        %v456 = vld [vmem:[%s360 + $0x88] sm:$0xff]
        %v457 = vld [vmem:[%s360 + $0x90] sm:$0xff]
        %v458 = vld [vmem:[%s360 + $0x98] sm:$0xff]
        %v459 = vld [vmem:[%s360 + $0xa0] sm:$0xff]
        %v460 = vld [vmem:[%s360 + $0xa8] sm:$0xff]
        %v461 = vld [vmem:[%s360 + $0xb0] sm:$0xff]
        %v462 = vld [vmem:[%s360 + $0xb8] sm:$0xff]
        %v463 = vld [vmem:[%s360 + $0xc0] sm:$0xff]
        %v464 = vld [vmem:[%s360 + $0xc8] sm:$0xff]
        %v465 = vld [vmem:[%s360 + $0xd0] sm:$0xff]
        %v466 = vld [vmem:[%s360 + $0xd8] sm:$0xff]
        %v467 = vld [vmem:[%s360 + $0xe0] sm:$0xff]
        %v468 = vld [vmem:[%s360 + $0xe8] sm:$0xff]
        %v469 = vld [vmem:[%s360 + $0xf0] sm:$0xff]
        %v470 = vld [vmem:[%s360 + $0xf8] sm:$0xff]
        %v475 = vunpack.c.l.b16 %v435
        %v476 = vunpack.c.h.b16 %v435
        %v477 = vunpack.c.l.b16 %v436
        %v478 = vunpack.c.h.b16 %v436
        %v479 = vunpack.c.l.b16 %v437
        %v480 = vunpack.c.h.b16 %v437
        %v481 = vunpack.c.l.b16 %v438
        %v482 = vunpack.c.h.b16 %v438
        %v483 = vpack.c.b16 %v477, %v475
        %v484 = vpack.c.b16 %v478, %v476
        %v485 = vpack.c.b16 %v481, %v479
        %v486 = vpack.c.b16 %v482, %v480
        %v523 = vunpack.c.l.b16 %v439
        %v524 = vunpack.c.h.b16 %v439
        %v525 = vunpack.c.l.b16 %v440
        %v526 = vunpack.c.h.b16 %v440
        %v527 = vunpack.c.l.b16 %v441
        %v528 = vunpack.c.h.b16 %v441
        %v529 = vunpack.c.l.b16 %v442
        %v530 = vunpack.c.h.b16 %v442
        %v531 = vunpack.c.l.b16 %v443
        %v532 = vunpack.c.h.b16 %v443
        %v533 = vunpack.c.l.b16 %v444
        %v534 = vunpack.c.h.b16 %v444
        %v535 = vunpack.c.l.b16 %v445
        %v536 = vunpack.c.h.b16 %v445
        %v537 = vunpack.c.l.b16 %v446
        %v538 = vunpack.c.h.b16 %v446
        %v539 = vunpack.c.l.b16 %v447
        %v540 = vunpack.c.h.b16 %v447
        %v541 = vunpack.c.l.b16 %v448
        %v542 = vunpack.c.h.b16 %v448
        %v543 = vunpack.c.l.b16 %v449
        %v544 = vunpack.c.h.b16 %v449
        %v545 = vunpack.c.l.b16 %v450
        %v546 = vunpack.c.h.b16 %v450
        %v547 = vunpack.c.l.b16 %v451
        %v548 = vunpack.c.h.b16 %v451
        %v549 = vunpack.c.l.b16 %v452
        %v550 = vunpack.c.h.b16 %v452
        %v551 = vunpack.c.l.b16 %v453
        %v552 = vunpack.c.h.b16 %v453
        %v553 = vunpack.c.l.b16 %v454
        %v554 = vunpack.c.h.b16 %v454
        %v555 = vunpack.c.l.b16 %v455
        %v556 = vunpack.c.h.b16 %v455
        %v557 = vunpack.c.l.b16 %v456
        %v558 = vunpack.c.h.b16 %v456
        %v559 = vunpack.c.l.b16 %v457
        %v560 = vunpack.c.h.b16 %v457
        %v561 = vunpack.c.l.b16 %v458
        %v562 = vunpack.c.h.b16 %v458
        %v563 = vunpack.c.l.b16 %v459
        %v564 = vunpack.c.h.b16 %v459
        %v565 = vunpack.c.l.b16 %v460
        %v566 = vunpack.c.h.b16 %v460
        %v567 = vunpack.c.l.b16 %v461
        %v568 = vunpack.c.h.b16 %v461
        %v569 = vunpack.c.l.b16 %v462
        %v570 = vunpack.c.h.b16 %v462
        %v571 = vunpack.c.l.b16 %v463
        %v572 = vunpack.c.h.b16 %v463
        %v573 = vunpack.c.l.b16 %v464
        %v574 = vunpack.c.h.b16 %v464
        %v575 = vunpack.c.l.b16 %v465
        %v576 = vunpack.c.h.b16 %v465
        %v577 = vunpack.c.l.b16 %v466
        %v578 = vunpack.c.h.b16 %v466
        %v579 = vunpack.c.l.b16 %v467
        %v580 = vunpack.c.h.b16 %v467
        %v581 = vunpack.c.l.b16 %v468
        %v582 = vunpack.c.h.b16 %v468
        %v583 = vunpack.c.l.b16 %v469
        %v584 = vunpack.c.h.b16 %v469
        %v585 = vunpack.c.l.b16 %v470
        %v586 = vunpack.c.h.b16 %v470
        %v587 = vpack.c.b16 %v525, %v523
        %v588 = vpack.c.b16 %v526, %v524
        %v589 = vpack.c.b16 %v529, %v527
        %v590 = vpack.c.b16 %v530, %v528
        %v591 = vpack.c.b16 %v533, %v531
        %v592 = vpack.c.b16 %v534, %v532
        %v593 = vpack.c.b16 %v537, %v535
        %v594 = vpack.c.b16 %v538, %v536
        %v595 = vpack.c.b16 %v541, %v539
        %v596 = vpack.c.b16 %v542, %v540
        %v597 = vpack.c.b16 %v545, %v543
        %v598 = vpack.c.b16 %v546, %v544
        %v599 = vpack.c.b16 %v549, %v547
        %v600 = vpack.c.b16 %v550, %v548
        %v601 = vpack.c.b16 %v553, %v551
        %v602 = vpack.c.b16 %v554, %v552
        %v603 = vpack.c.b16 %v557, %v555
        %v604 = vpack.c.b16 %v558, %v556
        %v605 = vpack.c.b16 %v561, %v559
        %v606 = vpack.c.b16 %v562, %v560
        %v607 = vpack.c.b16 %v565, %v563
        %v608 = vpack.c.b16 %v566, %v564
        %v609 = vpack.c.b16 %v569, %v567
        %v610 = vpack.c.b16 %v570, %v568
        %v611 = vpack.c.b16 %v573, %v571
        %v612 = vpack.c.b16 %v574, %v572
        %v613 = vpack.c.b16 %v577, %v575
        %v614 = vpack.c.b16 %v578, %v576
        %v615 = vpack.c.b16 %v581, %v579
        %v616 = vpack.c.b16 %v582, %v580
        %v617 = vpack.c.b16 %v585, %v583
        %v618 = vpack.c.b16 %v586, %v584
        %651 = vmatprep.subr.bf16.mxu0 %v602
        %652 = vmatpush1.bf16.msra.mxu0 %v601
        %653 = vmatprep.subr.bf16.mxu0 %v600
        %654 = vmatpush1.bf16.msra.mxu0 %v599
        %655 = vmatprep.subr.bf16.mxu0 %v598
        %656 = vmatpush1.bf16.msra.mxu0 %v597
        %657 = vmatprep.subr.bf16.mxu0 %v596
        %658 = vmatpush1.bf16.msra.mxu0 %v595
        %659 = vmatprep.subr.bf16.mxu0 %v594
        %660 = vmatpush1.bf16.msra.mxu0 %v593
        %661 = vmatprep.subr.bf16.mxu0 %v592
        %662 = vmatpush1.bf16.msra.mxu0 %v591
        %663 = vmatprep.subr.bf16.mxu0 %v590
        %664 = vmatpush1.bf16.msra.mxu0 %v589
        %665 = vmatprep.subr.bf16.mxu0 %v588
        %666 = vmatpush1.bf16.msra.mxu0 %v587
        %667 = vmatprep.subr.bf16.mxu0 %v618
        %668 = vmatpush2.bf16.msra.mxu0 %v617
        %669 = vmatprep.subr.bf16.mxu0 %v616
        %670 = vmatpush2.bf16.msra.mxu0 %v615
        %671 = vmatprep.subr.bf16.mxu0 %v614
        %672 = vmatpush2.bf16.msra.mxu0 %v613
        %673 = vmatprep.subr.bf16.mxu0 %v612
        %674 = vmatpush2.bf16.msra.mxu0 %v611
        %675 = vmatprep.subr.bf16.mxu0 %v610
        %676 = vmatpush2.bf16.msra.mxu0 %v609
        %677 = vmatprep.subr.bf16.mxu0 %v608
        %678 = vmatpush2.bf16.msra.mxu0 %v607
        %679 = vmatprep.subr.bf16.mxu0 %v606
        %680 = vmatpush2.bf16.msra.mxu0 %v605
        %681 = vmatprep.subr.bf16.mxu0 %v604
        %682 = vmatpush2.bf16.msra.mxu0 %v603
        %683 = vmatprep.mubr.bf16.mxu0 %v484
        %684 = vmatmul.mubr.bf16.gmra.mxu0 %v483
        %v685 = vpop.f32.mrf.mxu0
        %v686 = vadd.f32 0.0, %v685
        %v687 = vpop.f32.mrf.mxu0
        %v688 = vadd.f32 0.0, %v687
        %v689 = vpop.f32.mrf.mxu0
        %v690 = vadd.f32 0.0, %v689
        %v691 = vpop.f32.mrf.mxu0
        %v692 = vadd.f32 0.0, %v691
        %693 = vmatprep.mubr.bf16.mxu0 %v486
        %694 = vmatmul.mubr.bf16.gmra.mxu0 %v485
        %v695 = vpop.f32.mrf.mxu0
        %v696 = vadd.f32 0.0, %v695
        %v697 = vpop.f32.mrf.mxu0
        %v698 = vadd.f32 0.0, %v697
        %v699 = vpop.f32.mrf.mxu0
        %v700 = vadd.f32 0.0, %v699
        %v701 = vpop.f32.mrf.mxu0
        %v702 = vadd.f32 0.0, %v701
        %703 = vdwg.mxu0
        %v704 = vadd.f32 %v427, %v686
        %v705 = vadd.f32 %v428, %v688
        %v706 = vadd.f32 %v429, %v690
        %v707 = vadd.f32 %v430, %v692
        %v708 = vadd.f32 %v431, %v696
        %v709 = vadd.f32 %v432, %v698
        %v710 = vadd.f32 %v433, %v700
        %v711 = vadd.f32 %v434, %v702
        %712 = vst [vmem:[#allocation2] sm:$0xff] %v704
        %713 = vst [vmem:[#allocation2 + $0x8] sm:$0xff] %v705
        %714 = vst [vmem:[#allocation2 + $0x10] sm:$0xff] %v706
        %715 = vst [vmem:[#allocation2 + $0x18] sm:$0xff] %v707
        %716 = vst [vmem:[#allocation2 + $0x20] sm:$0xff] %v708
        %717 = vst [vmem:[#allocation2 + $0x28] sm:$0xff] %v709
        %718 = vst [vmem:[#allocation2 + $0x30] sm:$0xff] %v710
        %719 = vst [vmem:[#allocation2 + $0x38] sm:$0xff] %v711
        // Predicated region
        $region75: #{music_transcription_forward.3} parent=65 // pred_check
          %p720 = pneg %p415
        $region76: #{music_transcription_forward.3} parent=65 // pred_check_branch
          %722 = sbr.rel (%p720) target = $region78
        $region77: #{music_transcription_forward.3} parent=65 // pred_region
          %v723 = vld [vmem:[#allocation2] sm:$0xff]
          %v724 = vld [vmem:[#allocation2 + $0x8] sm:$0xff]
          %v725 = vld [vmem:[#allocation2 + $0x10] sm:$0xff]
          %v726 = vld [vmem:[#allocation2 + $0x18] sm:$0xff]
          %v727 = vld [vmem:[#allocation2 + $0x20] sm:$0xff]
          %v728 = vld [vmem:[#allocation2 + $0x28] sm:$0xff]
          %v729 = vld [vmem:[#allocation2 + $0x30] sm:$0xff]
          %v730 = vld [vmem:[#allocation2 + $0x38] sm:$0xff]
          %v731 = vld [vmem:[%s411] sm:$0x3]
          %v733 = vlaneseq
          %v734 = vshrl.u32 %v733, 7
          %v735 = vsub.s32 0, %v734
          %v736 = vrot.slane %v731, %v735
          %v737 = vlaneseq
          %v738 = vshrl.u32 %v737, 7
          %v739 = vsub.s32 1, %v738
          %v740 = vrot.slane %v731, %v739
          %v743 = vadd.f32 %v723, %v736
          %v744 = vadd.f32 %v724, %v740
          %v745 = vadd.f32 %v725, %v736
          %v746 = vadd.f32 %v726, %v740
          %v747 = vadd.f32 %v727, %v736
          %v748 = vadd.f32 %v728, %v740
          %v749 = vadd.f32 %v729, %v736
          %v750 = vadd.f32 %v730, %v740
          %751 = vst [vmem:[%s393] sm:$0xff] %v743
          %752 = vst [vmem:[%s393 + $0x8] sm:$0xff] %v744
          %753 = vst [vmem:[%s393 + $0x10] sm:$0xff] %v745
          %754 = vst [vmem:[%s393 + $0x18] sm:$0xff] %v746
          %755 = vst [vmem:[%s393 + $0x20] sm:$0xff] %v747
          %756 = vst [vmem:[%s393 + $0x28] sm:$0xff] %v748
          %757 = vst [vmem:[%s393 + $0x30] sm:$0xff] %v749
          %758 = vst [vmem:[%s393 + $0x38] sm:$0xff] %v750
        $region78: #{music_transcription_forward.3} parent=65 // pred_fallthru
          _
        %s759 = sand.u32 %s125, 1
        %s760 = sand.u32 %s125, 1
        %s761 = smul.addr %s760, 64
        %s762 = scalar_lea.vmem [#allocation4], %s761
        // Predicated region
        $region79: #{music_transcription_forward.3} parent=65 // pred_check
          %p763 = pneg %p135
        $region80: #{music_transcription_forward.3} parent=65 // pred_check_branch
          %765 = sbr.rel (%p763) target = $region82
        $region81: #{music_transcription_forward.3} parent=65 // pred_region
          %s766 = smul.u32 4, %s19
          %s767 = smul.u32 2, %s20
          %s768 = smul.addr %s766, 10
          %s769 = sadd.s32 %s767, %s768
          %s770 = smul.addr %s769, 8
          %s771 = scalar_lea.vmem %s3, %s770
          // Predicated region
          $region83: #{music_transcription_forward.3} parent=81 // pred_check
            _
          $region84: #{music_transcription_forward.3} parent=81 // pred_check_branch
            %773 = sbr.rel (0) target = $region86
          $region85: #{music_transcription_forward.3} parent=81 // pred_region
            // Predicated region
            $region87: #{music_transcription_forward.3} parent=85 // pred_check
              _
            $region88: #{music_transcription_forward.3} parent=85 // pred_check_branch
              %775 = sbr.rel (0) target = $region90
            $region89: #{music_transcription_forward.3} parent=85 // pred_region
              loop: start=0, step=1, limit=1
              $region91: #{music_transcription_forward.3} parent=89 // loop_pre_header
                _
              $region92: #{music_transcription_forward.3} parent=89 // loop_header
                %s777 = sphi 0, %s781
                %p778 = scmp.ge.s32.totalorder %s777, 1
                %s782 = sphi %s762, %s762
                %s783 = sphi %s771, %s771
              $region93: #{music_transcription_forward.3} parent=89 // loop_header_branch
                %780 = sbr.rel (%p778) target = $region97
              $region94: #{music_transcription_forward.3} parent=89 // loop_body
                %v784 = vld [vmem:[%s782] sm:$0xff]
                %785 = vst [vmem:[%s783] sm:$0xff] %v784
                %v786 = vld [vmem:[%s782 + $0x8] sm:$0xff]
                %787 = vst [vmem:[%s783 + $0x8] sm:$0xff] %v786
                %v788 = vld [vmem:[%s782 + $0x10] sm:$0xff]
                %789 = vst [vmem:[%s783 + $0x50] sm:$0xff] %v788
                %v790 = vld [vmem:[%s782 + $0x18] sm:$0xff]
                %791 = vst [vmem:[%s783 + $0x58] sm:$0xff] %v790
                %v792 = vld [vmem:[%s782 + $0x20] sm:$0xff]
                %793 = vst [vmem:[%s783 + $0xa0] sm:$0xff] %v792
                %v794 = vld [vmem:[%s782 + $0x28] sm:$0xff]
                %795 = vst [vmem:[%s783 + $0xa8] sm:$0xff] %v794
                %v796 = vld [vmem:[%s782 + $0x30] sm:$0xff]
                %797 = vst [vmem:[%s783 + $0xf0] sm:$0xff] %v796
                %v798 = vld [vmem:[%s782 + $0x38] sm:$0xff]
                %799 = vst [vmem:[%s783 + $0xf8] sm:$0xff] %v798
              $region95: #{music_transcription_forward.3} parent=89 // loop_footer
                %s781 = sadd.s32 1, %s777
              $region96: #{music_transcription_forward.3} parent=89 // loop_footer_branch
                %776 = sbr.rel target = $region92
              $region97: #{music_transcription_forward.3} parent=89 // loop_exit
                _
            $region90: #{music_transcription_forward.3} parent=85 // pred_fallthru
              _
            // Predicated region
            $region98: #{music_transcription_forward.3} parent=85 // pred_check
              _
            $region99: #{music_transcription_forward.3} parent=85 // pred_check_branch
              %801 = sbr.rel target = $region101
            $region100: #{music_transcription_forward.3} parent=85 // pred_region
              _
            $region101: #{music_transcription_forward.3} parent=85 // pred_fallthru
              _
          $region86: #{music_transcription_forward.3} parent=81 // pred_fallthru
            _
          %802 = vnop
        $region82: #{music_transcription_forward.3} parent=65 // pred_fallthru
          _
      $region66: #{music_transcription_forward.3} parent=5 // pred_fallthru
        _
      %p803 = scmp.le.s32.totalorder 2, %s9
      // Predicated region
      $region102: #{music_transcription_forward.3} parent=5 // pred_check
        %p804 = pneg %p803
      $region103: #{music_transcription_forward.3} parent=5 // pred_check_branch
        %806 = sbr.rel (%p804) target = $region105
      $region104: #{music_transcription_forward.3} parent=5 // pred_region
        %s807 = ssub.s32 %s9, 2
        // Predicated region
        $region106: #{music_transcription_forward.3} parent=104 // pred_check
          %p808 = pneg %p141
        $region107: #{music_transcription_forward.3} parent=104 // pred_check_branch
          %810 = sbr.rel (%p808) target = $region109
        $region108: #{music_transcription_forward.3} parent=104 // pred_region
          %s811 = sand.u32 %s126, 1
          %s812 = sand.u32 %s126, 1
          %s813 = smul.addr %s812, 64
          %s814 = scalar_lea.vmem [#allocation4], %s813
        $region109: #{music_transcription_forward.3} parent=104 // pred_fallthru
          _
      $region105: #{music_transcription_forward.3} parent=5 // pred_fallthru
        _
    $region6: #{music_transcription_forward.3} parent=1 // loop_footer
      %s13 = sadd.s32 1, %s9
    $region7: #{music_transcription_forward.3} parent=1 // loop_footer_branch
      %8 = sbr.rel target = $region3
    $region8: #{music_transcription_forward.3} parent=1 // loop_exit
      _

// kernel: music_transcription_forward.4
$region0: #{music_transcription_forward.4}
  #allocation0 [shape = 'u32[]', space=smem, size = 0x4, offset = 0x4, fixed_abs, tag = 'smem constant byte address 0x4 - core index']
  #allocation1 [shape = 'u32[144,128]{1,0:T(1,128)}', space=vmem, size = 0x12000, scoped, tag = 'internal scratch']
  #allocation2 [shape = 'f32[32,256]{1,0:T(8,128)}', space=vmem, size = 0x8000, scoped, tag = 'scratch operand']
  %s0 = inlined_call_operand.vmem [shape: bf16[32,1280], index: 0, kind: input, shape index: {}]
  %s1 = inlined_call_operand.vmem [shape: bf16[1280,1024], index: 1, kind: input, shape index: {}]
  %s2 = inlined_call_operand.vmem [shape: f32[1,1024], index: 2, kind: input, shape index: {}]
  %s3 = inlined_call_operand.vmem [shape: f32[32,1024], index: 3, kind: output, shape index: {}]
  %s4 = sld [smem:[#allocation0]]
  $region148: #{music_transcription_forward.4} parent=0
    _
  %s6 = ssub.s32 1, %s4
  %s7 = scalar_select 0, %s6, %s4
  $region1: #{music_transcription_forward.4} parent=0
    #allocation3 [shape = 'u8[32768]{0}', space=vmem, size = 0x8000, scoped, tag = 'input window, operand 0']
    #allocation4 [shape = 'u8[262144]{0}', space=vmem, size = 0x40000, scoped, tag = 'input window, operand 1']
    #allocation5 [shape = 'u8[65536]{0}', space=vmem, size = 0x10000, scoped, tag = 'output window, operand 0']
    loop: start=0, step=1, limit=22
    $region2: #{music_transcription_forward.4} parent=1 // loop_pre_header
      _
    $region3: #{music_transcription_forward.4} parent=1 // loop_header
      %s9 = sphi 0, %s13
      %p10 = scmp.ge.s32.totalorder %s9, 22
      %s16 = sphi 0, %s35
      %s17 = sphi 0, %s31
      %s18 = sphi 0, %s27
      %s19 = sphi 0, %s16
      %s20 = sphi 0, %s17
      %s21 = sphi 0, %s18
      %s22 = sphi 0, %s19
      %s23 = sphi 0, %s20
      %s24 = sphi 0, %s21
      %s40 = sphi 0, %s42
      %s43 = sphi 0, %s40
      %s44 = sphi 0, %s43
      %s60 = sphi 0, %s44
      %s68 = sphi 0, %s70
      %s71 = sphi 0, %s68
      %s72 = sphi 0, %s71
      %s88 = sphi 0, %s72
      %s94 = sphi 0, %s96
      %s97 = sphi 0, %s94
      %s98 = sphi 0, %s97
      %s114 = sphi 0, %s98
      %s122 = sphi 0, %s124
      %s125 = sphi 0, %s122
      %s126 = sphi 0, %s125
      %s142 = sphi 0, %s126
    $region4: #{music_transcription_forward.4} parent=1 // loop_header_branch
      %12 = sbr.rel (%p10) target = $region8
    $region5: #{music_transcription_forward.4} parent=1 // loop_body
      %s14 = ssub.s32 %s9, 1
      %s15 = ssub.s32 %s9, 2
      %s25 = sadd.s32 1, %s18
      %p26 = scmp.ge.s32.totalorder %s25, 5
      %s27 = scalar_select %p26, 0, %s25
      %s28 = sadd.s32 1, %s17
      %s29 = scalar_select %p26, %s28, %s17
      %p30 = scmp.ge.s32.totalorder %s29, 4
      %s31 = scalar_select %p30, 0, %s29
      %s32 = sadd.s32 1, %s16
      %s33 = scalar_select %p30, %s32, %s16
      %p34 = scmp.ge.s32.totalorder %s33, 1
      %s35 = scalar_select %p34, 0, %s33
      %s36 = ssub.s32 %s16, %s35
      %s37 = ssub.s32 %s18, %s27
      %s38 = sor.u32 %s36, %s37
      %p39 = scmp.eq.s32.totalorder %s38, 0
      %s41 = sadd.s32 %s40, 1
      %s42 = scalar_select %p39, %s40, %s41
      %p45 = pneg %p39
      %p46 = scmp.eq.s32.totalorder %s9, 19
      %p47 = por %p45, %p46
      %p48 = scmp.ne.s32.totalorder %s40, %s43
      %p49 = scmp.eq.s32.totalorder %s9, 0
      %p50 = por %p48, %p49
      %p51 = scmp.ne.s32.totalorder %s40, %s43
      %p52 = scmp.eq.s32.totalorder %s14, 19
      %p53 = por %p51, %p52
      %p54 = scmp.ne.s32.totalorder %s43, %s44
      %p55 = scmp.eq.s32.totalorder %s14, 0
      %p56 = por %p54, %p55
      %p57 = scmp.ne.s32.totalorder %s43, %s44
      %p58 = scmp.eq.s32.totalorder %s15, 19
      %p59 = por %p57, %p58
      %p61 = scmp.ne.s32.totalorder %s44, %s60
      %p62 = scmp.eq.s32.totalorder %s15, 0
      %p63 = por %p61, %p62
      %s64 = ssub.s32 %s18, %s27
      %s65 = ssub.s32 %s17, %s31
      %s66 = sor.u32 %s64, %s65
      %p67 = scmp.eq.s32.totalorder %s66, 0
      %s69 = sadd.s32 %s68, 1
      %s70 = scalar_select %p67, %s68, %s69
      %p73 = pneg %p67
      %p74 = scmp.eq.s32.totalorder %s9, 19
      %p75 = por %p73, %p74
      %p76 = scmp.ne.s32.totalorder %s68, %s71
      %p77 = scmp.eq.s32.totalorder %s9, 0
      %p78 = por %p76, %p77
      %p79 = scmp.ne.s32.totalorder %s68, %s71
      %p80 = scmp.eq.s32.totalorder %s14, 19
      %p81 = por %p79, %p80
      %p82 = scmp.ne.s32.totalorder %s71, %s72
      %p83 = scmp.eq.s32.totalorder %s14, 0
      %p84 = por %p82, %p83
      %p85 = scmp.ne.s32.totalorder %s71, %s72
      %p86 = scmp.eq.s32.totalorder %s15, 19
      %p87 = por %p85, %p86
      %p89 = scmp.ne.s32.totalorder %s72, %s88
      %p90 = scmp.eq.s32.totalorder %s15, 0
      %p91 = por %p89, %p90
      %s92 = ssub.s32 %s17, %s31
      %p93 = scmp.eq.s32.totalorder %s92, 0
      %s95 = sadd.s32 %s94, 1
      %s96 = scalar_select %p93, %s94, %s95
      %p99 = pneg %p93
      %p100 = scmp.eq.s32.totalorder %s9, 19
      %p101 = por %p99, %p100
      %p102 = scmp.ne.s32.totalorder %s94, %s97
      %p103 = scmp.eq.s32.totalorder %s9, 0
      %p104 = por %p102, %p103
      %p105 = scmp.ne.s32.totalorder %s94, %s97
      %p106 = scmp.eq.s32.totalorder %s14, 19
      %p107 = por %p105, %p106
      %p108 = scmp.ne.s32.totalorder %s97, %s98
      %p109 = scmp.eq.s32.totalorder %s14, 0
      %p110 = por %p108, %p109
      %p111 = scmp.ne.s32.totalorder %s97, %s98
      %p112 = scmp.eq.s32.totalorder %s15, 19
      %p113 = por %p111, %p112
      %p115 = scmp.ne.s32.totalorder %s98, %s114
      %p116 = scmp.eq.s32.totalorder %s15, 0
      %p117 = por %p115, %p116
      %s118 = ssub.s32 %s16, %s35
      %s119 = ssub.s32 %s17, %s31
      %s120 = sor.u32 %s118, %s119
      %p121 = scmp.eq.s32.totalorder %s120, 0
      %s123 = sadd.s32 %s122, 1
      %s124 = scalar_select %p121, %s122, %s123
      %p127 = pneg %p121
      %p128 = scmp.eq.s32.totalorder %s9, 19
      %p129 = por %p127, %p128
      %p130 = scmp.ne.s32.totalorder %s122, %s125
      %p131 = scmp.eq.s32.totalorder %s9, 0
      %p132 = por %p130, %p131
      %p133 = scmp.ne.s32.totalorder %s122, %s125
      %p134 = scmp.eq.s32.totalorder %s14, 19
      %p135 = por %p133, %p134
      %p136 = scmp.ne.s32.totalorder %s125, %s126
      %p137 = scmp.eq.s32.totalorder %s14, 0
      %p138 = por %p136, %p137
      %p139 = scmp.ne.s32.totalorder %s125, %s126
      %p140 = scmp.eq.s32.totalorder %s15, 19
      %p141 = por %p139, %p140
      %p143 = scmp.ne.s32.totalorder %s126, %s142
      %p144 = scmp.eq.s32.totalorder %s15, 0
      %p145 = por %p143, %p144
      %p146 = scmp.le.s32.totalorder 1, %s9
      %p147 = scmp.lt.s32.totalorder %s9, 21
      %p148 = pnand %p146, %p147
      %p149 = pneg %p148
      // Predicated region
      $region9: #{music_transcription_forward.4} parent=5 // pred_check
        _
      $region10: #{music_transcription_forward.4} parent=5 // pred_check_branch
        %151 = sbr.rel (%p148) target = $region12
      $region11: #{music_transcription_forward.4} parent=5 // pred_region
        %s152 = ssub.s32 %s9, 1
      $region12: #{music_transcription_forward.4} parent=5 // pred_fallthru
        _
      %p153 = scmp.lt.s32.totalorder %s9, 20
      // Predicated region
      $region13: #{music_transcription_forward.4} parent=5 // pred_check
        %p154 = pneg %p153
      $region14: #{music_transcription_forward.4} parent=5 // pred_check_branch
        %156 = sbr.rel (%p154) target = $region16
      $region15: #{music_transcription_forward.4} parent=5 // pred_region
        // Predicated region
        $region17: #{music_transcription_forward.4} parent=15 // pred_check
          %p157 = pneg %p50
        $region18: #{music_transcription_forward.4} parent=15 // pred_check_branch
          %159 = sbr.rel (%p157) target = $region20
        $region19: #{music_transcription_forward.4} parent=15 // pred_region
          %s160 = sand.u32 %s40, 1
          %s161 = sand.u32 %s40, 1
          %s162 = smul.addr %s161, 32
          %s163 = scalar_lea.vmem [#allocation3], %s162
          %s164 = smul.u32 4, %s16
          %s165 = smul.u32 2, %s18
          %s166 = smul.addr %s164, 10
          %s167 = sadd.s32 %s165, %s166
          %s168 = smul.addr %s167, 4
          %s169 = scalar_lea.vmem %s0, %s168
          // Predicated region
          $region21: #{music_transcription_forward.4} parent=19 // pred_check
            _
          $region22: #{music_transcription_forward.4} parent=19 // pred_check_branch
            %171 = sbr.rel (0) target = $region24
          $region23: #{music_transcription_forward.4} parent=19 // pred_region
            // Predicated region
            $region25: #{music_transcription_forward.4} parent=23 // pred_check
              _
            $region26: #{music_transcription_forward.4} parent=23 // pred_check_branch
              %173 = sbr.rel (0) target = $region28
            $region27: #{music_transcription_forward.4} parent=23 // pred_region
              // Predicated region
              $region40: #{music_transcription_forward.4} parent=27 // pred_check
                _
              $region41: #{music_transcription_forward.4} parent=27 // pred_check_branch
                %195 = sbr.rel (0) target = $region43
              $region42: #{music_transcription_forward.4} parent=27 // pred_region
                loop: start=0, step=1, limit=1
                $region44: #{music_transcription_forward.4} parent=42 // loop_pre_header
                  _
                $region45: #{music_transcription_forward.4} parent=42 // loop_header
                  %s197 = sphi 0, %s201
                  %p198 = scmp.ge.s32.totalorder %s197, 1
                  %s202 = sphi %s169, %s169
                  %s203 = sphi %s163, %s163
                $region46: #{music_transcription_forward.4} parent=42 // loop_header_branch
                  %200 = sbr.rel (%p198) target = $region50
                $region47: #{music_transcription_forward.4} parent=42 // loop_body
                  %v204 = vld [vmem:[%s202] sm:$0xff]
                  %205 = vst [vmem:[%s203] sm:$0xff] %v204
                  %v206 = vld [vmem:[%s202 + $0x28] sm:$0xff]
                  %207 = vst [vmem:[%s203 + $0x8] sm:$0xff] %v206
                  %v208 = vld [vmem:[%s202 + $0x50] sm:$0xff]
                  %209 = vst [vmem:[%s203 + $0x10] sm:$0xff] %v208
                  %v210 = vld [vmem:[%s202 + $0x78] sm:$0xff]
                  %211 = vst [vmem:[%s203 + $0x18] sm:$0xff] %v210
                $region48: #{music_transcription_forward.4} parent=42 // loop_footer
                  %s201 = sadd.s32 1, %s197
                $region49: #{music_transcription_forward.4} parent=42 // loop_footer_branch
                  %196 = sbr.rel target = $region45
                $region50: #{music_transcription_forward.4} parent=42 // loop_exit
                  _
              $region43: #{music_transcription_forward.4} parent=27 // pred_fallthru
                _
              // Predicated region
              $region51: #{music_transcription_forward.4} parent=27 // pred_check
                _
              $region52: #{music_transcription_forward.4} parent=27 // pred_check_branch
                %213 = sbr.rel target = $region54
              $region53: #{music_transcription_forward.4} parent=27 // pred_region
                _
              $region54: #{music_transcription_forward.4} parent=27 // pred_fallthru
                _
            $region28: #{music_transcription_forward.4} parent=23 // pred_fallthru
              _
            // Predicated region
            $region29: #{music_transcription_forward.4} parent=23 // pred_check
              _
            $region30: #{music_transcription_forward.4} parent=23 // pred_check_branch
              %175 = sbr.rel target = $region32
            $region31: #{music_transcription_forward.4} parent=23 // pred_region
              %s177 = ssub.s32 256, 1
              loop: start=0, step=1, limit=1
              $region33: #{music_transcription_forward.4} parent=31 // loop_pre_header
                _
              $region34: #{music_transcription_forward.4} parent=31 // loop_header
                %s179 = sphi 0, %s183
                %p180 = scmp.ge.s32.totalorder %s179, 1
                %s184 = sphi %s169, %s169
                %s185 = sphi %s163, %s163
              $region35: #{music_transcription_forward.4} parent=31 // loop_header_branch
                %182 = sbr.rel (%p180) target = $region39
              $region36: #{music_transcription_forward.4} parent=31 // loop_body
                %v186 = vld [vmem:[%s184] sm:%s177]
                %187 = vst [vmem:[%s185] sm:%s177] %v186
                %v188 = vld [vmem:[%s184 + $0x28] sm:%s177]
                %189 = vst [vmem:[%s185 + $0x8] sm:%s177] %v188
                %v190 = vld [vmem:[%s184 + $0x50] sm:%s177]
                %191 = vst [vmem:[%s185 + $0x10] sm:%s177] %v190
                %v192 = vld [vmem:[%s184 + $0x78] sm:%s177]
                %193 = vst [vmem:[%s185 + $0x18] sm:%s177] %v192
              $region37: #{music_transcription_forward.4} parent=31 // loop_footer
                %s183 = sadd.s32 1, %s179
              $region38: #{music_transcription_forward.4} parent=31 // loop_footer_branch
                %178 = sbr.rel target = $region34
              $region39: #{music_transcription_forward.4} parent=31 // loop_exit
                _
            $region32: #{music_transcription_forward.4} parent=23 // pred_fallthru
              _
          $region24: #{music_transcription_forward.4} parent=19 // pred_fallthru
            _
          %214 = vnop
        $region20: #{music_transcription_forward.4} parent=15 // pred_fallthru
          _
        // Predicated region
        $region55: #{music_transcription_forward.4} parent=15 // pred_check
          %p215 = pneg %p78
        $region56: #{music_transcription_forward.4} parent=15 // pred_check_branch
          %217 = sbr.rel (%p215) target = $region58
        $region57: #{music_transcription_forward.4} parent=15 // pred_region
          %s218 = sand.u32 %s68, 1
          %s219 = sand.u32 %s68, 1
          %s220 = smul.addr %s219, 256
          %s221 = scalar_lea.vmem [#allocation4], %s220
          %s222 = smul.u32 32, %s18
          %s223 = smul.u32 2, %s17
          %s224 = smul.addr %s222, 8
          %s225 = sadd.s32 %s223, %s224
          %s226 = smul.addr %s225, 4
          %s227 = scalar_lea.vmem %s1, %s226
          // Predicated region
          $region59: #{music_transcription_forward.4} parent=57 // pred_check
            _
          $region60: #{music_transcription_forward.4} parent=57 // pred_check_branch
            %229 = sbr.rel (0) target = $region62
          $region61: #{music_transcription_forward.4} parent=57 // pred_region
            // Predicated region
            $region63: #{music_transcription_forward.4} parent=61 // pred_check
              _
            $region64: #{music_transcription_forward.4} parent=61 // pred_check_branch
              %231 = sbr.rel (0) target = $region66
            $region65: #{music_transcription_forward.4} parent=61 // pred_region
              // Predicated region
              $region78: #{music_transcription_forward.4} parent=65 // pred_check
                _
              $region79: #{music_transcription_forward.4} parent=65 // pred_check_branch
                %309 = sbr.rel (0) target = $region81
              $region80: #{music_transcription_forward.4} parent=65 // pred_region
                loop: start=0, step=1, limit=1
                $region82: #{music_transcription_forward.4} parent=80 // loop_pre_header
                  _
                $region83: #{music_transcription_forward.4} parent=80 // loop_header
                  %s311 = sphi 0, %s315
                  %p312 = scmp.ge.s32.totalorder %s311, 1
                  %s316 = sphi %s227, %s227
                  %s317 = sphi %s221, %s221
                $region84: #{music_transcription_forward.4} parent=80 // loop_header_branch
                  %314 = sbr.rel (%p312) target = $region88
                $region85: #{music_transcription_forward.4} parent=80 // loop_body
                  %v318 = vld [vmem:[%s316] sm:$0xff]
                  %319 = vst [vmem:[%s317] sm:$0xff] %v318
                  %v320 = vld [vmem:[%s316 + $0x20] sm:$0xff]
                  %321 = vst [vmem:[%s317 + $0x8] sm:$0xff] %v320
                  %v322 = vld [vmem:[%s316 + $0x40] sm:$0xff]
                  %323 = vst [vmem:[%s317 + $0x10] sm:$0xff] %v322
                  %v324 = vld [vmem:[%s316 + $0x60] sm:$0xff]
                  %325 = vst [vmem:[%s317 + $0x18] sm:$0xff] %v324
                  %v326 = vld [vmem:[%s316 + $0x80] sm:$0xff]
                  %327 = vst [vmem:[%s317 + $0x20] sm:$0xff] %v326
                  %v328 = vld [vmem:[%s316 + $0xa0] sm:$0xff]
                  %329 = vst [vmem:[%s317 + $0x28] sm:$0xff] %v328
                  %v330 = vld [vmem:[%s316 + $0xc0] sm:$0xff]
                  %331 = vst [vmem:[%s317 + $0x30] sm:$0xff] %v330
                  %v332 = vld [vmem:[%s316 + $0xe0] sm:$0xff]
                  %333 = vst [vmem:[%s317 + $0x38] sm:$0xff] %v332
                  %v334 = vld [vmem:[%s316 + $0x100] sm:$0xff]
                  %335 = vst [vmem:[%s317 + $0x40] sm:$0xff] %v334
                  %v336 = vld [vmem:[%s316 + $0x120] sm:$0xff]
                  %337 = vst [vmem:[%s317 + $0x48] sm:$0xff] %v336
                  %v338 = vld [vmem:[%s316 + $0x140] sm:$0xff]
                  %339 = vst [vmem:[%s317 + $0x50] sm:$0xff] %v338
                  %v340 = vld [vmem:[%s316 + $0x160] sm:$0xff]
                  %341 = vst [vmem:[%s317 + $0x58] sm:$0xff] %v340
                  %v342 = vld [vmem:[%s316 + $0x180] sm:$0xff]
                  %343 = vst [vmem:[%s317 + $0x60] sm:$0xff] %v342
                  %v344 = vld [vmem:[%s316 + $0x1a0] sm:$0xff]
                  %345 = vst [vmem:[%s317 + $0x68] sm:$0xff] %v344
                  %v346 = vld [vmem:[%s316 + $0x1c0] sm:$0xff]
                  %347 = vst [vmem:[%s317 + $0x70] sm:$0xff] %v346
                  %v348 = vld [vmem:[%s316 + $0x1e0] sm:$0xff]
                  %349 = vst [vmem:[%s317 + $0x78] sm:$0xff] %v348
                  %v350 = vld [vmem:[%s316 + $0x200] sm:$0xff]
                  %351 = vst [vmem:[%s317 + $0x80] sm:$0xff] %v350
                  %v352 = vld [vmem:[%s316 + $0x220] sm:$0xff]
                  %353 = vst [vmem:[%s317 + $0x88] sm:$0xff] %v352
                  %v354 = vld [vmem:[%s316 + $0x240] sm:$0xff]
                  %355 = vst [vmem:[%s317 + $0x90] sm:$0xff] %v354
                  %v356 = vld [vmem:[%s316 + $0x260] sm:$0xff]
                  %357 = vst [vmem:[%s317 + $0x98] sm:$0xff] %v356
                  %v358 = vld [vmem:[%s316 + $0x280] sm:$0xff]
                  %359 = vst [vmem:[%s317 + $0xa0] sm:$0xff] %v358
                  %v360 = vld [vmem:[%s316 + $0x2a0] sm:$0xff]
                  %361 = vst [vmem:[%s317 + $0xa8] sm:$0xff] %v360
                  %v362 = vld [vmem:[%s316 + $0x2c0] sm:$0xff]
                  %363 = vst [vmem:[%s317 + $0xb0] sm:$0xff] %v362
                  %v364 = vld [vmem:[%s316 + $0x2e0] sm:$0xff]
                  %365 = vst [vmem:[%s317 + $0xb8] sm:$0xff] %v364
                  %v366 = vld [vmem:[%s316 + $0x300] sm:$0xff]
                  %367 = vst [vmem:[%s317 + $0xc0] sm:$0xff] %v366
                  %v368 = vld [vmem:[%s316 + $0x320] sm:$0xff]
                  %369 = vst [vmem:[%s317 + $0xc8] sm:$0xff] %v368
                  %v370 = vld [vmem:[%s316 + $0x340] sm:$0xff]
                  %371 = vst [vmem:[%s317 + $0xd0] sm:$0xff] %v370
                  %v372 = vld [vmem:[%s316 + $0x360] sm:$0xff]
                  %373 = vst [vmem:[%s317 + $0xd8] sm:$0xff] %v372
                  %v374 = vld [vmem:[%s316 + $0x380] sm:$0xff]
                  %375 = vst [vmem:[%s317 + $0xe0] sm:$0xff] %v374
                  %v376 = vld [vmem:[%s316 + $0x3a0] sm:$0xff]
                  %377 = vst [vmem:[%s317 + $0xe8] sm:$0xff] %v376
                  %v378 = vld [vmem:[%s316 + $0x3c0] sm:$0xff]
                  %379 = vst [vmem:[%s317 + $0xf0] sm:$0xff] %v378
                  %v380 = vld [vmem:[%s316 + $0x3e0] sm:$0xff]
                  %381 = vst [vmem:[%s317 + $0xf8] sm:$0xff] %v380
                $region86: #{music_transcription_forward.4} parent=80 // loop_footer
                  %s315 = sadd.s32 1, %s311
                $region87: #{music_transcription_forward.4} parent=80 // loop_footer_branch
                  %310 = sbr.rel target = $region83
                $region88: #{music_transcription_forward.4} parent=80 // loop_exit
                  _
              $region81: #{music_transcription_forward.4} parent=65 // pred_fallthru
                _
              // Predicated region
              $region89: #{music_transcription_forward.4} parent=65 // pred_check
                _
              $region90: #{music_transcription_forward.4} parent=65 // pred_check_branch
                %383 = sbr.rel target = $region92
              $region91: #{music_transcription_forward.4} parent=65 // pred_region
                _
              $region92: #{music_transcription_forward.4} parent=65 // pred_fallthru
                _
            $region66: #{music_transcription_forward.4} parent=61 // pred_fallthru
              _
            // Predicated region
            $region67: #{music_transcription_forward.4} parent=61 // pred_check
              _
            $region68: #{music_transcription_forward.4} parent=61 // pred_check_branch
              %233 = sbr.rel target = $region70
            $region69: #{music_transcription_forward.4} parent=61 // pred_region
              %s235 = ssub.s32 256, 1
              loop: start=0, step=1, limit=1
              $region71: #{music_transcription_forward.4} parent=69 // loop_pre_header
                _
              $region72: #{music_transcription_forward.4} parent=69 // loop_header
                %s237 = sphi 0, %s241
                %p238 = scmp.ge.s32.totalorder %s237, 1
                %s242 = sphi %s227, %s227
                %s243 = sphi %s221, %s221
              $region73: #{music_transcription_forward.4} parent=69 // loop_header_branch
                %240 = sbr.rel (%p238) target = $region77
              $region74: #{music_transcription_forward.4} parent=69 // loop_body
                %v244 = vld [vmem:[%s242] sm:%s235]
                %245 = vst [vmem:[%s243] sm:%s235] %v244
                %v246 = vld [vmem:[%s242 + $0x20] sm:%s235]
                %247 = vst [vmem:[%s243 + $0x8] sm:%s235] %v246
                %v248 = vld [vmem:[%s242 + $0x40] sm:%s235]
                %249 = vst [vmem:[%s243 + $0x10] sm:%s235] %v248
                %v250 = vld [vmem:[%s242 + $0x60] sm:%s235]
                %251 = vst [vmem:[%s243 + $0x18] sm:%s235] %v250
                %v252 = vld [vmem:[%s242 + $0x80] sm:%s235]
                %253 = vst [vmem:[%s243 + $0x20] sm:%s235] %v252
                %v254 = vld [vmem:[%s242 + $0xa0] sm:%s235]
                %255 = vst [vmem:[%s243 + $0x28] sm:%s235] %v254
                %v256 = vld [vmem:[%s242 + $0xc0] sm:%s235]
                %257 = vst [vmem:[%s243 + $0x30] sm:%s235] %v256
                %v258 = vld [vmem:[%s242 + $0xe0] sm:%s235]
                %259 = vst [vmem:[%s243 + $0x38] sm:%s235] %v258
                %v260 = vld [vmem:[%s242 + $0x100] sm:%s235]
                %261 = vst [vmem:[%s243 + $0x40] sm:%s235] %v260
                %v262 = vld [vmem:[%s242 + $0x120] sm:%s235]
                %263 = vst [vmem:[%s243 + $0x48] sm:%s235] %v262
                %v264 = vld [vmem:[%s242 + $0x140] sm:%s235]
                %265 = vst [vmem:[%s243 + $0x50] sm:%s235] %v264
                %v266 = vld [vmem:[%s242 + $0x160] sm:%s235]
                %267 = vst [vmem:[%s243 + $0x58] sm:%s235] %v266
                %v268 = vld [vmem:[%s242 + $0x180] sm:%s235]
                %269 = vst [vmem:[%s243 + $0x60] sm:%s235] %v268
                %v270 = vld [vmem:[%s242 + $0x1a0] sm:%s235]
                %271 = vst [vmem:[%s243 + $0x68] sm:%s235] %v270
                %v272 = vld [vmem:[%s242 + $0x1c0] sm:%s235]
                %273 = vst [vmem:[%s243 + $0x70] sm:%s235] %v272
                %v274 = vld [vmem:[%s242 + $0x1e0] sm:%s235]
                %275 = vst [vmem:[%s243 + $0x78] sm:%s235] %v274
                %v276 = vld [vmem:[%s242 + $0x200] sm:%s235]
                %277 = vst [vmem:[%s243 + $0x80] sm:%s235] %v276
                %v278 = vld [vmem:[%s242 + $0x220] sm:%s235]
                %279 = vst [vmem:[%s243 + $0x88] sm:%s235] %v278
                %v280 = vld [vmem:[%s242 + $0x240] sm:%s235]
                %281 = vst [vmem:[%s243 + $0x90] sm:%s235] %v280
                %v282 = vld [vmem:[%s242 + $0x260] sm:%s235]
                %283 = vst [vmem:[%s243 + $0x98] sm:%s235] %v282
                %v284 = vld [vmem:[%s242 + $0x280] sm:%s235]
                %285 = vst [vmem:[%s243 + $0xa0] sm:%s235] %v284
                %v286 = vld [vmem:[%s242 + $0x2a0] sm:%s235]
                %287 = vst [vmem:[%s243 + $0xa8] sm:%s235] %v286
                %v288 = vld [vmem:[%s242 + $0x2c0] sm:%s235]
                %289 = vst [vmem:[%s243 + $0xb0] sm:%s235] %v288
                %v290 = vld [vmem:[%s242 + $0x2e0] sm:%s235]
                %291 = vst [vmem:[%s243 + $0xb8] sm:%s235] %v290
                %v292 = vld [vmem:[%s242 + $0x300] sm:%s235]
                %293 = vst [vmem:[%s243 + $0xc0] sm:%s235] %v292
                %v294 = vld [vmem:[%s242 + $0x320] sm:%s235]
                %295 = vst [vmem:[%s243 + $0xc8] sm:%s235] %v294
                %v296 = vld [vmem:[%s242 + $0x340] sm:%s235]
                %297 = vst [vmem:[%s243 + $0xd0] sm:%s235] %v296
                %v298 = vld [vmem:[%s242 + $0x360] sm:%s235]
                %299 = vst [vmem:[%s243 + $0xd8] sm:%s235] %v298
                %v300 = vld [vmem:[%s242 + $0x380] sm:%s235]
                %301 = vst [vmem:[%s243 + $0xe0] sm:%s235] %v300
                %v302 = vld [vmem:[%s242 + $0x3a0] sm:%s235]
                %303 = vst [vmem:[%s243 + $0xe8] sm:%s235] %v302
                %v304 = vld [vmem:[%s242 + $0x3c0] sm:%s235]
                %305 = vst [vmem:[%s243 + $0xf0] sm:%s235] %v304
                %v306 = vld [vmem:[%s242 + $0x3e0] sm:%s235]
                %307 = vst [vmem:[%s243 + $0xf8] sm:%s235] %v306
              $region75: #{music_transcription_forward.4} parent=69 // loop_footer
                %s241 = sadd.s32 1, %s237
              $region76: #{music_transcription_forward.4} parent=69 // loop_footer_branch
                %236 = sbr.rel target = $region72
              $region77: #{music_transcription_forward.4} parent=69 // loop_exit
                _
            $region70: #{music_transcription_forward.4} parent=61 // pred_fallthru
              _
          $region62: #{music_transcription_forward.4} parent=57 // pred_fallthru
            _
          %384 = vnop
        $region58: #{music_transcription_forward.4} parent=15 // pred_fallthru
          _
        // Predicated region
        $region93: #{music_transcription_forward.4} parent=15 // pred_check
          %p385 = pneg %p104
        $region94: #{music_transcription_forward.4} parent=15 // pred_check_branch
          %387 = sbr.rel (%p385) target = $region96
        $region95: #{music_transcription_forward.4} parent=15 // pred_region
          %s388 = smul.u32 2, %s17
          %p389 = scmp.lt.s32.totalorder %s388, 7
          %s390 = scalar_select %p389, %s388, 7
          %s391 = scalar_lea.vmem %s2, %s390
          %s392 = smul.u32 2, %s17
        $region96: #{music_transcription_forward.4} parent=15 // pred_fallthru
          _
      $region16: #{music_transcription_forward.4} parent=5 // pred_fallthru
        _
      %p393 = scmp.le.s32.totalorder 1, %s9
      %p394 = scmp.lt.s32.totalorder %s9, 21
      %p395 = pnand %p393, %p394
      %p396 = pneg %p395
      // Predicated region
      $region97: #{music_transcription_forward.4} parent=5 // pred_check
        _
      $region98: #{music_transcription_forward.4} parent=5 // pred_check_branch
        %398 = sbr.rel (%p395) target = $region100
      $region99: #{music_transcription_forward.4} parent=5 // pred_region
        %s399 = ssub.s32 %s9, 1
        %s400 = sand.u32 %s43, 1
        %s401 = sand.u32 %s43, 1
        %s402 = smul.addr %s401, 32
        %s403 = scalar_lea.vmem [#allocation3], %s402
        // Predicated region
        $region101: #{music_transcription_forward.4} parent=99 // pred_check
          %p404 = pneg %p56
        $region102: #{music_transcription_forward.4} parent=99 // pred_check_branch
          %406 = sbr.rel (%p404) target = $region104
        $region103: #{music_transcription_forward.4} parent=99 // pred_region
          _
        $region104: #{music_transcription_forward.4} parent=99 // pred_fallthru
          _
        %s407 = sand.u32 %s71, 1
        %s408 = sand.u32 %s71, 1
        %s409 = smul.addr %s408, 256
        %s410 = scalar_lea.vmem [#allocation4], %s409
        // Predicated region
        $region105: #{music_transcription_forward.4} parent=99 // pred_check
          %p411 = pneg %p84
        $region106: #{music_transcription_forward.4} parent=99 // pred_check_branch
          %413 = sbr.rel (%p411) target = $region108
        $region107: #{music_transcription_forward.4} parent=99 // pred_region
          _
        $region108: #{music_transcription_forward.4} parent=99 // pred_fallthru
          _
        %s414 = sand.u32 %s43, 1
        %s415 = sand.u32 %s43, 1
        %s416 = smul.addr %s415, 32
        %s417 = scalar_lea.vmem [#allocation3], %s416
        %p418 = pneg %p56
        %p419 = pneg %p53
        %s420 = sand.u32 %s71, 1
        %s421 = sand.u32 %s71, 1
        %s422 = smul.addr %s421, 256
        %s423 = scalar_lea.vmem [#allocation4], %s422
        %p424 = pneg %p84
        %p425 = pneg %p81
        %s426 = smul.u32 2, %s20
        %p427 = scmp.lt.s32.totalorder %s426, 7
        %s428 = scalar_select %p427, %s426, 7
        %s429 = scalar_lea.vmem %s2, %s428
        %p430 = pneg %p110
        %p431 = pneg %p107
        %p432 = pneg %p138
        %p433 = pneg %p135
        %s434 = sand.u32 %s125, 1
        %s435 = sand.u32 %s125, 1
        %s436 = smul.addr %s435, 64
        %s437 = scalar_lea.vmem [#allocation5], %s436
        %s438 = smul.u32 4, %s19
        %s439 = smul.u32 2, %s21
        %s440 = smul.u32 32, %s21
        %s441 = smul.u32 2, %s20
        %s442 = smul.u32 2, %s20
        %p443 = scmp.lt.s32.totalorder %s442, 7
        %s444 = scalar_select %p443, %s442, 7
        %s445 = scalar_lea.vmem %s2, %s444
        %s446 = smul.u32 2, %s20
        %s447 = smul.u32 4, %s19
        %s448 = smul.u32 2, %s20
        %p449 = scmp.eq.s32.totalorder %s21, 0
        // Predicated region
        $region109: #{music_transcription_forward.4} parent=99 // pred_check
          %p450 = pneg %p449
        $region110: #{music_transcription_forward.4} parent=99 // pred_check_branch
          %452 = sbr.rel (%p450) target = $region112
        $region111: #{music_transcription_forward.4} parent=99 // pred_region
          %453 = vst [vmem:[#allocation2] sm:$0xff] 0.0
          %454 = vst [vmem:[#allocation2 + $0x8] sm:$0xff] 0.0
          %455 = vst [vmem:[#allocation2 + $0x10] sm:$0xff] 0.0
          %456 = vst [vmem:[#allocation2 + $0x18] sm:$0xff] 0.0
          %457 = vst [vmem:[#allocation2 + $0x20] sm:$0xff] 0.0
          %458 = vst [vmem:[#allocation2 + $0x28] sm:$0xff] 0.0
          %459 = vst [vmem:[#allocation2 + $0x30] sm:$0xff] 0.0
          %460 = vst [vmem:[#allocation2 + $0x38] sm:$0xff] 0.0
        $region112: #{music_transcription_forward.4} parent=99 // pred_fallthru
          _
        %v461 = vld [vmem:[#allocation2] sm:$0xff]
        %v462 = vld [vmem:[#allocation2 + $0x8] sm:$0xff]
        %v463 = vld [vmem:[#allocation2 + $0x10] sm:$0xff]
        %v464 = vld [vmem:[#allocation2 + $0x18] sm:$0xff]
        %v465 = vld [vmem:[#allocation2 + $0x20] sm:$0xff]
        %v466 = vld [vmem:[#allocation2 + $0x28] sm:$0xff]
        %v467 = vld [vmem:[#allocation2 + $0x30] sm:$0xff]
        %v468 = vld [vmem:[#allocation2 + $0x38] sm:$0xff]
        %v469 = vld [vmem:[%s403] sm:$0xff]
        %v470 = vld [vmem:[%s403 + $0x8] sm:$0xff]
        %v471 = vld [vmem:[%s403 + $0x10] sm:$0xff]
        %v472 = vld [vmem:[%s403 + $0x18] sm:$0xff]
        %v473 = vld [vmem:[%s410] sm:$0xff]
        %v474 = vld [vmem:[%s410 + $0x8] sm:$0xff]
        %v475 = vld [vmem:[%s410 + $0x10] sm:$0xff]
        %v476 = vld [vmem:[%s410 + $0x18] sm:$0xff]
        %v477 = vld [vmem:[%s410 + $0x20] sm:$0xff]
        %v478 = vld [vmem:[%s410 + $0x28] sm:$0xff]
        %v479 = vld [vmem:[%s410 + $0x30] sm:$0xff]
        %v480 = vld [vmem:[%s410 + $0x38] sm:$0xff]
        %v481 = vld [vmem:[%s410 + $0x40] sm:$0xff]
        %v482 = vld [vmem:[%s410 + $0x48] sm:$0xff]
        %v483 = vld [vmem:[%s410 + $0x50] sm:$0xff]
        %v484 = vld [vmem:[%s410 + $0x58] sm:$0xff]
        %v485 = vld [vmem:[%s410 + $0x60] sm:$0xff]
        %v486 = vld [vmem:[%s410 + $0x68] sm:$0xff]
        %v487 = vld [vmem:[%s410 + $0x70] sm:$0xff]
        %v488 = vld [vmem:[%s410 + $0x78] sm:$0xff]
        %v489 = vld [vmem:[%s410 + $0x80] sm:$0xff]
        %v490 = vld [vmem:[%s410 + $0x88] sm:$0xff]
        %v491 = vld [vmem:[%s410 + $0x90] sm:$0xff]
        %v492 = vld [vmem:[%s410 + $0x98] sm:$0xff]
        %v493 = vld [vmem:[%s410 + $0xa0] sm:$0xff]
        %v494 = vld [vmem:[%s410 + $0xa8] sm:$0xff]
        %v495 = vld [vmem:[%s410 + $0xb0] sm:$0xff]
        %v496 = vld [vmem:[%s410 + $0xb8] sm:$0xff]
        %v497 = vld [vmem:[%s410 + $0xc0] sm:$0xff]
        %v498 = vld [vmem:[%s410 + $0xc8] sm:$0xff]
        %v499 = vld [vmem:[%s410 + $0xd0] sm:$0xff]
        %v500 = vld [vmem:[%s410 + $0xd8] sm:$0xff]
        %v501 = vld [vmem:[%s410 + $0xe0] sm:$0xff]
        %v502 = vld [vmem:[%s410 + $0xe8] sm:$0xff]
        %v503 = vld [vmem:[%s410 + $0xf0] sm:$0xff]
        %v504 = vld [vmem:[%s410 + $0xf8] sm:$0xff]
        %v509 = vunpack.c.l.b16 %v469
        %v510 = vunpack.c.h.b16 %v469
        %v511 = vunpack.c.l.b16 %v470
        %v512 = vunpack.c.h.b16 %v470
        %v513 = vunpack.c.l.b16 %v471
        %v514 = vunpack.c.h.b16 %v471
        %v515 = vunpack.c.l.b16 %v472
        %v516 = vunpack.c.h.b16 %v472
        %v517 = vpack.c.b16 %v511, %v509
        %v518 = vpack.c.b16 %v512, %v510
        %v519 = vpack.c.b16 %v515, %v513
        %v520 = vpack.c.b16 %v516, %v514
        %v557 = vunpack.c.l.b16 %v473
        %v558 = vunpack.c.h.b16 %v473
        %v559 = vunpack.c.l.b16 %v474
        %v560 = vunpack.c.h.b16 %v474
        %v561 = vunpack.c.l.b16 %v475
        %v562 = vunpack.c.h.b16 %v475
        %v563 = vunpack.c.l.b16 %v476
        %v564 = vunpack.c.h.b16 %v476
        %v565 = vunpack.c.l.b16 %v477
        %v566 = vunpack.c.h.b16 %v477
        %v567 = vunpack.c.l.b16 %v478
        %v568 = vunpack.c.h.b16 %v478
        %v569 = vunpack.c.l.b16 %v479
        %v570 = vunpack.c.h.b16 %v479
        %v571 = vunpack.c.l.b16 %v480
        %v572 = vunpack.c.h.b16 %v480
        %v573 = vunpack.c.l.b16 %v481
        %v574 = vunpack.c.h.b16 %v481
        %v575 = vunpack.c.l.b16 %v482
        %v576 = vunpack.c.h.b16 %v482
        %v577 = vunpack.c.l.b16 %v483
        %v578 = vunpack.c.h.b16 %v483
        %v579 = vunpack.c.l.b16 %v484
        %v580 = vunpack.c.h.b16 %v484
        %v581 = vunpack.c.l.b16 %v485
        %v582 = vunpack.c.h.b16 %v485
        %v583 = vunpack.c.l.b16 %v486
        %v584 = vunpack.c.h.b16 %v486
        %v585 = vunpack.c.l.b16 %v487
        %v586 = vunpack.c.h.b16 %v487
        %v587 = vunpack.c.l.b16 %v488
        %v588 = vunpack.c.h.b16 %v488
        %v589 = vunpack.c.l.b16 %v489
        %v590 = vunpack.c.h.b16 %v489
        %v591 = vunpack.c.l.b16 %v490
        %v592 = vunpack.c.h.b16 %v490
        %v593 = vunpack.c.l.b16 %v491
        %v594 = vunpack.c.h.b16 %v491
        %v595 = vunpack.c.l.b16 %v492
        %v596 = vunpack.c.h.b16 %v492
        %v597 = vunpack.c.l.b16 %v493
        %v598 = vunpack.c.h.b16 %v493
        %v599 = vunpack.c.l.b16 %v494
        %v600 = vunpack.c.h.b16 %v494
        %v601 = vunpack.c.l.b16 %v495
        %v602 = vunpack.c.h.b16 %v495
        %v603 = vunpack.c.l.b16 %v496
        %v604 = vunpack.c.h.b16 %v496
        %v605 = vunpack.c.l.b16 %v497
        %v606 = vunpack.c.h.b16 %v497
        %v607 = vunpack.c.l.b16 %v498
        %v608 = vunpack.c.h.b16 %v498
        %v609 = vunpack.c.l.b16 %v499
        %v610 = vunpack.c.h.b16 %v499
        %v611 = vunpack.c.l.b16 %v500
        %v612 = vunpack.c.h.b16 %v500
        %v613 = vunpack.c.l.b16 %v501
        %v614 = vunpack.c.h.b16 %v501
        %v615 = vunpack.c.l.b16 %v502
        %v616 = vunpack.c.h.b16 %v502
        %v617 = vunpack.c.l.b16 %v503
        %v618 = vunpack.c.h.b16 %v503
        %v619 = vunpack.c.l.b16 %v504
        %v620 = vunpack.c.h.b16 %v504
        %v621 = vpack.c.b16 %v559, %v557
        %v622 = vpack.c.b16 %v560, %v558
        %v623 = vpack.c.b16 %v563, %v561
        %v624 = vpack.c.b16 %v564, %v562
        %v625 = vpack.c.b16 %v567, %v565
        %v626 = vpack.c.b16 %v568, %v566
        %v627 = vpack.c.b16 %v571, %v569
        %v628 = vpack.c.b16 %v572, %v570
        %v629 = vpack.c.b16 %v575, %v573
        %v630 = vpack.c.b16 %v576, %v574
        %v631 = vpack.c.b16 %v579, %v577
        %v632 = vpack.c.b16 %v580, %v578
        %v633 = vpack.c.b16 %v583, %v581
        %v634 = vpack.c.b16 %v584, %v582
        %v635 = vpack.c.b16 %v587, %v585
        %v636 = vpack.c.b16 %v588, %v586
        %v637 = vpack.c.b16 %v591, %v589
        %v638 = vpack.c.b16 %v592, %v590
        %v639 = vpack.c.b16 %v595, %v593
        %v640 = vpack.c.b16 %v596, %v594
        %v641 = vpack.c.b16 %v599, %v597
        %v642 = vpack.c.b16 %v600, %v598
        %v643 = vpack.c.b16 %v603, %v601
        %v644 = vpack.c.b16 %v604, %v602
        %v645 = vpack.c.b16 %v607, %v605
        %v646 = vpack.c.b16 %v608, %v606
        %v647 = vpack.c.b16 %v611, %v609
        %v648 = vpack.c.b16 %v612, %v610
        %v649 = vpack.c.b16 %v615, %v613
        %v650 = vpack.c.b16 %v616, %v614
        %v651 = vpack.c.b16 %v619, %v617
        %v652 = vpack.c.b16 %v620, %v618
        %685 = vmatprep.subr.bf16.mxu0 %v636
        %686 = vmatpush1.bf16.msra.mxu0 %v635
        %687 = vmatprep.subr.bf16.mxu0 %v634
        %688 = vmatpush1.bf16.msra.mxu0 %v633
        %689 = vmatprep.subr.bf16.mxu0 %v632
        %690 = vmatpush1.bf16.msra.mxu0 %v631
        %691 = vmatprep.subr.bf16.mxu0 %v630
        %692 = vmatpush1.bf16.msra.mxu0 %v629
        %693 = vmatprep.subr.bf16.mxu0 %v628
        %694 = vmatpush1.bf16.msra.mxu0 %v627
        %695 = vmatprep.subr.bf16.mxu0 %v626
        %696 = vmatpush1.bf16.msra.mxu0 %v625
        %697 = vmatprep.subr.bf16.mxu0 %v624
        %698 = vmatpush1.bf16.msra.mxu0 %v623
        %699 = vmatprep.subr.bf16.mxu0 %v622
        %700 = vmatpush1.bf16.msra.mxu0 %v621
        %701 = vmatprep.subr.bf16.mxu0 %v652
        %702 = vmatpush2.bf16.msra.mxu0 %v651
        %703 = vmatprep.subr.bf16.mxu0 %v650
        %704 = vmatpush2.bf16.msra.mxu0 %v649
        %705 = vmatprep.subr.bf16.mxu0 %v648
        %706 = vmatpush2.bf16.msra.mxu0 %v647
        %707 = vmatprep.subr.bf16.mxu0 %v646
        %708 = vmatpush2.bf16.msra.mxu0 %v645
        %709 = vmatprep.subr.bf16.mxu0 %v644
        %710 = vmatpush2.bf16.msra.mxu0 %v643
        %711 = vmatprep.subr.bf16.mxu0 %v642
        %712 = vmatpush2.bf16.msra.mxu0 %v641
        %713 = vmatprep.subr.bf16.mxu0 %v640
        %714 = vmatpush2.bf16.msra.mxu0 %v639
        %715 = vmatprep.subr.bf16.mxu0 %v638
        %716 = vmatpush2.bf16.msra.mxu0 %v637
        %717 = vmatprep.mubr.bf16.mxu0 %v518
        %718 = vmatmul.mubr.bf16.gmra.mxu0 %v517
        %v719 = vpop.f32.mrf.mxu0
        %v720 = vadd.f32 0.0, %v719
        %v721 = vpop.f32.mrf.mxu0
        %v722 = vadd.f32 0.0, %v721
        %v723 = vpop.f32.mrf.mxu0
        %v724 = vadd.f32 0.0, %v723
        %v725 = vpop.f32.mrf.mxu0
        %v726 = vadd.f32 0.0, %v725
        %727 = vmatprep.mubr.bf16.mxu0 %v520
        %728 = vmatmul.mubr.bf16.gmra.mxu0 %v519
        %v729 = vpop.f32.mrf.mxu0
        %v730 = vadd.f32 0.0, %v729
        %v731 = vpop.f32.mrf.mxu0
        %v732 = vadd.f32 0.0, %v731
        %v733 = vpop.f32.mrf.mxu0
        %v734 = vadd.f32 0.0, %v733
        %v735 = vpop.f32.mrf.mxu0
        %v736 = vadd.f32 0.0, %v735
        %737 = vdwg.mxu0
        %v738 = vadd.f32 %v461, %v720
        %v739 = vadd.f32 %v462, %v722
        %v740 = vadd.f32 %v463, %v724
        %v741 = vadd.f32 %v464, %v726
        %v742 = vadd.f32 %v465, %v730
        %v743 = vadd.f32 %v466, %v732
        %v744 = vadd.f32 %v467, %v734
        %v745 = vadd.f32 %v468, %v736
        %746 = vst [vmem:[#allocation2] sm:$0xff] %v738
        %747 = vst [vmem:[#allocation2 + $0x8] sm:$0xff] %v739
        %748 = vst [vmem:[#allocation2 + $0x10] sm:$0xff] %v740
        %749 = vst [vmem:[#allocation2 + $0x18] sm:$0xff] %v741
        %750 = vst [vmem:[#allocation2 + $0x20] sm:$0xff] %v742
        %751 = vst [vmem:[#allocation2 + $0x28] sm:$0xff] %v743
        %752 = vst [vmem:[#allocation2 + $0x30] sm:$0xff] %v744
        %753 = vst [vmem:[#allocation2 + $0x38] sm:$0xff] %v745
        %p754 = scmp.eq.s32.totalorder %s21, 4
        // Predicated region
        $region113: #{music_transcription_forward.4} parent=99 // pred_check
          %p755 = pneg %p754
        $region114: #{music_transcription_forward.4} parent=99 // pred_check_branch
          %757 = sbr.rel (%p755) target = $region116
        $region115: #{music_transcription_forward.4} parent=99 // pred_region
          %v758 = vld [vmem:[#allocation2] sm:$0xff]
          %v759 = vld [vmem:[#allocation2 + $0x8] sm:$0xff]
          %v760 = vld [vmem:[#allocation2 + $0x10] sm:$0xff]
          %v761 = vld [vmem:[#allocation2 + $0x18] sm:$0xff]
          %v762 = vld [vmem:[#allocation2 + $0x20] sm:$0xff]
          %v763 = vld [vmem:[#allocation2 + $0x28] sm:$0xff]
          %v764 = vld [vmem:[#allocation2 + $0x30] sm:$0xff]
          %v765 = vld [vmem:[#allocation2 + $0x38] sm:$0xff]
          %v766 = vld [vmem:[%s445] sm:$0x3]
          %v768 = vlaneseq
          %v769 = vshrl.u32 %v768, 7
          %v770 = vsub.s32 0, %v769
          %v771 = vrot.slane %v766, %v770
          %v772 = vlaneseq
          %v773 = vshrl.u32 %v772, 7
          %v774 = vsub.s32 1, %v773
          %v775 = vrot.slane %v766, %v774
          %v778 = vadd.f32 %v758, %v771
          %v779 = vadd.f32 %v759, %v775
          %v780 = vadd.f32 %v760, %v771
          %v781 = vadd.f32 %v761, %v775
          %v782 = vadd.f32 %v762, %v771
          %v783 = vadd.f32 %v763, %v775
          %v784 = vadd.f32 %v764, %v771
          %v785 = vadd.f32 %v765, %v775
          %786 = vst [vmem:[%s437] sm:$0xff] %v778
          %787 = vst [vmem:[%s437 + $0x8] sm:$0xff] %v779
          %788 = vst [vmem:[%s437 + $0x10] sm:$0xff] %v780
          %789 = vst [vmem:[%s437 + $0x18] sm:$0xff] %v781
          %790 = vst [vmem:[%s437 + $0x20] sm:$0xff] %v782
          %791 = vst [vmem:[%s437 + $0x28] sm:$0xff] %v783
          %792 = vst [vmem:[%s437 + $0x30] sm:$0xff] %v784
          %793 = vst [vmem:[%s437 + $0x38] sm:$0xff] %v785
        $region116: #{music_transcription_forward.4} parent=99 // pred_fallthru
          _
        %s794 = sand.u32 %s125, 1
        %s795 = sand.u32 %s125, 1
        %s796 = smul.addr %s795, 64
        %s797 = scalar_lea.vmem [#allocation5], %s796
        // Predicated region
        $region117: #{music_transcription_forward.4} parent=99 // pred_check
          %p798 = pneg %p135
        $region118: #{music_transcription_forward.4} parent=99 // pred_check_branch
          %800 = sbr.rel (%p798) target = $region120
        $region119: #{music_transcription_forward.4} parent=99 // pred_region
          %s801 = smul.u32 4, %s19
          %s802 = smul.u32 2, %s20
          %s803 = smul.addr %s801, 8
          %s804 = sadd.s32 %s802, %s803
          %s805 = smul.addr %s804, 8
          %s806 = scalar_lea.vmem %s3, %s805
          // Predicated region
          $region121: #{music_transcription_forward.4} parent=119 // pred_check
            _
          $region122: #{music_transcription_forward.4} parent=119 // pred_check_branch
            %808 = sbr.rel (0) target = $region124
          $region123: #{music_transcription_forward.4} parent=119 // pred_region
            // Predicated region
            $region125: #{music_transcription_forward.4} parent=123 // pred_check
              _
            $region126: #{music_transcription_forward.4} parent=123 // pred_check_branch
              %810 = sbr.rel (0) target = $region128
            $region127: #{music_transcription_forward.4} parent=123 // pred_region
              loop: start=0, step=1, limit=1
              $region129: #{music_transcription_forward.4} parent=127 // loop_pre_header
                _
              $region130: #{music_transcription_forward.4} parent=127 // loop_header
                %s812 = sphi 0, %s816
                %p813 = scmp.ge.s32.totalorder %s812, 1
                %s817 = sphi %s797, %s797
                %s818 = sphi %s806, %s806
              $region131: #{music_transcription_forward.4} parent=127 // loop_header_branch
                %815 = sbr.rel (%p813) target = $region135
              $region132: #{music_transcription_forward.4} parent=127 // loop_body
                %v819 = vld [vmem:[%s817] sm:$0xff]
                %820 = vst [vmem:[%s818] sm:$0xff] %v819
                %v821 = vld [vmem:[%s817 + $0x8] sm:$0xff]
                %822 = vst [vmem:[%s818 + $0x8] sm:$0xff] %v821
                %v823 = vld [vmem:[%s817 + $0x10] sm:$0xff]
                %824 = vst [vmem:[%s818 + $0x40] sm:$0xff] %v823
                %v825 = vld [vmem:[%s817 + $0x18] sm:$0xff]
                %826 = vst [vmem:[%s818 + $0x48] sm:$0xff] %v825
                %v827 = vld [vmem:[%s817 + $0x20] sm:$0xff]
                %828 = vst [vmem:[%s818 + $0x80] sm:$0xff] %v827
                %v829 = vld [vmem:[%s817 + $0x28] sm:$0xff]
                %830 = vst [vmem:[%s818 + $0x88] sm:$0xff] %v829
                %v831 = vld [vmem:[%s817 + $0x30] sm:$0xff]
                %832 = vst [vmem:[%s818 + $0xc0] sm:$0xff] %v831
                %v833 = vld [vmem:[%s817 + $0x38] sm:$0xff]
                %834 = vst [vmem:[%s818 + $0xc8] sm:$0xff] %v833
              $region133: #{music_transcription_forward.4} parent=127 // loop_footer
                %s816 = sadd.s32 1, %s812
              $region134: #{music_transcription_forward.4} parent=127 // loop_footer_branch
                %811 = sbr.rel target = $region130
              $region135: #{music_transcription_forward.4} parent=127 // loop_exit
                _
            $region128: #{music_transcription_forward.4} parent=123 // pred_fallthru
              _
            // Predicated region
            $region136: #{music_transcription_forward.4} parent=123 // pred_check
              _
            $region137: #{music_transcription_forward.4} parent=123 // pred_check_branch
              %836 = sbr.rel target = $region139
            $region138: #{music_transcription_forward.4} parent=123 // pred_region
              _
            $region139: #{music_transcription_forward.4} parent=123 // pred_fallthru
              _
          $region124: #{music_transcription_forward.4} parent=119 // pred_fallthru
            _
          %837 = vnop
        $region120: #{music_transcription_forward.4} parent=99 // pred_fallthru
          _
      $region100: #{music_transcription_forward.4} parent=5 // pred_fallthru
        _
      %p838 = scmp.le.s32.totalorder 2, %s9
      // Predicated region
      $region140: #{music_transcription_forward.4} parent=5 // pred_check
        %p839 = pneg %p838
      $region141: #{music_transcription_forward.4} parent=5 // pred_check_branch
        %841 = sbr.rel (%p839) target = $region143
      $region142: #{music_transcription_forward.4} parent=5 // pred_region
        %s842 = ssub.s32 %s9, 2
        // Predicated region
        $region144: #{music_transcription_forward.4} parent=142 // pred_check
          %p843 = pneg %p141
        $region145: #{music_transcription_forward.4} parent=142 // pred_check_branch
          %845 = sbr.rel (%p843) target = $region147
        $region146: #{music_transcription_forward.4} parent=142 // pred_region
          %s846 = sand.u32 %s126, 1
          %s847 = sand.u32 %s126, 1
          %s848 = smul.addr %s847, 64
          %s849 = scalar_lea.vmem [#allocation5], %s848
        $region147: #{music_transcription_forward.4} parent=142 // pred_fallthru
          _
      $region143: #{music_transcription_forward.4} parent=5 // pred_fallthru
        _
    $region6: #{music_transcription_forward.4} parent=1 // loop_footer
      %s13 = sadd.s32 1, %s9
    $region7: #{music_transcription_forward.4} parent=1 // loop_footer_branch
      %8 = sbr.rel target = $region3
    $region8: #{music_transcription_forward.4} parent=1 // loop_exit
      _

// kernel: music_transcription_forward.5
$region0: #{music_transcription_forward.5}
  #allocation0 [shape = 'u32[]', space=smem, size = 0x4, offset = 0x4, fixed_abs, tag = 'smem constant byte address 0x4 - core index']
  #allocation1 [shape = 'u32[144,128]{1,0:T(1,128)}', space=vmem, size = 0x12000, scoped, tag = 'internal scratch']
  #allocation2 [shape = 'f32[2,256]{1,0:T(2,128)}', space=vmem, size = 0x800, scoped, tag = 'scratch operand']
  #allocation3 [shape = 'f32[2,256]{1,0:T(2,128)}', space=vmem, size = 0x800, scoped, tag = 'scratch operand']
  #allocation4 [shape = 'f32[2,128]{1,0:T(2,128)}', space=vmem, size = 0x400, scoped, tag = 'scratch operand']
  #allocation5 [shape = 'f32[2,128]{1,0:T(2,128)}', space=vmem, size = 0x400, scoped, tag = 'scratch operand']
  %s0 = inlined_call_operand.vmem [shape: f32[16,2,1024], index: 0, kind: input, shape index: {}]
  %s1 = inlined_call_operand.vmem [shape: bf16[256,1024], index: 1, kind: input, shape index: {}]
  %s2 = inlined_call_operand.vmem [shape: bf16[256,512], index: 2, kind: input, shape index: {}]
  %s3 = inlined_call_operand.vmem [shape: bf16[128,512], index: 3, kind: input, shape index: {}]
  %s4 = inlined_call_operand.vmem [shape: f32[1,512], index: 4, kind: input, shape index: {}]
  %s5 = inlined_call_operand.vmem [shape: bf16[128,128], index: 5, kind: input, shape index: {}]
  %s6 = inlined_call_operand.vmem [shape: f32[1,128], index: 6, kind: input, shape index: {}]
  %s7 = inlined_call_operand.vmem [shape: f32[16,2,128], index: 7, kind: output, shape index: {}]
  %s8 = sld [smem:[#allocation0]]
  $region65: #{music_transcription_forward.5} parent=0
    _
  %s10 = ssub.s32 1, %s8
  %s11 = scalar_select 0, %s10, %s8
  loop: start=0, step=1, limit=18
  $region2: #{music_transcription_forward.5} parent=0 // loop_pre_header
    _
  $region3: #{music_transcription_forward.5} parent=0 // loop_header
    %s13 = sphi 0, %s17
    %p14 = scmp.ge.s32.totalorder %s13, 18
    %s21 = sphi 0, %s21
    %s23 = sphi 0, %s21
    %s24 = sphi 0, %s23
    %s38 = sphi 0, %s24
    %s42 = sphi 0, %s42
    %s44 = sphi 0, %s42
    %s45 = sphi 0, %s44
    %s59 = sphi 0, %s45
    %s63 = sphi 0, %s63
    %s65 = sphi 0, %s63
    %s66 = sphi 0, %s65
    %s80 = sphi 0, %s66
    %s84 = sphi 0, %s84
    %s86 = sphi 0, %s84
    %s87 = sphi 0, %s86
    %s101 = sphi 0, %s87
    %s105 = sphi 0, %s105
    %s107 = sphi 0, %s105
    %s108 = sphi 0, %s107
    %s122 = sphi 0, %s108
    %s126 = sphi 0, %s126
    %s128 = sphi 0, %s126
    %s129 = sphi 0, %s128
    %s143 = sphi 0, %s129
    %s147 = sphi 0, %s147
    %s149 = sphi 0, %s147
    %s150 = sphi 0, %s149
    %s164 = sphi 0, %s150
    %s170 = sphi 0, %s172
    %s173 = sphi 0, %s170
    %s174 = sphi 0, %s173
    %s190 = sphi 0, %s174
  $region4: #{music_transcription_forward.5} parent=0 // loop_header_branch
    %16 = sbr.rel (%p14) target = $region8
  $region5: #{music_transcription_forward.5} parent=0 // loop_body
    %s18 = ssub.s32 %s13, 1
    %s19 = ssub.s32 %s13, 2
    %s20 = sadd.s32 %s13, 1
    %s22 = sadd.s32 %s21, 1
    %p25 = scmp.eq.s32.totalorder %s13, 15
    %p26 = scmp.ne.s32.totalorder %s21, %s23
    %p27 = scmp.eq.s32.totalorder %s13, 0
    %p28 = por %p26, %p27
    %p29 = scmp.ne.s32.totalorder %s21, %s23
    %p30 = scmp.eq.s32.totalorder %s18, 15
    %p31 = por %p29, %p30
    %p32 = scmp.ne.s32.totalorder %s23, %s24
    %p33 = scmp.eq.s32.totalorder %s18, 0
    %p34 = por %p32, %p33
    %p35 = scmp.ne.s32.totalorder %s23, %s24
    %p36 = scmp.eq.s32.totalorder %s19, 15
    %p37 = por %p35, %p36
    %p39 = scmp.ne.s32.totalorder %s24, %s38
    %p40 = scmp.eq.s32.totalorder %s19, 0
    %p41 = por %p39, %p40
    %s43 = sadd.s32 %s42, 1
    %p46 = scmp.eq.s32.totalorder %s13, 15
    %p47 = scmp.ne.s32.totalorder %s42, %s44
    %p48 = scmp.eq.s32.totalorder %s13, 0
    %p49 = por %p47, %p48
    %p50 = scmp.ne.s32.totalorder %s42, %s44
    %p51 = scmp.eq.s32.totalorder %s18, 15
    %p52 = por %p50, %p51
    %p53 = scmp.ne.s32.totalorder %s44, %s45
    %p54 = scmp.eq.s32.totalorder %s18, 0
    %p55 = por %p53, %p54
    %p56 = scmp.ne.s32.totalorder %s44, %s45
    %p57 = scmp.eq.s32.totalorder %s19, 15
    %p58 = por %p56, %p57
    %p60 = scmp.ne.s32.totalorder %s45, %s59
    %p61 = scmp.eq.s32.totalorder %s19, 0
    %p62 = por %p60, %p61
    %s64 = sadd.s32 %s63, 1
    %p67 = scmp.eq.s32.totalorder %s13, 15
    %p68 = scmp.ne.s32.totalorder %s63, %s65
    %p69 = scmp.eq.s32.totalorder %s13, 0
    %p70 = por %p68, %p69
    %p71 = scmp.ne.s32.totalorder %s63, %s65
    %p72 = scmp.eq.s32.totalorder %s18, 15
    %p73 = por %p71, %p72
    %p74 = scmp.ne.s32.totalorder %s65, %s66
    %p75 = scmp.eq.s32.totalorder %s18, 0
    %p76 = por %p74, %p75
    %p77 = scmp.ne.s32.totalorder %s65, %s66
    %p78 = scmp.eq.s32.totalorder %s19, 15
    %p79 = por %p77, %p78
    %p81 = scmp.ne.s32.totalorder %s66, %s80
    %p82 = scmp.eq.s32.totalorder %s19, 0
    %p83 = por %p81, %p82
    %s85 = sadd.s32 %s84, 1
    %p88 = scmp.eq.s32.totalorder %s13, 15
    %p89 = scmp.ne.s32.totalorder %s84, %s86
    %p90 = scmp.eq.s32.totalorder %s13, 0
    %p91 = por %p89, %p90
    %p92 = scmp.ne.s32.totalorder %s84, %s86
    %p93 = scmp.eq.s32.totalorder %s18, 15
    %p94 = por %p92, %p93
    %p95 = scmp.ne.s32.totalorder %s86, %s87
    %p96 = scmp.eq.s32.totalorder %s18, 0
    %p97 = por %p95, %p96
    %p98 = scmp.ne.s32.totalorder %s86, %s87
    %p99 = scmp.eq.s32.totalorder %s19, 15
    %p100 = por %p98, %p99
    %p102 = scmp.ne.s32.totalorder %s87, %s101
    %p103 = scmp.eq.s32.totalorder %s19, 0
    %p104 = por %p102, %p103
    %s106 = sadd.s32 %s105, 1
    %p109 = scmp.eq.s32.totalorder %s13, 15
    %p110 = scmp.ne.s32.totalorder %s105, %s107
    %p111 = scmp.eq.s32.totalorder %s13, 0
    %p112 = por %p110, %p111
    %p113 = scmp.ne.s32.totalorder %s105, %s107
    %p114 = scmp.eq.s32.totalorder %s18, 15
    %p115 = por %p113, %p114
    %p116 = scmp.ne.s32.totalorder %s107, %s108
    %p117 = scmp.eq.s32.totalorder %s18, 0
    %p118 = por %p116, %p117
    %p119 = scmp.ne.s32.totalorder %s107, %s108
    %p120 = scmp.eq.s32.totalorder %s19, 15
    %p121 = por %p119, %p120
    %p123 = scmp.ne.s32.totalorder %s108, %s122
    %p124 = scmp.eq.s32.totalorder %s19, 0
    %p125 = por %p123, %p124
    %s127 = sadd.s32 %s126, 1
    %p130 = scmp.eq.s32.totalorder %s13, 15
    %p131 = scmp.ne.s32.totalorder %s126, %s128
    %p132 = scmp.eq.s32.totalorder %s13, 0
    %p133 = por %p131, %p132
    %p134 = scmp.ne.s32.totalorder %s126, %s128
    %p135 = scmp.eq.s32.totalorder %s18, 15
    %p136 = por %p134, %p135
    %p137 = scmp.ne.s32.totalorder %s128, %s129
    %p138 = scmp.eq.s32.totalorder %s18, 0
    %p139 = por %p137, %p138
    %p140 = scmp.ne.s32.totalorder %s128, %s129
    %p141 = scmp.eq.s32.totalorder %s19, 15
    %p142 = por %p140, %p141
    %p144 = scmp.ne.s32.totalorder %s129, %s143
    %p145 = scmp.eq.s32.totalorder %s19, 0
    %p146 = por %p144, %p145
    %s148 = sadd.s32 %s147, 1
    %p151 = scmp.eq.s32.totalorder %s13, 15
    %p152 = scmp.ne.s32.totalorder %s147, %s149
    %p153 = scmp.eq.s32.totalorder %s13, 0
    %p154 = por %p152, %p153
    %p155 = scmp.ne.s32.totalorder %s147, %s149
    %p156 = scmp.eq.s32.totalorder %s18, 15
    %p157 = por %p155, %p156
    %p158 = scmp.ne.s32.totalorder %s149, %s150
    %p159 = scmp.eq.s32.totalorder %s18, 0
    %p160 = por %p158, %p159
    %p161 = scmp.ne.s32.totalorder %s149, %s150
    %p162 = scmp.eq.s32.totalorder %s19, 15
    %p163 = por %p161, %p162
    %p165 = scmp.ne.s32.totalorder %s150, %s164
    %p166 = scmp.eq.s32.totalorder %s19, 0
    %p167 = por %p165, %p166
    %s168 = ssub.s32 %s13, %s20
    %p169 = scmp.eq.s32.totalorder %s168, 0
    %s171 = sadd.s32 %s170, 1
    %s172 = scalar_select %p169, %s170, %s171
    %p175 = pneg %p169
    %p176 = scmp.eq.s32.totalorder %s13, 15
    %p177 = por %p175, %p176
    %p178 = scmp.ne.s32.totalorder %s170, %s173
    %p179 = scmp.eq.s32.totalorder %s13, 0
    %p180 = por %p178, %p179
    %p181 = scmp.ne.s32.totalorder %s170, %s173
    %p182 = scmp.eq.s32.totalorder %s18, 15
    %p183 = por %p181, %p182
    %p184 = scmp.ne.s32.totalorder %s173, %s174
    %p185 = scmp.eq.s32.totalorder %s18, 0
    %p186 = por %p184, %p185
    %p187 = scmp.ne.s32.totalorder %s173, %s174
    %p188 = scmp.eq.s32.totalorder %s19, 15
    %p189 = por %p187, %p188
    %p191 = scmp.ne.s32.totalorder %s174, %s190
    %p192 = scmp.eq.s32.totalorder %s19, 0
    %p193 = por %p191, %p192
    %p194 = scmp.le.s32.totalorder 1, %s13
    %p195 = scmp.lt.s32.totalorder %s13, 17
    %p196 = pnand %p194, %p195
    %p197 = pneg %p196
    // Predicated region
    $region9: #{music_transcription_forward.5} parent=5 // pred_check
      _
    $region10: #{music_transcription_forward.5} parent=5 // pred_check_branch
      %199 = sbr.rel (%p196) target = $region12
    $region11: #{music_transcription_forward.5} parent=5 // pred_region
      %s200 = ssub.s32 %s13, 1
      // Predicated region
      $region13: #{music_transcription_forward.5} parent=11 // pred_check
        %p201 = pneg %p34
      $region14: #{music_transcription_forward.5} parent=11 // pred_check_branch
        %203 = sbr.rel (%p201) target = $region16
      $region15: #{music_transcription_forward.5} parent=11 // pred_region
        _
      $region16: #{music_transcription_forward.5} parent=11 // pred_fallthru
        _
      // Predicated region
      $region17: #{music_transcription_forward.5} parent=11 // pred_check
        %p204 = pneg %p55
      $region18: #{music_transcription_forward.5} parent=11 // pred_check_branch
        %206 = sbr.rel (%p204) target = $region20
      $region19: #{music_transcription_forward.5} parent=11 // pred_region
        _
      $region20: #{music_transcription_forward.5} parent=11 // pred_fallthru
        _
      // Predicated region
      $region21: #{music_transcription_forward.5} parent=11 // pred_check
        %p207 = pneg %p76
      $region22: #{music_transcription_forward.5} parent=11 // pred_check_branch
        %209 = sbr.rel (%p207) target = $region24
      $region23: #{music_transcription_forward.5} parent=11 // pred_region
        _
      $region24: #{music_transcription_forward.5} parent=11 // pred_fallthru
        _
      // Predicated region
      $region25: #{music_transcription_forward.5} parent=11 // pred_check
        %p210 = pneg %p97
      $region26: #{music_transcription_forward.5} parent=11 // pred_check_branch
        %212 = sbr.rel (%p210) target = $region28
      $region27: #{music_transcription_forward.5} parent=11 // pred_region
        _
      $region28: #{music_transcription_forward.5} parent=11 // pred_fallthru
        _
      // Predicated region
      $region29: #{music_transcription_forward.5} parent=11 // pred_check
        %p213 = pneg %p118
      $region30: #{music_transcription_forward.5} parent=11 // pred_check_branch
        %215 = sbr.rel (%p213) target = $region32
      $region31: #{music_transcription_forward.5} parent=11 // pred_region
        _
      $region32: #{music_transcription_forward.5} parent=11 // pred_fallthru
        _
      // Predicated region
      $region33: #{music_transcription_forward.5} parent=11 // pred_check
        %p216 = pneg %p139
      $region34: #{music_transcription_forward.5} parent=11 // pred_check_branch
        %218 = sbr.rel (%p216) target = $region36
      $region35: #{music_transcription_forward.5} parent=11 // pred_region
        _
      $region36: #{music_transcription_forward.5} parent=11 // pred_fallthru
        _
      // Predicated region
      $region37: #{music_transcription_forward.5} parent=11 // pred_check
        %p219 = pneg %p160
      $region38: #{music_transcription_forward.5} parent=11 // pred_check_branch
        %221 = sbr.rel (%p219) target = $region40
      $region39: #{music_transcription_forward.5} parent=11 // pred_region
        _
      $region40: #{music_transcription_forward.5} parent=11 // pred_fallthru
        _
    $region12: #{music_transcription_forward.5} parent=5 // pred_fallthru
      _
    %p222 = scmp.lt.s32.totalorder %s13, 16
    // Predicated region
    $region41: #{music_transcription_forward.5} parent=5 // pred_check
      %p223 = pneg %p222
    $region42: #{music_transcription_forward.5} parent=5 // pred_check_branch
      %225 = sbr.rel (%p223) target = $region44
    $region43: #{music_transcription_forward.5} parent=5 // pred_region
      _
    $region44: #{music_transcription_forward.5} parent=5 // pred_fallthru
      _
    %p226 = scmp.le.s32.totalorder 1, %s13
    %p227 = scmp.lt.s32.totalorder %s13, 17
    %p228 = pnand %p226, %p227
    %p229 = pneg %p228
    // Predicated region
    $region45: #{music_transcription_forward.5} parent=5 // pred_check
      _
    $region46: #{music_transcription_forward.5} parent=5 // pred_check_branch
      %231 = sbr.rel (%p228) target = $region48
    $region47: #{music_transcription_forward.5} parent=5 // pred_region
      %s232 = ssub.s32 %s13, 1
      %p233 = pneg %p34
      %p234 = pneg %p31
      %p235 = pneg %p55
      %p236 = pneg %p52
      %p237 = pneg %p76
      %p238 = pneg %p73
      %p239 = pneg %p97
      %p240 = pneg %p94
      %p241 = pneg %p118
      %p242 = pneg %p115
      %p243 = pneg %p139
      %p244 = pneg %p136
      %p245 = pneg %p160
      %p246 = pneg %p157
      %p247 = pneg %p186
      %p248 = pneg %p183
      %p249 = scmp.lt.s32.totalorder %s18, 15
      %s250 = scalar_select %p249, %s18, 15
      %s251 = smul.addr %s250, 2
      %s252 = scalar_lea.vmem %s7, %s251
      %p253 = scmp.lt.s32.totalorder %s18, 15
      %s254 = scalar_select %p253, %s18, 15
      %s255 = smul.addr %s254, 2
      %s256 = scalar_lea.vmem %s7, %s255
      %p258 = scmp.eq.s32.totalorder %s18, 0
      // Predicated region
      $region49: #{music_transcription_forward.5} parent=47 // pred_check
        %p259 = pneg %p258
      $region50: #{music_transcription_forward.5} parent=47 // pred_check_branch
        %261 = sbr.rel (%p259) target = $region52
      $region51: #{music_transcription_forward.5} parent=47 // pred_region
        %262 = vst [vmem:[#allocation2] sm:$0xf] 0.0
        %263 = vst [vmem:[#allocation3] sm:$0xf] 0.0
        %264 = vst [vmem:[#allocation4] sm:$0x3] 0.0
        %265 = vst [vmem:[#allocation5] sm:$0x3] 0.0
      $region52: #{music_transcription_forward.5} parent=47 // pred_fallthru
        _
      %s266 = smul.u32 %s18, 8
      %s267 = smul.addr %s266, 2
      %s268 = scalar_lea.vmem %s0, %s267
      %v269 = vld [vmem:[%s268] sm:$0xff]
      %v270 = vld [vmem:[%s268 + $0x8] sm:$0xff]
      %v271 = vld [vmem:[#allocation2] sm:$0xf]
      %v274 = vunpack.c.l.s4 1983009808
      %v275 = vunpack.c.0.s8 %v274
      %v276 = vlaneseq
      %v277 = vshrl.u32 %v276, 7
      %v278 = vsub.s32 %v275, %v277
      %v279 = vrot.slane %v271, %v278
      %v280 = vcombine.high %v279, %v279
      %v283 = vpack.c.bf16 %v279, %v279
      %v284 = vpack.c.bf16 %v280, %v280
      %v285 = vld [vmem:[%s1] sm:$0xff]
      %v286 = vld [vmem:[%s1 + $0x8] sm:$0xff]
      %v287 = vld [vmem:[%s1 + $0x10] sm:$0xff]
      %v288 = vld [vmem:[%s1 + $0x18] sm:$0xff]
      %v289 = vld [vmem:[%s1 + $0x20] sm:$0xff]
      %v290 = vld [vmem:[%s1 + $0x28] sm:$0xff]
      %v291 = vld [vmem:[%s1 + $0x30] sm:$0xff]
      %v292 = vld [vmem:[%s1 + $0x38] sm:$0xff]
      %v293 = vld [vmem:[%s1 + $0x40] sm:$0xff]
      %v294 = vld [vmem:[%s1 + $0x48] sm:$0xff]
      %v295 = vld [vmem:[%s1 + $0x50] sm:$0xff]
      %v296 = vld [vmem:[%s1 + $0x58] sm:$0xff]
      %v297 = vld [vmem:[%s1 + $0x60] sm:$0xff]
      %v298 = vld [vmem:[%s1 + $0x68] sm:$0xff]
      %v299 = vld [vmem:[%s1 + $0x70] sm:$0xff]
      %v300 = vld [vmem:[%s1 + $0x78] sm:$0xff]
      %v301 = vld [vmem:[%s1 + $0x80] sm:$0xff]
      %v302 = vld [vmem:[%s1 + $0x88] sm:$0xff]
      %v303 = vld [vmem:[%s1 + $0x90] sm:$0xff]
      %v304 = vld [vmem:[%s1 + $0x98] sm:$0xff]
      %v305 = vld [vmem:[%s1 + $0xa0] sm:$0xff]
      %v306 = vld [vmem:[%s1 + $0xa8] sm:$0xff]
      %v307 = vld [vmem:[%s1 + $0xb0] sm:$0xff]
      %v308 = vld [vmem:[%s1 + $0xb8] sm:$0xff]
      %v309 = vld [vmem:[%s1 + $0xc0] sm:$0xff]
      %v310 = vld [vmem:[%s1 + $0xc8] sm:$0xff]
      %v311 = vld [vmem:[%s1 + $0xd0] sm:$0xff]
      %v312 = vld [vmem:[%s1 + $0xd8] sm:$0xff]
      %v313 = vld [vmem:[%s1 + $0xe0] sm:$0xff]
      %v314 = vld [vmem:[%s1 + $0xe8] sm:$0xff]
      %v315 = vld [vmem:[%s1 + $0xf0] sm:$0xff]
      %v316 = vld [vmem:[%s1 + $0xf8] sm:$0xff]
      %v317 = vld [vmem:[%s1 + $0x100] sm:$0xff]
      %v318 = vld [vmem:[%s1 + $0x108] sm:$0xff]
      %v319 = vld [vmem:[%s1 + $0x110] sm:$0xff]
      %v320 = vld [vmem:[%s1 + $0x118] sm:$0xff]
      %v321 = vld [vmem:[%s1 + $0x120] sm:$0xff]
      %v322 = vld [vmem:[%s1 + $0x128] sm:$0xff]
      %v323 = vld [vmem:[%s1 + $0x130] sm:$0xff]
      %v324 = vld [vmem:[%s1 + $0x138] sm:$0xff]
      %v325 = vld [vmem:[%s1 + $0x140] sm:$0xff]
      %v326 = vld [vmem:[%s1 + $0x148] sm:$0xff]
      %v327 = vld [vmem:[%s1 + $0x150] sm:$0xff]
      %v328 = vld [vmem:[%s1 + $0x158] sm:$0xff]
      %v329 = vld [vmem:[%s1 + $0x160] sm:$0xff]
      %v330 = vld [vmem:[%s1 + $0x168] sm:$0xff]
      %v331 = vld [vmem:[%s1 + $0x170] sm:$0xff]
      %v332 = vld [vmem:[%s1 + $0x178] sm:$0xff]
      %v333 = vld [vmem:[%s1 + $0x180] sm:$0xff]
      %v334 = vld [vmem:[%s1 + $0x188] sm:$0xff]
      %v335 = vld [vmem:[%s1 + $0x190] sm:$0xff]
      %v336 = vld [vmem:[%s1 + $0x198] sm:$0xff]
      %v337 = vld [vmem:[%s1 + $0x1a0] sm:$0xff]
      %v338 = vld [vmem:[%s1 + $0x1a8] sm:$0xff]
      %v339 = vld [vmem:[%s1 + $0x1b0] sm:$0xff]
      %v340 = vld [vmem:[%s1 + $0x1b8] sm:$0xff]
      %v341 = vld [vmem:[%s1 + $0x1c0] sm:$0xff]
      %v342 = vld [vmem:[%s1 + $0x1c8] sm:$0xff]
      %v343 = vld [vmem:[%s1 + $0x1d0] sm:$0xff]
      %v344 = vld [vmem:[%s1 + $0x1d8] sm:$0xff]
      %v345 = vld [vmem:[%s1 + $0x1e0] sm:$0xff]
      %v346 = vld [vmem:[%s1 + $0x1e8] sm:$0xff]
      %v347 = vld [vmem:[%s1 + $0x1f0] sm:$0xff]
      %v348 = vld [vmem:[%s1 + $0x1f8] sm:$0xff]
      %v349 = vld [vmem:[%s1 + $0x200] sm:$0xff]
      %v350 = vld [vmem:[%s1 + $0x208] sm:$0xff]
      %v351 = vld [vmem:[%s1 + $0x210] sm:$0xff]
      %v352 = vld [vmem:[%s1 + $0x218] sm:$0xff]
      %v353 = vld [vmem:[%s1 + $0x220] sm:$0xff]
      %v354 = vld [vmem:[%s1 + $0x228] sm:$0xff]
      %v355 = vld [vmem:[%s1 + $0x230] sm:$0xff]
      %v356 = vld [vmem:[%s1 + $0x238] sm:$0xff]
      %v357 = vld [vmem:[%s1 + $0x240] sm:$0xff]
      %v358 = vld [vmem:[%s1 + $0x248] sm:$0xff]
      %v359 = vld [vmem:[%s1 + $0x250] sm:$0xff]
      %v360 = vld [vmem:[%s1 + $0x258] sm:$0xff]
      %v361 = vld [vmem:[%s1 + $0x260] sm:$0xff]
      %v362 = vld [vmem:[%s1 + $0x268] sm:$0xff]
      %v363 = vld [vmem:[%s1 + $0x270] sm:$0xff]
      %v364 = vld [vmem:[%s1 + $0x278] sm:$0xff]
      %v365 = vld [vmem:[%s1 + $0x280] sm:$0xff]
      %v366 = vld [vmem:[%s1 + $0x288] sm:$0xff]
      %v367 = vld [vmem:[%s1 + $0x290] sm:$0xff]
      %v368 = vld [vmem:[%s1 + $0x298] sm:$0xff]
      %v369 = vld [vmem:[%s1 + $0x2a0] sm:$0xff]
      %v370 = vld [vmem:[%s1 + $0x2a8] sm:$0xff]
      %v371 = vld [vmem:[%s1 + $0x2b0] sm:$0xff]
      %v372 = vld [vmem:[%s1 + $0x2b8] sm:$0xff]
      %v373 = vld [vmem:[%s1 + $0x2c0] sm:$0xff]
      %v374 = vld [vmem:[%s1 + $0x2c8] sm:$0xff]
      %v375 = vld [vmem:[%s1 + $0x2d0] sm:$0xff]
      %v376 = vld [vmem:[%s1 + $0x2d8] sm:$0xff]
      %v377 = vld [vmem:[%s1 + $0x2e0] sm:$0xff]
      %v378 = vld [vmem:[%s1 + $0x2e8] sm:$0xff]
      %v379 = vld [vmem:[%s1 + $0x2f0] sm:$0xff]
      %v380 = vld [vmem:[%s1 + $0x2f8] sm:$0xff]
      %v381 = vld [vmem:[%s1 + $0x300] sm:$0xff]
      %v382 = vld [vmem:[%s1 + $0x308] sm:$0xff]
      %v383 = vld [vmem:[%s1 + $0x310] sm:$0xff]
      %v384 = vld [vmem:[%s1 + $0x318] sm:$0xff]
      %v385 = vld [vmem:[%s1 + $0x320] sm:$0xff]
      %v386 = vld [vmem:[%s1 + $0x328] sm:$0xff]
      %v387 = vld [vmem:[%s1 + $0x330] sm:$0xff]
      %v388 = vld [vmem:[%s1 + $0x338] sm:$0xff]
      %v389 = vld [vmem:[%s1 + $0x340] sm:$0xff]
      %v390 = vld [vmem:[%s1 + $0x348] sm:$0xff]
      %v391 = vld [vmem:[%s1 + $0x350] sm:$0xff]
      %v392 = vld [vmem:[%s1 + $0x358] sm:$0xff]
      %v393 = vld [vmem:[%s1 + $0x360] sm:$0xff]
      %v394 = vld [vmem:[%s1 + $0x368] sm:$0xff]
      %v395 = vld [vmem:[%s1 + $0x370] sm:$0xff]
      %v396 = vld [vmem:[%s1 + $0x378] sm:$0xff]
      %v397 = vld [vmem:[%s1 + $0x380] sm:$0xff]
      %v398 = vld [vmem:[%s1 + $0x388] sm:$0xff]
      %v399 = vld [vmem:[%s1 + $0x390] sm:$0xff]
      %v400 = vld [vmem:[%s1 + $0x398] sm:$0xff]
      %v401 = vld [vmem:[%s1 + $0x3a0] sm:$0xff]
      %v402 = vld [vmem:[%s1 + $0x3a8] sm:$0xff]
      %v403 = vld [vmem:[%s1 + $0x3b0] sm:$0xff]
      %v404 = vld [vmem:[%s1 + $0x3b8] sm:$0xff]
      %v405 = vld [vmem:[%s1 + $0x3c0] sm:$0xff]
      %v406 = vld [vmem:[%s1 + $0x3c8] sm:$0xff]
      %v407 = vld [vmem:[%s1 + $0x3d0] sm:$0xff]
      %v408 = vld [vmem:[%s1 + $0x3d8] sm:$0xff]
      %v409 = vld [vmem:[%s1 + $0x3e0] sm:$0xff]
      %v410 = vld [vmem:[%s1 + $0x3e8] sm:$0xff]
      %v411 = vld [vmem:[%s1 + $0x3f0] sm:$0xff]
      %v412 = vld [vmem:[%s1 + $0x3f8] sm:$0xff]
      %v541 = vunpack.c.l.b16 %v285
      %v542 = vunpack.c.h.b16 %v285
      %v543 = vunpack.c.l.b16 %v286
      %v544 = vunpack.c.h.b16 %v286
      %v545 = vunpack.c.l.b16 %v287
      %v546 = vunpack.c.h.b16 %v287
      %v547 = vunpack.c.l.b16 %v288
      %v548 = vunpack.c.h.b16 %v288
      %v549 = vunpack.c.l.b16 %v289
      %v550 = vunpack.c.h.b16 %v289
      %v551 = vunpack.c.l.b16 %v290
      %v552 = vunpack.c.h.b16 %v290
      %v553 = vunpack.c.l.b16 %v291
      %v554 = vunpack.c.h.b16 %v291
      %v555 = vunpack.c.l.b16 %v292
      %v556 = vunpack.c.h.b16 %v292
      %v557 = vunpack.c.l.b16 %v293
      %v558 = vunpack.c.h.b16 %v293
      %v559 = vunpack.c.l.b16 %v294
      %v560 = vunpack.c.h.b16 %v294
      %v561 = vunpack.c.l.b16 %v295
      %v562 = vunpack.c.h.b16 %v295
      %v563 = vunpack.c.l.b16 %v296
      %v564 = vunpack.c.h.b16 %v296
      %v565 = vunpack.c.l.b16 %v297
      %v566 = vunpack.c.h.b16 %v297
      %v567 = vunpack.c.l.b16 %v298
      %v568 = vunpack.c.h.b16 %v298
      %v569 = vunpack.c.l.b16 %v299
      %v570 = vunpack.c.h.b16 %v299
      %v571 = vunpack.c.l.b16 %v300
      %v572 = vunpack.c.h.b16 %v300
      %v573 = vunpack.c.l.b16 %v301
      %v574 = vunpack.c.h.b16 %v301
      %v575 = vunpack.c.l.b16 %v302
      %v576 = vunpack.c.h.b16 %v302
      %v577 = vunpack.c.l.b16 %v303
      %v578 = vunpack.c.h.b16 %v303
      %v579 = vunpack.c.l.b16 %v304
      %v580 = vunpack.c.h.b16 %v304
      %v581 = vunpack.c.l.b16 %v305
      %v582 = vunpack.c.h.b16 %v305
      %v583 = vunpack.c.l.b16 %v306
      %v584 = vunpack.c.h.b16 %v306
      %v585 = vunpack.c.l.b16 %v307
      %v586 = vunpack.c.h.b16 %v307
      %v587 = vunpack.c.l.b16 %v308
      %v588 = vunpack.c.h.b16 %v308
      %v589 = vunpack.c.l.b16 %v309
      %v590 = vunpack.c.h.b16 %v309
      %v591 = vunpack.c.l.b16 %v310
      %v592 = vunpack.c.h.b16 %v310
      %v593 = vunpack.c.l.b16 %v311
      %v594 = vunpack.c.h.b16 %v311
      %v595 = vunpack.c.l.b16 %v312
      %v596 = vunpack.c.h.b16 %v312
      %v597 = vunpack.c.l.b16 %v313
      %v598 = vunpack.c.h.b16 %v313
      %v599 = vunpack.c.l.b16 %v314
      %v600 = vunpack.c.h.b16 %v314
      %v601 = vunpack.c.l.b16 %v315
      %v602 = vunpack.c.h.b16 %v315
      %v603 = vunpack.c.l.b16 %v316
      %v604 = vunpack.c.h.b16 %v316
      %v605 = vunpack.c.l.b16 %v317
      %v606 = vunpack.c.h.b16 %v317
      %v607 = vunpack.c.l.b16 %v318
      %v608 = vunpack.c.h.b16 %v318
      %v609 = vunpack.c.l.b16 %v319
      %v610 = vunpack.c.h.b16 %v319
      %v611 = vunpack.c.l.b16 %v320
      %v612 = vunpack.c.h.b16 %v320
      %v613 = vunpack.c.l.b16 %v321
      %v614 = vunpack.c.h.b16 %v321
      %v615 = vunpack.c.l.b16 %v322
      %v616 = vunpack.c.h.b16 %v322
      %v617 = vunpack.c.l.b16 %v323
      %v618 = vunpack.c.h.b16 %v323
      %v619 = vunpack.c.l.b16 %v324
      %v620 = vunpack.c.h.b16 %v324
      %v621 = vunpack.c.l.b16 %v325
      %v622 = vunpack.c.h.b16 %v325
      %v623 = vunpack.c.l.b16 %v326
      %v624 = vunpack.c.h.b16 %v326
      %v625 = vunpack.c.l.b16 %v327
      %v626 = vunpack.c.h.b16 %v327
      %v627 = vunpack.c.l.b16 %v328
      %v628 = vunpack.c.h.b16 %v328
      %v629 = vunpack.c.l.b16 %v329
      %v630 = vunpack.c.h.b16 %v329
      %v631 = vunpack.c.l.b16 %v330
      %v632 = vunpack.c.h.b16 %v330
      %v633 = vunpack.c.l.b16 %v331
      %v634 = vunpack.c.h.b16 %v331
      %v635 = vunpack.c.l.b16 %v332
      %v636 = vunpack.c.h.b16 %v332
      %v637 = vunpack.c.l.b16 %v333
      %v638 = vunpack.c.h.b16 %v333
      %v639 = vunpack.c.l.b16 %v334
      %v640 = vunpack.c.h.b16 %v334
      %v641 = vunpack.c.l.b16 %v335
      %v642 = vunpack.c.h.b16 %v335
      %v643 = vunpack.c.l.b16 %v336
      %v644 = vunpack.c.h.b16 %v336
      %v645 = vunpack.c.l.b16 %v337
      %v646 = vunpack.c.h.b16 %v337
      %v647 = vunpack.c.l.b16 %v338
      %v648 = vunpack.c.h.b16 %v338
      %v649 = vunpack.c.l.b16 %v339
      %v650 = vunpack.c.h.b16 %v339
      %v651 = vunpack.c.l.b16 %v340
      %v652 = vunpack.c.h.b16 %v340
      %v653 = vunpack.c.l.b16 %v341
      %v654 = vunpack.c.h.b16 %v341
      %v655 = vunpack.c.l.b16 %v342
      %v656 = vunpack.c.h.b16 %v342
      %v657 = vunpack.c.l.b16 %v343
      %v658 = vunpack.c.h.b16 %v343
      %v659 = vunpack.c.l.b16 %v344
      %v660 = vunpack.c.h.b16 %v344
      %v661 = vunpack.c.l.b16 %v345
      %v662 = vunpack.c.h.b16 %v345
      %v663 = vunpack.c.l.b16 %v346
      %v664 = vunpack.c.h.b16 %v346
      %v665 = vunpack.c.l.b16 %v347
      %v666 = vunpack.c.h.b16 %v347
      %v667 = vunpack.c.l.b16 %v348
      %v668 = vunpack.c.h.b16 %v348
      %v669 = vunpack.c.l.b16 %v349
      %v670 = vunpack.c.h.b16 %v349
      %v671 = vunpack.c.l.b16 %v350
      %v672 = vunpack.c.h.b16 %v350
      %v673 = vunpack.c.l.b16 %v351
      %v674 = vunpack.c.h.b16 %v351
      %v675 = vunpack.c.l.b16 %v352
      %v676 = vunpack.c.h.b16 %v352
      %v677 = vunpack.c.l.b16 %v353
      %v678 = vunpack.c.h.b16 %v353
      %v679 = vunpack.c.l.b16 %v354
      %v680 = vunpack.c.h.b16 %v354
      %v681 = vunpack.c.l.b16 %v355
      %v682 = vunpack.c.h.b16 %v355
      %v683 = vunpack.c.l.b16 %v356
      %v684 = vunpack.c.h.b16 %v356
      %v685 = vunpack.c.l.b16 %v357
      %v686 = vunpack.c.h.b16 %v357
      %v687 = vunpack.c.l.b16 %v358
      %v688 = vunpack.c.h.b16 %v358
      %v689 = vunpack.c.l.b16 %v359
      %v690 = vunpack.c.h.b16 %v359
      %v691 = vunpack.c.l.b16 %v360
      %v692 = vunpack.c.h.b16 %v360
      %v693 = vunpack.c.l.b16 %v361
      %v694 = vunpack.c.h.b16 %v361
      %v695 = vunpack.c.l.b16 %v362
      %v696 = vunpack.c.h.b16 %v362
      %v697 = vunpack.c.l.b16 %v363
      %v698 = vunpack.c.h.b16 %v363
      %v699 = vunpack.c.l.b16 %v364
      %v700 = vunpack.c.h.b16 %v364
      %v701 = vunpack.c.l.b16 %v365
      %v702 = vunpack.c.h.b16 %v365
      %v703 = vunpack.c.l.b16 %v366
      %v704 = vunpack.c.h.b16 %v366
      %v705 = vunpack.c.l.b16 %v367
      %v706 = vunpack.c.h.b16 %v367
      %v707 = vunpack.c.l.b16 %v368
      %v708 = vunpack.c.h.b16 %v368
      %v709 = vunpack.c.l.b16 %v369
      %v710 = vunpack.c.h.b16 %v369
      %v711 = vunpack.c.l.b16 %v370
      %v712 = vunpack.c.h.b16 %v370
      %v713 = vunpack.c.l.b16 %v371
      %v714 = vunpack.c.h.b16 %v371
      %v715 = vunpack.c.l.b16 %v372
      %v716 = vunpack.c.h.b16 %v372
      %v717 = vunpack.c.l.b16 %v373
      %v718 = vunpack.c.h.b16 %v373
      %v719 = vunpack.c.l.b16 %v374
      %v720 = vunpack.c.h.b16 %v374
      %v721 = vunpack.c.l.b16 %v375
      %v722 = vunpack.c.h.b16 %v375
      %v723 = vunpack.c.l.b16 %v376
      %v724 = vunpack.c.h.b16 %v376
      %v725 = vunpack.c.l.b16 %v377
      %v726 = vunpack.c.h.b16 %v377
      %v727 = vunpack.c.l.b16 %v378
      %v728 = vunpack.c.h.b16 %v378
      %v729 = vunpack.c.l.b16 %v379
      %v730 = vunpack.c.h.b16 %v379
      %v731 = vunpack.c.l.b16 %v380
      %v732 = vunpack.c.h.b16 %v380
      %v733 = vunpack.c.l.b16 %v381
      %v734 = vunpack.c.h.b16 %v381
      %v735 = vunpack.c.l.b16 %v382
      %v736 = vunpack.c.h.b16 %v382
      %v737 = vunpack.c.l.b16 %v383
      %v738 = vunpack.c.h.b16 %v383
      %v739 = vunpack.c.l.b16 %v384
      %v740 = vunpack.c.h.b16 %v384
      %v741 = vunpack.c.l.b16 %v385
      %v742 = vunpack.c.h.b16 %v385
      %v743 = vunpack.c.l.b16 %v386
      %v744 = vunpack.c.h.b16 %v386
      %v745 = vunpack.c.l.b16 %v387
      %v746 = vunpack.c.h.b16 %v387
      %v747 = vunpack.c.l.b16 %v388
      %v748 = vunpack.c.h.b16 %v388
      %v749 = vunpack.c.l.b16 %v389
      %v750 = vunpack.c.h.b16 %v389
      %v751 = vunpack.c.l.b16 %v390
      %v752 = vunpack.c.h.b16 %v390
      %v753 = vunpack.c.l.b16 %v391
      %v754 = vunpack.c.h.b16 %v391
      %v755 = vunpack.c.l.b16 %v392
      %v756 = vunpack.c.h.b16 %v392
      %v757 = vunpack.c.l.b16 %v393
      %v758 = vunpack.c.h.b16 %v393
      %v759 = vunpack.c.l.b16 %v394
      %v760 = vunpack.c.h.b16 %v394
      %v761 = vunpack.c.l.b16 %v395
      %v762 = vunpack.c.h.b16 %v395
      %v763 = vunpack.c.l.b16 %v396
      %v764 = vunpack.c.h.b16 %v396
      %v765 = vunpack.c.l.b16 %v397
      %v766 = vunpack.c.h.b16 %v397
      %v767 = vunpack.c.l.b16 %v398
      %v768 = vunpack.c.h.b16 %v398
      %v769 = vunpack.c.l.b16 %v399
      %v770 = vunpack.c.h.b16 %v399
      %v771 = vunpack.c.l.b16 %v400
      %v772 = vunpack.c.h.b16 %v400
      %v773 = vunpack.c.l.b16 %v401
      %v774 = vunpack.c.h.b16 %v401
      %v775 = vunpack.c.l.b16 %v402
      %v776 = vunpack.c.h.b16 %v402
      %v777 = vunpack.c.l.b16 %v403
      %v778 = vunpack.c.h.b16 %v403
      %v779 = vunpack.c.l.b16 %v404
      %v780 = vunpack.c.h.b16 %v404
      %v781 = vunpack.c.l.b16 %v405
      %v782 = vunpack.c.h.b16 %v405
      %v783 = vunpack.c.l.b16 %v406
      %v784 = vunpack.c.h.b16 %v406
      %v785 = vunpack.c.l.b16 %v407
      %v786 = vunpack.c.h.b16 %v407
      %v787 = vunpack.c.l.b16 %v408
      %v788 = vunpack.c.h.b16 %v408
      %v789 = vunpack.c.l.b16 %v409
      %v790 = vunpack.c.h.b16 %v409
      %v791 = vunpack.c.l.b16 %v410
      %v792 = vunpack.c.h.b16 %v410
      %v793 = vunpack.c.l.b16 %v411
      %v794 = vunpack.c.h.b16 %v411
      %v795 = vunpack.c.l.b16 %v412
      %v796 = vunpack.c.h.b16 %v412
      %v797 = vpack.c.b16 %v549, %v541
      %v798 = vpack.c.b16 %v550, %v542
      %v799 = vpack.c.b16 %v551, %v543
      %v800 = vpack.c.b16 %v552, %v544
      %v801 = vpack.c.b16 %v553, %v545
      %v802 = vpack.c.b16 %v554, %v546
      %v803 = vpack.c.b16 %v555, %v547
      %v804 = vpack.c.b16 %v556, %v548
      %v805 = vpack.c.b16 %v565, %v557
      %v806 = vpack.c.b16 %v566, %v558
      %v807 = vpack.c.b16 %v567, %v559
      %v808 = vpack.c.b16 %v568, %v560
      %v809 = vpack.c.b16 %v569, %v561
      %v810 = vpack.c.b16 %v570, %v562
      %v811 = vpack.c.b16 %v571, %v563
      %v812 = vpack.c.b16 %v572, %v564
      %v813 = vpack.c.b16 %v581, %v573
      %v814 = vpack.c.b16 %v582, %v574
      %v815 = vpack.c.b16 %v583, %v575
      %v816 = vpack.c.b16 %v584, %v576
      %v817 = vpack.c.b16 %v585, %v577
      %v818 = vpack.c.b16 %v586, %v578
      %v819 = vpack.c.b16 %v587, %v579
      %v820 = vpack.c.b16 %v588, %v580
      %v821 = vpack.c.b16 %v597, %v589
      %v822 = vpack.c.b16 %v598, %v590
      %v823 = vpack.c.b16 %v599, %v591
      %v824 = vpack.c.b16 %v600, %v592
      %v825 = vpack.c.b16 %v601, %v593
      %v826 = vpack.c.b16 %v602, %v594
      %v827 = vpack.c.b16 %v603, %v595
      %v828 = vpack.c.b16 %v604, %v596
      %v829 = vpack.c.b16 %v613, %v605
      %v830 = vpack.c.b16 %v614, %v606
      %v831 = vpack.c.b16 %v615, %v607
      %v832 = vpack.c.b16 %v616, %v608
      %v833 = vpack.c.b16 %v617, %v609
      %v834 = vpack.c.b16 %v618, %v610
      %v835 = vpack.c.b16 %v619, %v611
      %v836 = vpack.c.b16 %v620, %v612
      %v837 = vpack.c.b16 %v629, %v621
      %v838 = vpack.c.b16 %v630, %v622
      %v839 = vpack.c.b16 %v631, %v623
      %v840 = vpack.c.b16 %v632, %v624
      %v841 = vpack.c.b16 %v633, %v625
      %v842 = vpack.c.b16 %v634, %v626
      %v843 = vpack.c.b16 %v635, %v627
      %v844 = vpack.c.b16 %v636, %v628
      %v845 = vpack.c.b16 %v645, %v637
      %v846 = vpack.c.b16 %v646, %v638
      %v847 = vpack.c.b16 %v647, %v639
      %v848 = vpack.c.b16 %v648, %v640
      %v849 = vpack.c.b16 %v649, %v641
      %v850 = vpack.c.b16 %v650, %v642
      %v851 = vpack.c.b16 %v651, %v643
      %v852 = vpack.c.b16 %v652, %v644
      %v853 = vpack.c.b16 %v661, %v653
      %v854 = vpack.c.b16 %v662, %v654
      %v855 = vpack.c.b16 %v663, %v655
      %v856 = vpack.c.b16 %v664, %v656
      %v857 = vpack.c.b16 %v665, %v657
      %v858 = vpack.c.b16 %v666, %v658
      %v859 = vpack.c.b16 %v667, %v659
      %v860 = vpack.c.b16 %v668, %v660
      %v861 = vpack.c.b16 %v677, %v669
      %v862 = vpack.c.b16 %v678, %v670
      %v863 = vpack.c.b16 %v679, %v671
      %v864 = vpack.c.b16 %v680, %v672
      %v865 = vpack.c.b16 %v681, %v673
      %v866 = vpack.c.b16 %v682, %v674
      %v867 = vpack.c.b16 %v683, %v675
      %v868 = vpack.c.b16 %v684, %v676
      %v869 = vpack.c.b16 %v693, %v685
      %v870 = vpack.c.b16 %v694, %v686
      %v871 = vpack.c.b16 %v695, %v687
      %v872 = vpack.c.b16 %v696, %v688
      %v873 = vpack.c.b16 %v697, %v689
      %v874 = vpack.c.b16 %v698, %v690
      %v875 = vpack.c.b16 %v699, %v691
      %v876 = vpack.c.b16 %v700, %v692
      %v877 = vpack.c.b16 %v709, %v701
      %v878 = vpack.c.b16 %v710, %v702
      %v879 = vpack.c.b16 %v711, %v703
      %v880 = vpack.c.b16 %v712, %v704
      %v881 = vpack.c.b16 %v713, %v705
      %v882 = vpack.c.b16 %v714, %v706
      %v883 = vpack.c.b16 %v715, %v707
      %v884 = vpack.c.b16 %v716, %v708
      %v885 = vpack.c.b16 %v725, %v717
      %v886 = vpack.c.b16 %v726, %v718
      %v887 = vpack.c.b16 %v727, %v719
      %v888 = vpack.c.b16 %v728, %v720
      %v889 = vpack.c.b16 %v729, %v721
      %v890 = vpack.c.b16 %v730, %v722
      %v891 = vpack.c.b16 %v731, %v723
      %v892 = vpack.c.b16 %v732, %v724
      %v893 = vpack.c.b16 %v741, %v733
      %v894 = vpack.c.b16 %v742, %v734
      %v895 = vpack.c.b16 %v743, %v735
      %v896 = vpack.c.b16 %v744, %v736
      %v897 = vpack.c.b16 %v745, %v737
      %v898 = vpack.c.b16 %v746, %v738
      %v899 = vpack.c.b16 %v747, %v739
      %v900 = vpack.c.b16 %v748, %v740
      %v901 = vpack.c.b16 %v757, %v749
      %v902 = vpack.c.b16 %v758, %v750
      %v903 = vpack.c.b16 %v759, %v751
      %v904 = vpack.c.b16 %v760, %v752
      %v905 = vpack.c.b16 %v761, %v753
      %v906 = vpack.c.b16 %v762, %v754
      %v907 = vpack.c.b16 %v763, %v755
      %v908 = vpack.c.b16 %v764, %v756
      %v909 = vpack.c.b16 %v773, %v765
      %v910 = vpack.c.b16 %v774, %v766
      %v911 = vpack.c.b16 %v775, %v767
      %v912 = vpack.c.b16 %v776, %v768
      %v913 = vpack.c.b16 %v777, %v769
      %v914 = vpack.c.b16 %v778, %v770
      %v915 = vpack.c.b16 %v779, %v771
      %v916 = vpack.c.b16 %v780, %v772
      %v917 = vpack.c.b16 %v789, %v781
      %v918 = vpack.c.b16 %v790, %v782
      %v919 = vpack.c.b16 %v791, %v783
      %v920 = vpack.c.b16 %v792, %v784
      %v921 = vpack.c.b16 %v793, %v785
      %v922 = vpack.c.b16 %v794, %v786
      %v923 = vpack.c.b16 %v795, %v787
      %v924 = vpack.c.b16 %v796, %v788
      %1053 = vmatprep.subr.bf16.mxu0 %v854
      %1054 = vmatpush1.bf16.msra.mxu0 %v853
      %1055 = vmatprep.subr.bf16.mxu0 %v846
      %1056 = vmatpush1.bf16.msra.mxu0 %v845
      %1057 = vmatprep.subr.bf16.mxu0 %v838
      %1058 = vmatpush1.bf16.msra.mxu0 %v837
      %1059 = vmatprep.subr.bf16.mxu0 %v830
      %1060 = vmatpush1.bf16.msra.mxu0 %v829
      %1061 = vmatprep.subr.bf16.mxu0 %v822
      %1062 = vmatpush1.bf16.msra.mxu0 %v821
      %1063 = vmatprep.subr.bf16.mxu0 %v814
      %1064 = vmatpush1.bf16.msra.mxu0 %v813
      %1065 = vmatprep.subr.bf16.mxu0 %v806
      %1066 = vmatpush1.bf16.msra.mxu0 %v805
      %1067 = vmatprep.subr.bf16.mxu0 %v798
      %1068 = vmatpush1.bf16.msra.mxu0 %v797
      %1069 = vmatprep.subr.bf16.mxu0 %v918
      %1070 = vmatpush2.bf16.msra.mxu0 %v917
      %1071 = vmatprep.subr.bf16.mxu0 %v910
      %1072 = vmatpush2.bf16.msra.mxu0 %v909
      %1073 = vmatprep.subr.bf16.mxu0 %v902
      %1074 = vmatpush2.bf16.msra.mxu0 %v901
      %1075 = vmatprep.subr.bf16.mxu0 %v894
      %1076 = vmatpush2.bf16.msra.mxu0 %v893
      %1077 = vmatprep.subr.bf16.mxu0 %v886
      %1078 = vmatpush2.bf16.msra.mxu0 %v885
      %1079 = vmatprep.subr.bf16.mxu0 %v878
      %1080 = vmatpush2.bf16.msra.mxu0 %v877
      %1081 = vmatprep.subr.bf16.mxu0 %v870
      %1082 = vmatpush2.bf16.msra.mxu0 %v869
      %1083 = vmatprep.subr.bf16.mxu0 %v862
      %1084 = vmatpush2.bf16.msra.mxu0 %v861
      %1085 = vmatprep.mubr.bf16.mxu0 %v284
      %1086 = vmatmul.mubr.bf16.gmra.mxu0 %v283
      %v1087 = vpop.f32.mrf.mxu0
      %v1088 = vadd.f32 0.0, %v1087
      %v1089 = vpop.f32.mrf.mxu0
      %v1090 = vadd.f32 0.0, %v1089
      %v1091 = vpop.f32.mrf.mxu0
      %v1092 = vpop.f32.mrf.mxu0
      %1093 = vdwg.mxu0
      %1094 = vmatprep.subr.bf16.mxu0 %v856
      %1095 = vmatpush1.bf16.msra.mxu0 %v855
      %1096 = vmatprep.subr.bf16.mxu0 %v848
      %1097 = vmatpush1.bf16.msra.mxu0 %v847
      %1098 = vmatprep.subr.bf16.mxu0 %v840
      %1099 = vmatpush1.bf16.msra.mxu0 %v839
      %1100 = vmatprep.subr.bf16.mxu0 %v832
      %1101 = vmatpush1.bf16.msra.mxu0 %v831
      %1102 = vmatprep.subr.bf16.mxu0 %v824
      %1103 = vmatpush1.bf16.msra.mxu0 %v823
      %1104 = vmatprep.subr.bf16.mxu0 %v816
      %1105 = vmatpush1.bf16.msra.mxu0 %v815
      %1106 = vmatprep.subr.bf16.mxu0 %v808
      %1107 = vmatpush1.bf16.msra.mxu0 %v807
      %1108 = vmatprep.subr.bf16.mxu0 %v800
      %1109 = vmatpush1.bf16.msra.mxu0 %v799
      %1110 = vmatprep.subr.bf16.mxu0 %v920
      %1111 = vmatpush2.bf16.msra.mxu0 %v919
      %1112 = vmatprep.subr.bf16.mxu0 %v912
      %1113 = vmatpush2.bf16.msra.mxu0 %v911
      %1114 = vmatprep.subr.bf16.mxu0 %v904
      %1115 = vmatpush2.bf16.msra.mxu0 %v903
      %1116 = vmatprep.subr.bf16.mxu0 %v896
      %1117 = vmatpush2.bf16.msra.mxu0 %v895
      %1118 = vmatprep.subr.bf16.mxu0 %v888
      %1119 = vmatpush2.bf16.msra.mxu0 %v887
      %1120 = vmatprep.subr.bf16.mxu0 %v880
      %1121 = vmatpush2.bf16.msra.mxu0 %v879
      %1122 = vmatprep.subr.bf16.mxu0 %v872
      %1123 = vmatpush2.bf16.msra.mxu0 %v871
      %1124 = vmatprep.subr.bf16.mxu0 %v864
      %1125 = vmatpush2.bf16.msra.mxu0 %v863
      %1126 = vmatprep.mubr.bf16.mxu0 %v284
      %1127 = vmatmul.mubr.bf16.gmra.mxu0 %v283
      %v1128 = vpop.f32.mrf.mxu0
      %v1129 = vadd.f32 0.0, %v1128
      %v1130 = vpop.f32.mrf.mxu0
      %v1131 = vadd.f32 0.0, %v1130
      %v1132 = vpop.f32.mrf.mxu0
      %v1133 = vpop.f32.mrf.mxu0
      %1134 = vdwg.mxu0
      %1135 = vmatprep.subr.bf16.mxu0 %v858
      %1136 = vmatpush1.bf16.msra.mxu0 %v857
      %1137 = vmatprep.subr.bf16.mxu0 %v850
      %1138 = vmatpush1.bf16.msra.mxu0 %v849
      %1139 = vmatprep.subr.bf16.mxu0 %v842
      %1140 = vmatpush1.bf16.msra.mxu0 %v841
      %1141 = vmatprep.subr.bf16.mxu0 %v834
      %1142 = vmatpush1.bf16.msra.mxu0 %v833
      %1143 = vmatprep.subr.bf16.mxu0 %v826
      %1144 = vmatpush1.bf16.msra.mxu0 %v825
      %1145 = vmatprep.subr.bf16.mxu0 %v818
      %1146 = vmatpush1.bf16.msra.mxu0 %v817
      %1147 = vmatprep.subr.bf16.mxu0 %v810
      %1148 = vmatpush1.bf16.msra.mxu0 %v809
      %1149 = vmatprep.subr.bf16.mxu0 %v802
      %1150 = vmatpush1.bf16.msra.mxu0 %v801
      %1151 = vmatprep.subr.bf16.mxu0 %v922
      %1152 = vmatpush2.bf16.msra.mxu0 %v921
      %1153 = vmatprep.subr.bf16.mxu0 %v914
      %1154 = vmatpush2.bf16.msra.mxu0 %v913
      %1155 = vmatprep.subr.bf16.mxu0 %v906
      %1156 = vmatpush2.bf16.msra.mxu0 %v905
      %1157 = vmatprep.subr.bf16.mxu0 %v898
      %1158 = vmatpush2.bf16.msra.mxu0 %v897
      %1159 = vmatprep.subr.bf16.mxu0 %v890
      %1160 = vmatpush2.bf16.msra.mxu0 %v889
      %1161 = vmatprep.subr.bf16.mxu0 %v882
      %1162 = vmatpush2.bf16.msra.mxu0 %v881
      %1163 = vmatprep.subr.bf16.mxu0 %v874
      %1164 = vmatpush2.bf16.msra.mxu0 %v873
      %1165 = vmatprep.subr.bf16.mxu0 %v866
      %1166 = vmatpush2.bf16.msra.mxu0 %v865
      %1167 = vmatprep.mubr.bf16.mxu0 %v284
      %1168 = vmatmul.mubr.bf16.gmra.mxu0 %v283
      %v1169 = vpop.f32.mrf.mxu0
      %v1170 = vadd.f32 0.0, %v1169
      %v1171 = vpop.f32.mrf.mxu0
      %v1172 = vadd.f32 0.0, %v1171
      %v1173 = vpop.f32.mrf.mxu0
      %v1174 = vpop.f32.mrf.mxu0
      %1175 = vdwg.mxu0
      %1176 = vmatprep.subr.bf16.mxu0 %v860
      %1177 = vmatpush1.bf16.msra.mxu0 %v859
      %1178 = vmatprep.subr.bf16.mxu0 %v852
      %1179 = vmatpush1.bf16.msra.mxu0 %v851
      %1180 = vmatprep.subr.bf16.mxu0 %v844
      %1181 = vmatpush1.bf16.msra.mxu0 %v843
      %1182 = vmatprep.subr.bf16.mxu0 %v836
      %1183 = vmatpush1.bf16.msra.mxu0 %v835
      %1184 = vmatprep.subr.bf16.mxu0 %v828
      %1185 = vmatpush1.bf16.msra.mxu0 %v827
      %1186 = vmatprep.subr.bf16.mxu0 %v820
      %1187 = vmatpush1.bf16.msra.mxu0 %v819
      %1188 = vmatprep.subr.bf16.mxu0 %v812
      %1189 = vmatpush1.bf16.msra.mxu0 %v811
      %1190 = vmatprep.subr.bf16.mxu0 %v804
      %1191 = vmatpush1.bf16.msra.mxu0 %v803
      %1192 = vmatprep.subr.bf16.mxu0 %v924
      %1193 = vmatpush2.bf16.msra.mxu0 %v923
      %1194 = vmatprep.subr.bf16.mxu0 %v916
      %1195 = vmatpush2.bf16.msra.mxu0 %v915
      %1196 = vmatprep.subr.bf16.mxu0 %v908
      %1197 = vmatpush2.bf16.msra.mxu0 %v907
      %1198 = vmatprep.subr.bf16.mxu0 %v900
      %1199 = vmatpush2.bf16.msra.mxu0 %v899
      %1200 = vmatprep.subr.bf16.mxu0 %v892
      %1201 = vmatpush2.bf16.msra.mxu0 %v891
      %1202 = vmatprep.subr.bf16.mxu0 %v884
      %1203 = vmatpush2.bf16.msra.mxu0 %v883
      %1204 = vmatprep.subr.bf16.mxu0 %v876
      %1205 = vmatpush2.bf16.msra.mxu0 %v875
      %1206 = vmatprep.subr.bf16.mxu0 %v868
      %1207 = vmatpush2.bf16.msra.mxu0 %v867
      %1208 = vmatprep.mubr.bf16.mxu0 %v284
      %1209 = vmatmul.mubr.bf16.gmra.mxu0 %v283
      %v1210 = vpop.f32.mrf.mxu0
      %v1211 = vadd.f32 0.0, %v1210
      %v1212 = vpop.f32.mrf.mxu0
      %v1213 = vadd.f32 0.0, %v1212
      %v1214 = vpop.f32.mrf.mxu0
      %v1215 = vpop.f32.mrf.mxu0
      %1216 = vdwg.mxu0
      %v1225 = vcombine.low %v1088, %v1090
      %v1226 = vcombine.low %v1129, %v1131
      %v1228 = vunpack.c.l.s4 1983009808
      %v1229 = vunpack.c.0.s8 %v1228
      %v1230 = vlaneseq
      %v1231 = vshrl.u32 %v1230, 7
      %v1232 = vsub.s32 %v1229, %v1231
      %v1233 = vrot.slane %v1225, %v1232
      %v1235 = vunpack.c.l.s4 1983009808
      %v1236 = vunpack.c.0.s8 %v1235
      %v1237 = vlaneseq
      %v1238 = vshrl.u32 %v1237, 7
      %v1239 = vsub.s32 %v1236, %v1238
      %v1240 = vrot.slane %v1226, %v1239
      %v1241 = vcombine.low %v1233, %v1240
      %v1242 = vcombine.low %v1170, %v1172
      %v1243 = vcombine.low %v1211, %v1213
      %v1245 = vunpack.c.l.s4 1983009808
      %v1246 = vunpack.c.0.s8 %v1245
      %v1247 = vlaneseq
      %v1248 = vshrl.u32 %v1247, 7
      %v1249 = vsub.s32 %v1246, %v1248
      %v1250 = vrot.slane %v1242, %v1249
      %v1252 = vunpack.c.l.s4 1983009808
      %v1253 = vunpack.c.0.s8 %v1252
      %v1254 = vlaneseq
      %v1255 = vshrl.u32 %v1254, 7
      %v1256 = vsub.s32 %v1253, %v1255
      %v1257 = vrot.slane %v1243, %v1256
      %v1258 = vcombine.low %v1250, %v1257
      %v1261 = vadd.f32 %v269, %v1241
      %v1262 = vadd.f32 %v270, %v1258
      %v1263 = vld [vmem:[#allocation3] sm:$0xf]
      %v1264 = vxor.u32 %v1261, 2147483648
      %v1265 = vmul.f32 %v1264, 1.442695
      %v1266 = vpow.pop %v1265
      %v1267 = vadd.f32 %v1266, 1.0
      %v1268 = vrcp.pop %v1267
      %v1269 = vmul.f32 1.0, %v1268
      %v1271 = vrot.slane %v1261, 4
      %v1273 = vxor.u32 %v1271, 2147483648
      %v1274 = vmul.f32 %v1273, 1.442695
      %v1275 = vpow.pop %v1274
      %v1276 = vadd.f32 %v1275, 1.0
      %v1277 = vrcp.pop %v1276
      %v1278 = vmul.f32 1.0, %v1277
      %v1279 = vtanh.pop %v1262
      %v1281 = vrot.slane %v1262, 4
      %v1283 = vxor.u32 %v1281, 2147483648
      %v1284 = vmul.f32 %v1283, 1.442695
      %v1285 = vpow.pop %v1284
      %v1286 = vadd.f32 %v1285, 1.0
      %v1287 = vrcp.pop %v1286
      %v1288 = vmul.f32 1.0, %v1287
      %v1289 = vmul.f32 %v1278, %v1263
      %v1290 = vmul.f32 %v1269, %v1279
      %v1291 = vadd.f32 %v1289, %v1290
      %v1292 = vtanh.pop %v1291
      %v1293 = vmul.f32 %v1288, %v1292
      %1294 = vst [vmem:[#allocation2] sm:$0xf] %v1293
      %1295 = vst [vmem:[#allocation3] sm:$0xf] %v1291
      %v1298 = vunpack.c.l.s4 1983009808
      %v1299 = vunpack.c.0.s8 %v1298
      %v1300 = vlaneseq
      %v1301 = vshrl.u32 %v1300, 7
      %v1302 = vsub.s32 %v1299, %v1301
      %v1303 = vrot.slane %v1293, %v1302
      %v1304 = vcombine.high %v1303, %v1303
      %v1307 = vpack.c.bf16 %v1303, %v1303
      %v1308 = vpack.c.bf16 %v1304, %v1304
      %v1309 = vld [vmem:[%s2] sm:$0xff]
      %v1310 = vld [vmem:[%s2 + $0x8] sm:$0xff]
      %v1311 = vld [vmem:[%s2 + $0x10] sm:$0xff]
      %v1312 = vld [vmem:[%s2 + $0x18] sm:$0xff]
      %v1313 = vld [vmem:[%s2 + $0x20] sm:$0xff]
      %v1314 = vld [vmem:[%s2 + $0x28] sm:$0xff]
      %v1315 = vld [vmem:[%s2 + $0x30] sm:$0xff]
      %v1316 = vld [vmem:[%s2 + $0x38] sm:$0xff]
      %v1317 = vld [vmem:[%s2 + $0x40] sm:$0xff]
      %v1318 = vld [vmem:[%s2 + $0x48] sm:$0xff]
      %v1319 = vld [vmem:[%s2 + $0x50] sm:$0xff]
      %v1320 = vld [vmem:[%s2 + $0x58] sm:$0xff]
      %v1321 = vld [vmem:[%s2 + $0x60] sm:$0xff]
      %v1322 = vld [vmem:[%s2 + $0x68] sm:$0xff]
      %v1323 = vld [vmem:[%s2 + $0x70] sm:$0xff]
      %v1324 = vld [vmem:[%s2 + $0x78] sm:$0xff]
      %v1325 = vld [vmem:[%s2 + $0x80] sm:$0xff]
      %v1326 = vld [vmem:[%s2 + $0x88] sm:$0xff]
      %v1327 = vld [vmem:[%s2 + $0x90] sm:$0xff]
      %v1328 = vld [vmem:[%s2 + $0x98] sm:$0xff]
      %v1329 = vld [vmem:[%s2 + $0xa0] sm:$0xff]
      %v1330 = vld [vmem:[%s2 + $0xa8] sm:$0xff]
      %v1331 = vld [vmem:[%s2 + $0xb0] sm:$0xff]
      %v1332 = vld [vmem:[%s2 + $0xb8] sm:$0xff]
      %v1333 = vld [vmem:[%s2 + $0xc0] sm:$0xff]
      %v1334 = vld [vmem:[%s2 + $0xc8] sm:$0xff]
      %v1335 = vld [vmem:[%s2 + $0xd0] sm:$0xff]
      %v1336 = vld [vmem:[%s2 + $0xd8] sm:$0xff]
      %v1337 = vld [vmem:[%s2 + $0xe0] sm:$0xff]
      %v1338 = vld [vmem:[%s2 + $0xe8] sm:$0xff]
      %v1339 = vld [vmem:[%s2 + $0xf0] sm:$0xff]
      %v1340 = vld [vmem:[%s2 + $0xf8] sm:$0xff]
      %v1341 = vld [vmem:[%s2 + $0x100] sm:$0xff]
      %v1342 = vld [vmem:[%s2 + $0x108] sm:$0xff]
      %v1343 = vld [vmem:[%s2 + $0x110] sm:$0xff]
      %v1344 = vld [vmem:[%s2 + $0x118] sm:$0xff]
      %v1345 = vld [vmem:[%s2 + $0x120] sm:$0xff]
      %v1346 = vld [vmem:[%s2 + $0x128] sm:$0xff]
      %v1347 = vld [vmem:[%s2 + $0x130] sm:$0xff]
      %v1348 = vld [vmem:[%s2 + $0x138] sm:$0xff]
      %v1349 = vld [vmem:[%s2 + $0x140] sm:$0xff]
      %v1350 = vld [vmem:[%s2 + $0x148] sm:$0xff]
      %v1351 = vld [vmem:[%s2 + $0x150] sm:$0xff]
      %v1352 = vld [vmem:[%s2 + $0x158] sm:$0xff]
      %v1353 = vld [vmem:[%s2 + $0x160] sm:$0xff]
      %v1354 = vld [vmem:[%s2 + $0x168] sm:$0xff]
      %v1355 = vld [vmem:[%s2 + $0x170] sm:$0xff]
      %v1356 = vld [vmem:[%s2 + $0x178] sm:$0xff]
      %v1357 = vld [vmem:[%s2 + $0x180] sm:$0xff]
      %v1358 = vld [vmem:[%s2 + $0x188] sm:$0xff]
      %v1359 = vld [vmem:[%s2 + $0x190] sm:$0xff]
      %v1360 = vld [vmem:[%s2 + $0x198] sm:$0xff]
      %v1361 = vld [vmem:[%s2 + $0x1a0] sm:$0xff]
      %v1362 = vld [vmem:[%s2 + $0x1a8] sm:$0xff]
      %v1363 = vld [vmem:[%s2 + $0x1b0] sm:$0xff]
      %v1364 = vld [vmem:[%s2 + $0x1b8] sm:$0xff]
      %v1365 = vld [vmem:[%s2 + $0x1c0] sm:$0xff]
      %v1366 = vld [vmem:[%s2 + $0x1c8] sm:$0xff]
      %v1367 = vld [vmem:[%s2 + $0x1d0] sm:$0xff]
      %v1368 = vld [vmem:[%s2 + $0x1d8] sm:$0xff]
      %v1369 = vld [vmem:[%s2 + $0x1e0] sm:$0xff]
      %v1370 = vld [vmem:[%s2 + $0x1e8] sm:$0xff]
      %v1371 = vld [vmem:[%s2 + $0x1f0] sm:$0xff]
      %v1372 = vld [vmem:[%s2 + $0x1f8] sm:$0xff]
      %v1373 = vld [vmem:[#allocation4] sm:$0x3]
      %v1374 = vpack.c.bf16 %v1373, %v1373
      %v1375 = vld [vmem:[%s3] sm:$0xff]
      %v1376 = vld [vmem:[%s3 + $0x8] sm:$0xff]
      %v1377 = vld [vmem:[%s3 + $0x10] sm:$0xff]
      %v1378 = vld [vmem:[%s3 + $0x18] sm:$0xff]
      %v1379 = vld [vmem:[%s3 + $0x20] sm:$0xff]
      %v1380 = vld [vmem:[%s3 + $0x28] sm:$0xff]
      %v1381 = vld [vmem:[%s3 + $0x30] sm:$0xff]
      %v1382 = vld [vmem:[%s3 + $0x38] sm:$0xff]
      %v1383 = vld [vmem:[%s3 + $0x40] sm:$0xff]
      %v1384 = vld [vmem:[%s3 + $0x48] sm:$0xff]
      %v1385 = vld [vmem:[%s3 + $0x50] sm:$0xff]
      %v1386 = vld [vmem:[%s3 + $0x58] sm:$0xff]
      %v1387 = vld [vmem:[%s3 + $0x60] sm:$0xff]
      %v1388 = vld [vmem:[%s3 + $0x68] sm:$0xff]
      %v1389 = vld [vmem:[%s3 + $0x70] sm:$0xff]
      %v1390 = vld [vmem:[%s3 + $0x78] sm:$0xff]
      %v1391 = vld [vmem:[%s3 + $0x80] sm:$0xff]
      %v1392 = vld [vmem:[%s3 + $0x88] sm:$0xff]
      %v1393 = vld [vmem:[%s3 + $0x90] sm:$0xff]
      %v1394 = vld [vmem:[%s3 + $0x98] sm:$0xff]
      %v1395 = vld [vmem:[%s3 + $0xa0] sm:$0xff]
      %v1396 = vld [vmem:[%s3 + $0xa8] sm:$0xff]
      %v1397 = vld [vmem:[%s3 + $0xb0] sm:$0xff]
      %v1398 = vld [vmem:[%s3 + $0xb8] sm:$0xff]
      %v1399 = vld [vmem:[%s3 + $0xc0] sm:$0xff]
      %v1400 = vld [vmem:[%s3 + $0xc8] sm:$0xff]
      %v1401 = vld [vmem:[%s3 + $0xd0] sm:$0xff]
      %v1402 = vld [vmem:[%s3 + $0xd8] sm:$0xff]
      %v1403 = vld [vmem:[%s3 + $0xe0] sm:$0xff]
      %v1404 = vld [vmem:[%s3 + $0xe8] sm:$0xff]
      %v1405 = vld [vmem:[%s3 + $0xf0] sm:$0xff]
      %v1406 = vld [vmem:[%s3 + $0xf8] sm:$0xff]
      %v1439 = vunpack.c.l.b16 %v1375
      %v1440 = vunpack.c.h.b16 %v1375
      %v1441 = vunpack.c.l.b16 %v1376
      %v1442 = vunpack.c.h.b16 %v1376
      %v1443 = vunpack.c.l.b16 %v1377
      %v1444 = vunpack.c.h.b16 %v1377
      %v1445 = vunpack.c.l.b16 %v1378
      %v1446 = vunpack.c.h.b16 %v1378
      %v1447 = vunpack.c.l.b16 %v1379
      %v1448 = vunpack.c.h.b16 %v1379
      %v1449 = vunpack.c.l.b16 %v1380
      %v1450 = vunpack.c.h.b16 %v1380
      %v1451 = vunpack.c.l.b16 %v1381
      %v1452 = vunpack.c.h.b16 %v1381
      %v1453 = vunpack.c.l.b16 %v1382
      %v1454 = vunpack.c.h.b16 %v1382
      %v1455 = vunpack.c.l.b16 %v1383
      %v1456 = vunpack.c.h.b16 %v1383
      %v1457 = vunpack.c.l.b16 %v1384
      %v1458 = vunpack.c.h.b16 %v1384
      %v1459 = vunpack.c.l.b16 %v1385
      %v1460 = vunpack.c.h.b16 %v1385
      %v1461 = vunpack.c.l.b16 %v1386
      %v1462 = vunpack.c.h.b16 %v1386
      %v1463 = vunpack.c.l.b16 %v1387
      %v1464 = vunpack.c.h.b16 %v1387
      %v1465 = vunpack.c.l.b16 %v1388
      %v1466 = vunpack.c.h.b16 %v1388
      %v1467 = vunpack.c.l.b16 %v1389
      %v1468 = vunpack.c.h.b16 %v1389
      %v1469 = vunpack.c.l.b16 %v1390
      %v1470 = vunpack.c.h.b16 %v1390
      %v1471 = vunpack.c.l.b16 %v1391
      %v1472 = vunpack.c.h.b16 %v1391
      %v1473 = vunpack.c.l.b16 %v1392
      %v1474 = vunpack.c.h.b16 %v1392
      %v1475 = vunpack.c.l.b16 %v1393
      %v1476 = vunpack.c.h.b16 %v1393
      %v1477 = vunpack.c.l.b16 %v1394
      %v1478 = vunpack.c.h.b16 %v1394
      %v1479 = vunpack.c.l.b16 %v1395
      %v1480 = vunpack.c.h.b16 %v1395
      %v1481 = vunpack.c.l.b16 %v1396
      %v1482 = vunpack.c.h.b16 %v1396
      %v1483 = vunpack.c.l.b16 %v1397
      %v1484 = vunpack.c.h.b16 %v1397
      %v1485 = vunpack.c.l.b16 %v1398
      %v1486 = vunpack.c.h.b16 %v1398
      %v1487 = vunpack.c.l.b16 %v1399
      %v1488 = vunpack.c.h.b16 %v1399
      %v1489 = vunpack.c.l.b16 %v1400
      %v1490 = vunpack.c.h.b16 %v1400
      %v1491 = vunpack.c.l.b16 %v1401
      %v1492 = vunpack.c.h.b16 %v1401
      %v1493 = vunpack.c.l.b16 %v1402
      %v1494 = vunpack.c.h.b16 %v1402
      %v1495 = vunpack.c.l.b16 %v1403
      %v1496 = vunpack.c.h.b16 %v1403
      %v1497 = vunpack.c.l.b16 %v1404
      %v1498 = vunpack.c.h.b16 %v1404
      %v1499 = vunpack.c.l.b16 %v1405
      %v1500 = vunpack.c.h.b16 %v1405
      %v1501 = vunpack.c.l.b16 %v1406
      %v1502 = vunpack.c.h.b16 %v1406
      %v1503 = vpack.c.b16 %v1443, %v1439
      %v1504 = vpack.c.b16 %v1444, %v1440
      %v1505 = vpack.c.b16 %v1445, %v1441
      %v1506 = vpack.c.b16 %v1446, %v1442
      %v1507 = vpack.c.b16 %v1451, %v1447
      %v1508 = vpack.c.b16 %v1452, %v1448
      %v1509 = vpack.c.b16 %v1453, %v1449
      %v1510 = vpack.c.b16 %v1454, %v1450
      %v1511 = vpack.c.b16 %v1459, %v1455
      %v1512 = vpack.c.b16 %v1460, %v1456
      %v1513 = vpack.c.b16 %v1461, %v1457
      %v1514 = vpack.c.b16 %v1462, %v1458
      %v1515 = vpack.c.b16 %v1467, %v1463
      %v1516 = vpack.c.b16 %v1468, %v1464
      %v1517 = vpack.c.b16 %v1469, %v1465
      %v1518 = vpack.c.b16 %v1470, %v1466
      %v1519 = vpack.c.b16 %v1475, %v1471
      %v1520 = vpack.c.b16 %v1476, %v1472
      %v1521 = vpack.c.b16 %v1477, %v1473
      %v1522 = vpack.c.b16 %v1478, %v1474
      %v1523 = vpack.c.b16 %v1483, %v1479
      %v1524 = vpack.c.b16 %v1484, %v1480
      %v1525 = vpack.c.b16 %v1485, %v1481
      %v1526 = vpack.c.b16 %v1486, %v1482
      %v1527 = vpack.c.b16 %v1491, %v1487
      %v1528 = vpack.c.b16 %v1492, %v1488
      %v1529 = vpack.c.b16 %v1493, %v1489
      %v1530 = vpack.c.b16 %v1494, %v1490
      %v1531 = vpack.c.b16 %v1499, %v1495
      %v1532 = vpack.c.b16 %v1500, %v1496
      %v1533 = vpack.c.b16 %v1501, %v1497
      %v1534 = vpack.c.b16 %v1502, %v1498
      %1567 = vmatprep.subr.bf16.mxu0 %v1532
      %1568 = vmatpush1.bf16.msra.mxu0 %v1531
      %1569 = vmatprep.subr.bf16.mxu0 %v1528
      %1570 = vmatpush1.bf16.msra.mxu0 %v1527
      %1571 = vmatprep.subr.bf16.mxu0 %v1524
      %1572 = vmatpush1.bf16.msra.mxu0 %v1523
      %1573 = vmatprep.subr.bf16.mxu0 %v1520
      %1574 = vmatpush1.bf16.msra.mxu0 %v1519
      %1575 = vmatprep.subr.bf16.mxu0 %v1516
      %1576 = vmatpush1.bf16.msra.mxu0 %v1515
      %1577 = vmatprep.subr.bf16.mxu0 %v1512
      %1578 = vmatpush1.bf16.msra.mxu0 %v1511
      %1579 = vmatprep.subr.bf16.mxu0 %v1508
      %1580 = vmatpush1.bf16.msra.mxu0 %v1507
      %1581 = vmatprep.subr.bf16.mxu0 %v1504
      %1582 = vmatpush1.bf16.msra.mxu0 %v1503
      %1583 = vmatprep.subr.bf16.mxu0 0
      %1584 = vmatpush2.bf16.msra.mxu0 0
      %1585 = vmatprep.subr.bf16.mxu0 0
      %1586 = vmatpush2.bf16.msra.mxu0 0
      %1587 = vmatprep.subr.bf16.mxu0 0
      %1588 = vmatpush2.bf16.msra.mxu0 0
      %1589 = vmatprep.subr.bf16.mxu0 0
      %1590 = vmatpush2.bf16.msra.mxu0 0
      %1591 = vmatprep.subr.bf16.mxu0 0
      %1592 = vmatpush2.bf16.msra.mxu0 0
      %1593 = vmatprep.subr.bf16.mxu0 0
      %1594 = vmatpush2.bf16.msra.mxu0 0
      %1595 = vmatprep.subr.bf16.mxu0 0
      %1596 = vmatpush2.bf16.msra.mxu0 0
      %1597 = vmatprep.subr.bf16.mxu0 0
      %1598 = vmatpush2.bf16.msra.mxu0 0
      %1599 = vmatprep.mubr.bf16.mxu0 0
      %1600 = vmatmul.mubr.bf16.gmra.mxu0 %v1374
      %v1601 = vpop.f32.mrf.mxu0
      %v1602 = vadd.f32 0.0, %v1601
      %v1603 = vpop.f32.mrf.mxu0
      %v1604 = vadd.f32 0.0, %v1603
      %v1605 = vpop.f32.mrf.mxu0
      %v1606 = vpop.f32.mrf.mxu0
      %1607 = vdwg.mxu0
      %1608 = vmatprep.subr.bf16.mxu0 %v1534
      %1609 = vmatpush1.bf16.msra.mxu0 %v1533
      %1610 = vmatprep.subr.bf16.mxu0 %v1530
      %1611 = vmatpush1.bf16.msra.mxu0 %v1529
      %1612 = vmatprep.subr.bf16.mxu0 %v1526
      %1613 = vmatpush1.bf16.msra.mxu0 %v1525
      %1614 = vmatprep.subr.bf16.mxu0 %v1522
      %1615 = vmatpush1.bf16.msra.mxu0 %v1521
      %1616 = vmatprep.subr.bf16.mxu0 %v1518
      %1617 = vmatpush1.bf16.msra.mxu0 %v1517
      %1618 = vmatprep.subr.bf16.mxu0 %v1514
      %1619 = vmatpush1.bf16.msra.mxu0 %v1513
      %1620 = vmatprep.subr.bf16.mxu0 %v1510
      %1621 = vmatpush1.bf16.msra.mxu0 %v1509
      %1622 = vmatprep.subr.bf16.mxu0 %v1506
      %1623 = vmatpush1.bf16.msra.mxu0 %v1505
      %1624 = vmatprep.subr.bf16.mxu0 0
      %1625 = vmatpush2.bf16.msra.mxu0 0
      %1626 = vmatprep.subr.bf16.mxu0 0
      %1627 = vmatpush2.bf16.msra.mxu0 0
      %1628 = vmatprep.subr.bf16.mxu0 0
      %1629 = vmatpush2.bf16.msra.mxu0 0
      %1630 = vmatprep.subr.bf16.mxu0 0
      %1631 = vmatpush2.bf16.msra.mxu0 0
      %1632 = vmatprep.subr.bf16.mxu0 0
      %1633 = vmatpush2.bf16.msra.mxu0 0
      %1634 = vmatprep.subr.bf16.mxu0 0
      %1635 = vmatpush2.bf16.msra.mxu0 0
      %1636 = vmatprep.subr.bf16.mxu0 0
      %1637 = vmatpush2.bf16.msra.mxu0 0
      %1638 = vmatprep.subr.bf16.mxu0 0
      %1639 = vmatpush2.bf16.msra.mxu0 0
      %1640 = vmatprep.mubr.bf16.mxu0 0
      %1641 = vmatmul.mubr.bf16.gmra.mxu0 %v1374
      %v1642 = vpop.f32.mrf.mxu0
      %v1643 = vadd.f32 0.0, %v1642
      %v1644 = vpop.f32.mrf.mxu0
      %v1645 = vadd.f32 0.0, %v1644
      %v1646 = vpop.f32.mrf.mxu0
      %v1647 = vpop.f32.mrf.mxu0
      %1648 = vdwg.mxu0
      %v1713 = vunpack.c.l.b16 %v1309
      %v1714 = vunpack.c.h.b16 %v1309
      %v1715 = vunpack.c.l.b16 %v1310
      %v1716 = vunpack.c.h.b16 %v1310
      %v1717 = vunpack.c.l.b16 %v1311
      %v1718 = vunpack.c.h.b16 %v1311
      %v1719 = vunpack.c.l.b16 %v1312
      %v1720 = vunpack.c.h.b16 %v1312
      %v1721 = vunpack.c.l.b16 %v1313
      %v1722 = vunpack.c.h.b16 %v1313
      %v1723 = vunpack.c.l.b16 %v1314
      %v1724 = vunpack.c.h.b16 %v1314
      %v1725 = vunpack.c.l.b16 %v1315
      %v1726 = vunpack.c.h.b16 %v1315
      %v1727 = vunpack.c.l.b16 %v1316
      %v1728 = vunpack.c.h.b16 %v1316
      %v1729 = vunpack.c.l.b16 %v1317
      %v1730 = vunpack.c.h.b16 %v1317
      %v1731 = vunpack.c.l.b16 %v1318
      %v1732 = vunpack.c.h.b16 %v1318
      %v1733 = vunpack.c.l.b16 %v1319
      %v1734 = vunpack.c.h.b16 %v1319
      %v1735 = vunpack.c.l.b16 %v1320
      %v1736 = vunpack.c.h.b16 %v1320
      %v1737 = vunpack.c.l.b16 %v1321
      %v1738 = vunpack.c.h.b16 %v1321
      %v1739 = vunpack.c.l.b16 %v1322
      %v1740 = vunpack.c.h.b16 %v1322
      %v1741 = vunpack.c.l.b16 %v1323
      %v1742 = vunpack.c.h.b16 %v1323
      %v1743 = vunpack.c.l.b16 %v1324
      %v1744 = vunpack.c.h.b16 %v1324
      %v1745 = vunpack.c.l.b16 %v1325
      %v1746 = vunpack.c.h.b16 %v1325
      %v1747 = vunpack.c.l.b16 %v1326
      %v1748 = vunpack.c.h.b16 %v1326
      %v1749 = vunpack.c.l.b16 %v1327
      %v1750 = vunpack.c.h.b16 %v1327
      %v1751 = vunpack.c.l.b16 %v1328
      %v1752 = vunpack.c.h.b16 %v1328
      %v1753 = vunpack.c.l.b16 %v1329
      %v1754 = vunpack.c.h.b16 %v1329
      %v1755 = vunpack.c.l.b16 %v1330
      %v1756 = vunpack.c.h.b16 %v1330
      %v1757 = vunpack.c.l.b16 %v1331
      %v1758 = vunpack.c.h.b16 %v1331
      %v1759 = vunpack.c.l.b16 %v1332
      %v1760 = vunpack.c.h.b16 %v1332
      %v1761 = vunpack.c.l.b16 %v1333
      %v1762 = vunpack.c.h.b16 %v1333
      %v1763 = vunpack.c.l.b16 %v1334
      %v1764 = vunpack.c.h.b16 %v1334
      %v1765 = vunpack.c.l.b16 %v1335
      %v1766 = vunpack.c.h.b16 %v1335
      %v1767 = vunpack.c.l.b16 %v1336
      %v1768 = vunpack.c.h.b16 %v1336
      %v1769 = vunpack.c.l.b16 %v1337
      %v1770 = vunpack.c.h.b16 %v1337
      %v1771 = vunpack.c.l.b16 %v1338
      %v1772 = vunpack.c.h.b16 %v1338
      %v1773 = vunpack.c.l.b16 %v1339
      %v1774 = vunpack.c.h.b16 %v1339
      %v1775 = vunpack.c.l.b16 %v1340
      %v1776 = vunpack.c.h.b16 %v1340
      %v1777 = vunpack.c.l.b16 %v1341
      %v1778 = vunpack.c.h.b16 %v1341
      %v1779 = vunpack.c.l.b16 %v1342
      %v1780 = vunpack.c.h.b16 %v1342
      %v1781 = vunpack.c.l.b16 %v1343
      %v1782 = vunpack.c.h.b16 %v1343
      %v1783 = vunpack.c.l.b16 %v1344
      %v1784 = vunpack.c.h.b16 %v1344
      %v1785 = vunpack.c.l.b16 %v1345
      %v1786 = vunpack.c.h.b16 %v1345
      %v1787 = vunpack.c.l.b16 %v1346
      %v1788 = vunpack.c.h.b16 %v1346
      %v1789 = vunpack.c.l.b16 %v1347
      %v1790 = vunpack.c.h.b16 %v1347
      %v1791 = vunpack.c.l.b16 %v1348
      %v1792 = vunpack.c.h.b16 %v1348
      %v1793 = vunpack.c.l.b16 %v1349
      %v1794 = vunpack.c.h.b16 %v1349
      %v1795 = vunpack.c.l.b16 %v1350
      %v1796 = vunpack.c.h.b16 %v1350
      %v1797 = vunpack.c.l.b16 %v1351
      %v1798 = vunpack.c.h.b16 %v1351
      %v1799 = vunpack.c.l.b16 %v1352
      %v1800 = vunpack.c.h.b16 %v1352
      %v1801 = vunpack.c.l.b16 %v1353
      %v1802 = vunpack.c.h.b16 %v1353
      %v1803 = vunpack.c.l.b16 %v1354
      %v1804 = vunpack.c.h.b16 %v1354
      %v1805 = vunpack.c.l.b16 %v1355
      %v1806 = vunpack.c.h.b16 %v1355
      %v1807 = vunpack.c.l.b16 %v1356
      %v1808 = vunpack.c.h.b16 %v1356
      %v1809 = vunpack.c.l.b16 %v1357
      %v1810 = vunpack.c.h.b16 %v1357
      %v1811 = vunpack.c.l.b16 %v1358
      %v1812 = vunpack.c.h.b16 %v1358
      %v1813 = vunpack.c.l.b16 %v1359
      %v1814 = vunpack.c.h.b16 %v1359
      %v1815 = vunpack.c.l.b16 %v1360
      %v1816 = vunpack.c.h.b16 %v1360
      %v1817 = vunpack.c.l.b16 %v1361
      %v1818 = vunpack.c.h.b16 %v1361
      %v1819 = vunpack.c.l.b16 %v1362
      %v1820 = vunpack.c.h.b16 %v1362
      %v1821 = vunpack.c.l.b16 %v1363
      %v1822 = vunpack.c.h.b16 %v1363
      %v1823 = vunpack.c.l.b16 %v1364
      %v1824 = vunpack.c.h.b16 %v1364
      %v1825 = vunpack.c.l.b16 %v1365
      %v1826 = vunpack.c.h.b16 %v1365
      %v1827 = vunpack.c.l.b16 %v1366
      %v1828 = vunpack.c.h.b16 %v1366
      %v1829 = vunpack.c.l.b16 %v1367
      %v1830 = vunpack.c.h.b16 %v1367
      %v1831 = vunpack.c.l.b16 %v1368
      %v1832 = vunpack.c.h.b16 %v1368
      %v1833 = vunpack.c.l.b16 %v1369
      %v1834 = vunpack.c.h.b16 %v1369
      %v1835 = vunpack.c.l.b16 %v1370
      %v1836 = vunpack.c.h.b16 %v1370
      %v1837 = vunpack.c.l.b16 %v1371
      %v1838 = vunpack.c.h.b16 %v1371
      %v1839 = vunpack.c.l.b16 %v1372
      %v1840 = vunpack.c.h.b16 %v1372
      %v1841 = vpack.c.b16 %v1717, %v1713
      %v1842 = vpack.c.b16 %v1718, %v1714
      %v1843 = vpack.c.b16 %v1719, %v1715
      %v1844 = vpack.c.b16 %v1720, %v1716
      %v1845 = vpack.c.b16 %v1725, %v1721
      %v1846 = vpack.c.b16 %v1726, %v1722
      %v1847 = vpack.c.b16 %v1727, %v1723
      %v1848 = vpack.c.b16 %v1728, %v1724
      %v1849 = vpack.c.b16 %v1733, %v1729
      %v1850 = vpack.c.b16 %v1734, %v1730
      %v1851 = vpack.c.b16 %v1735, %v1731
      %v1852 = vpack.c.b16 %v1736, %v1732
      %v1853 = vpack.c.b16 %v1741, %v1737
      %v1854 = vpack.c.b16 %v1742, %v1738
      %v1855 = vpack.c.b16 %v1743, %v1739
      %v1856 = vpack.c.b16 %v1744, %v1740
      %v1857 = vpack.c.b16 %v1749, %v1745
      %v1858 = vpack.c.b16 %v1750, %v1746
      %v1859 = vpack.c.b16 %v1751, %v1747
      %v1860 = vpack.c.b16 %v1752, %v1748
      %v1861 = vpack.c.b16 %v1757, %v1753
      %v1862 = vpack.c.b16 %v1758, %v1754
      %v1863 = vpack.c.b16 %v1759, %v1755
      %v1864 = vpack.c.b16 %v1760, %v1756
      %v1865 = vpack.c.b16 %v1765, %v1761
      %v1866 = vpack.c.b16 %v1766, %v1762
      %v1867 = vpack.c.b16 %v1767, %v1763
      %v1868 = vpack.c.b16 %v1768, %v1764
      %v1869 = vpack.c.b16 %v1773, %v1769
      %v1870 = vpack.c.b16 %v1774, %v1770
      %v1871 = vpack.c.b16 %v1775, %v1771
      %v1872 = vpack.c.b16 %v1776, %v1772
      %v1873 = vpack.c.b16 %v1781, %v1777
      %v1874 = vpack.c.b16 %v1782, %v1778
      %v1875 = vpack.c.b16 %v1783, %v1779
      %v1876 = vpack.c.b16 %v1784, %v1780
      %v1877 = vpack.c.b16 %v1789, %v1785
      %v1878 = vpack.c.b16 %v1790, %v1786
      %v1879 = vpack.c.b16 %v1791, %v1787
      %v1880 = vpack.c.b16 %v1792, %v1788
      %v1881 = vpack.c.b16 %v1797, %v1793
      %v1882 = vpack.c.b16 %v1798, %v1794
      %v1883 = vpack.c.b16 %v1799, %v1795
      %v1884 = vpack.c.b16 %v1800, %v1796
      %v1885 = vpack.c.b16 %v1805, %v1801
      %v1886 = vpack.c.b16 %v1806, %v1802
      %v1887 = vpack.c.b16 %v1807, %v1803
      %v1888 = vpack.c.b16 %v1808, %v1804
      %v1889 = vpack.c.b16 %v1813, %v1809
      %v1890 = vpack.c.b16 %v1814, %v1810
      %v1891 = vpack.c.b16 %v1815, %v1811
      %v1892 = vpack.c.b16 %v1816, %v1812
      %v1893 = vpack.c.b16 %v1821, %v1817
      %v1894 = vpack.c.b16 %v1822, %v1818
      %v1895 = vpack.c.b16 %v1823, %v1819
      %v1896 = vpack.c.b16 %v1824, %v1820
      %v1897 = vpack.c.b16 %v1829, %v1825
      %v1898 = vpack.c.b16 %v1830, %v1826
      %v1899 = vpack.c.b16 %v1831, %v1827
      %v1900 = vpack.c.b16 %v1832, %v1828
      %v1901 = vpack.c.b16 %v1837, %v1833
      %v1902 = vpack.c.b16 %v1838, %v1834
      %v1903 = vpack.c.b16 %v1839, %v1835
      %v1904 = vpack.c.b16 %v1840, %v1836
      %1969 = vmatprep.subr.bf16.mxu0 %v1870
      %1970 = vmatpush1.bf16.msra.mxu0 %v1869
      %1971 = vmatprep.subr.bf16.mxu0 %v1866
      %1972 = vmatpush1.bf16.msra.mxu0 %v1865
      %1973 = vmatprep.subr.bf16.mxu0 %v1862
      %1974 = vmatpush1.bf16.msra.mxu0 %v1861
      %1975 = vmatprep.subr.bf16.mxu0 %v1858
      %1976 = vmatpush1.bf16.msra.mxu0 %v1857
      %1977 = vmatprep.subr.bf16.mxu0 %v1854
      %1978 = vmatpush1.bf16.msra.mxu0 %v1853
      %1979 = vmatprep.subr.bf16.mxu0 %v1850
      %1980 = vmatpush1.bf16.msra.mxu0 %v1849
      %1981 = vmatprep.subr.bf16.mxu0 %v1846
      %1982 = vmatpush1.bf16.msra.mxu0 %v1845
      %1983 = vmatprep.subr.bf16.mxu0 %v1842
      %1984 = vmatpush1.bf16.msra.mxu0 %v1841
      %1985 = vmatprep.subr.bf16.mxu0 %v1902
      %1986 = vmatpush2.bf16.msra.mxu0 %v1901
      %1987 = vmatprep.subr.bf16.mxu0 %v1898
      %1988 = vmatpush2.bf16.msra.mxu0 %v1897
      %1989 = vmatprep.subr.bf16.mxu0 %v1894
      %1990 = vmatpush2.bf16.msra.mxu0 %v1893
      %1991 = vmatprep.subr.bf16.mxu0 %v1890
      %1992 = vmatpush2.bf16.msra.mxu0 %v1889
      %1993 = vmatprep.subr.bf16.mxu0 %v1886
      %1994 = vmatpush2.bf16.msra.mxu0 %v1885
      %1995 = vmatprep.subr.bf16.mxu0 %v1882
      %1996 = vmatpush2.bf16.msra.mxu0 %v1881
      %1997 = vmatprep.subr.bf16.mxu0 %v1878
      %1998 = vmatpush2.bf16.msra.mxu0 %v1877
      %1999 = vmatprep.subr.bf16.mxu0 %v1874
      %2000 = vmatpush2.bf16.msra.mxu0 %v1873
      %2001 = vmatprep.mubr.bf16.mxu0 %v1308
      %2002 = vmatmul.mubr.bf16.gmra.mxu0 %v1307
      %v2003 = vpop.f32.mrf.mxu0
      %v2004 = vadd.f32 %v1602, %v2003
      %v2005 = vpop.f32.mrf.mxu0
      %v2006 = vadd.f32 %v1604, %v2005
      %v2007 = vpop.f32.mrf.mxu0
      %v2008 = vpop.f32.mrf.mxu0
      %2009 = vdwg.mxu0
      %2010 = vmatprep.subr.bf16.mxu0 %v1872
      %2011 = vmatpush1.bf16.msra.mxu0 %v1871
      %2012 = vmatprep.subr.bf16.mxu0 %v1868
      %2013 = vmatpush1.bf16.msra.mxu0 %v1867
      %2014 = vmatprep.subr.bf16.mxu0 %v1864
      %2015 = vmatpush1.bf16.msra.mxu0 %v1863
      %2016 = vmatprep.subr.bf16.mxu0 %v1860
      %2017 = vmatpush1.bf16.msra.mxu0 %v1859
      %2018 = vmatprep.subr.bf16.mxu0 %v1856
      %2019 = vmatpush1.bf16.msra.mxu0 %v1855
      %2020 = vmatprep.subr.bf16.mxu0 %v1852
      %2021 = vmatpush1.bf16.msra.mxu0 %v1851
      %2022 = vmatprep.subr.bf16.mxu0 %v1848
      %2023 = vmatpush1.bf16.msra.mxu0 %v1847
      %2024 = vmatprep.subr.bf16.mxu0 %v1844
      %2025 = vmatpush1.bf16.msra.mxu0 %v1843
      %2026 = vmatprep.subr.bf16.mxu0 %v1904
      %2027 = vmatpush2.bf16.msra.mxu0 %v1903
      %2028 = vmatprep.subr.bf16.mxu0 %v1900
      %2029 = vmatpush2.bf16.msra.mxu0 %v1899
      %2030 = vmatprep.subr.bf16.mxu0 %v1896
      %2031 = vmatpush2.bf16.msra.mxu0 %v1895
      %2032 = vmatprep.subr.bf16.mxu0 %v1892
      %2033 = vmatpush2.bf16.msra.mxu0 %v1891
      %2034 = vmatprep.subr.bf16.mxu0 %v1888
      %2035 = vmatpush2.bf16.msra.mxu0 %v1887
      %2036 = vmatprep.subr.bf16.mxu0 %v1884
      %2037 = vmatpush2.bf16.msra.mxu0 %v1883
      %2038 = vmatprep.subr.bf16.mxu0 %v1880
      %2039 = vmatpush2.bf16.msra.mxu0 %v1879
      %2040 = vmatprep.subr.bf16.mxu0 %v1876
      %2041 = vmatpush2.bf16.msra.mxu0 %v1875
      %2042 = vmatprep.mubr.bf16.mxu0 %v1308
      %2043 = vmatmul.mubr.bf16.gmra.mxu0 %v1307
      %v2044 = vpop.f32.mrf.mxu0
      %v2045 = vadd.f32 %v1643, %v2044
      %v2046 = vpop.f32.mrf.mxu0
      %v2047 = vadd.f32 %v1645, %v2046
      %v2048 = vpop.f32.mrf.mxu0
      %v2049 = vpop.f32.mrf.mxu0
      %2050 = vdwg.mxu0
      %v2051 = vld [vmem:[%s4] sm:$0xf]
      %v2053 = vlaneseq
      %v2054 = vshrl.u32 %v2053, 7
      %v2055 = vsub.s32 0, %v2054
      %v2056 = vrot.slane %v2051, %v2055
      %v2057 = vlaneseq
      %v2058 = vshrl.u32 %v2057, 7
      %v2059 = vsub.s32 1, %v2058
      %v2060 = vrot.slane %v2051, %v2059
      %v2061 = vlaneseq
      %v2062 = vshrl.u32 %v2061, 7
      %v2063 = vsub.s32 2, %v2062
      %v2064 = vrot.slane %v2051, %v2063
      %v2065 = vlaneseq
      %v2066 = vshrl.u32 %v2065, 7
      %v2067 = vsub.s32 3, %v2066
      %v2068 = vrot.slane %v2051, %v2067
      %v2073 = vadd.f32 %v2004, %v2056
      %v2074 = vadd.f32 %v2006, %v2060
      %v2075 = vadd.f32 %v2045, %v2064
      %v2076 = vadd.f32 %v2047, %v2068
      %v2077 = vld [vmem:[#allocation5] sm:$0x3]
      %v2078 = vxor.u32 %v2073, 2147483648
      %v2079 = vmul.f32 %v2078, 1.442695
      %v2080 = vpow.pop %v2079
      %v2081 = vadd.f32 %v2080, 1.0
      %v2082 = vrcp.pop %v2081
      %v2083 = vmul.f32 1.0, %v2082
      %v2084 = vxor.u32 %v2074, 2147483648
      %v2085 = vmul.f32 %v2084, 1.442695
      %v2086 = vpow.pop %v2085
      %v2087 = vadd.f32 %v2086, 1.0
      %v2088 = vrcp.pop %v2087
      %v2089 = vmul.f32 1.0, %v2088
      %v2090 = vtanh.pop %v2075
      %v2091 = vxor.u32 %v2076, 2147483648
      %v2092 = vmul.f32 %v2091, 1.442695
      %v2093 = vpow.pop %v2092
      %v2094 = vadd.f32 %v2093, 1.0
      %v2095 = vrcp.pop %v2094
      %v2096 = vmul.f32 1.0, %v2095
      %v2097 = vmul.f32 %v2089, %v2077
      %v2098 = vmul.f32 %v2083, %v2090
      %v2099 = vadd.f32 %v2097, %v2098
      %v2100 = vtanh.pop %v2099
      %v2101 = vmul.f32 %v2096, %v2100
      %2102 = vst [vmem:[#allocation4] sm:$0x3] %v2101
      %2103 = vst [vmem:[#allocation5] sm:$0x3] %v2099
      %v2104 = vpack.c.bf16 %v2101, %v2101
      %v2105 = vld [vmem:[%s5] sm:$0xf]
      %v2106 = vld [vmem:[%s5 + $0x4] sm:$0xf]
      %v2107 = vld [vmem:[%s5 + $0x8] sm:$0xf]
      %v2108 = vld [vmem:[%s5 + $0xc] sm:$0xf]
      %v2109 = vld [vmem:[%s5 + $0x10] sm:$0xf]
      %v2110 = vld [vmem:[%s5 + $0x14] sm:$0xf]
      %v2111 = vld [vmem:[%s5 + $0x18] sm:$0xf]
      %v2112 = vld [vmem:[%s5 + $0x1c] sm:$0xf]
      %v2113 = vld [vmem:[%s5 + $0x20] sm:$0xf]
      %v2114 = vld [vmem:[%s5 + $0x24] sm:$0xf]
      %v2115 = vld [vmem:[%s5 + $0x28] sm:$0xf]
      %v2116 = vld [vmem:[%s5 + $0x2c] sm:$0xf]
      %v2117 = vld [vmem:[%s5 + $0x30] sm:$0xf]
      %v2118 = vld [vmem:[%s5 + $0x34] sm:$0xf]
      %v2119 = vld [vmem:[%s5 + $0x38] sm:$0xf]
      %v2120 = vld [vmem:[%s5 + $0x3c] sm:$0xf]
      %v2121 = vld [vmem:[%s6] sm:$0x1]
      %v2123 = vlaneseq
      %v2124 = vshrl.u32 %v2123, 7
      %v2125 = vsub.s32 0, %v2124
      %v2126 = vrot.slane %v2121, %v2125
      %v2144 = vunpack.c.l.b16 %v2105
      %v2145 = vunpack.c.l.b16 %v2106
      %v2146 = vunpack.c.l.b16 %v2107
      %v2147 = vunpack.c.l.b16 %v2108
      %v2148 = vunpack.c.l.b16 %v2109
      %v2149 = vunpack.c.l.b16 %v2110
      %v2150 = vunpack.c.l.b16 %v2111
      %v2151 = vunpack.c.l.b16 %v2112
      %v2152 = vunpack.c.l.b16 %v2113
      %v2153 = vunpack.c.l.b16 %v2114
      %v2154 = vunpack.c.l.b16 %v2115
      %v2155 = vunpack.c.l.b16 %v2116
      %v2156 = vunpack.c.l.b16 %v2117
      %v2157 = vunpack.c.l.b16 %v2118
      %v2158 = vunpack.c.l.b16 %v2119
      %v2159 = vunpack.c.l.b16 %v2120
      %v2160 = vpack.c.b16 %v2145, %v2144
      %v2161 = vpack.c.b16 %v2147, %v2146
      %v2162 = vpack.c.b16 %v2149, %v2148
      %v2163 = vpack.c.b16 %v2151, %v2150
      %v2164 = vpack.c.b16 %v2153, %v2152
      %v2165 = vpack.c.b16 %v2155, %v2154
      %v2166 = vpack.c.b16 %v2157, %v2156
      %v2167 = vpack.c.b16 %v2159, %v2158
      %2176 = vmatprep.subr.bf16.mxu0 0
      %2177 = vmatpush1.bf16.msra.mxu0 %v2167
      %2178 = vmatprep.subr.bf16.mxu0 0
      %2179 = vmatpush1.bf16.msra.mxu0 %v2166
      %2180 = vmatprep.subr.bf16.mxu0 0
      %2181 = vmatpush1.bf16.msra.mxu0 %v2165
      %2182 = vmatprep.subr.bf16.mxu0 0
      %2183 = vmatpush1.bf16.msra.mxu0 %v2164
      %2184 = vmatprep.subr.bf16.mxu0 0
      %2185 = vmatpush1.bf16.msra.mxu0 %v2163
      %2186 = vmatprep.subr.bf16.mxu0 0
      %2187 = vmatpush1.bf16.msra.mxu0 %v2162
      %2188 = vmatprep.subr.bf16.mxu0 0
      %2189 = vmatpush1.bf16.msra.mxu0 %v2161
      %2190 = vmatprep.subr.bf16.mxu0 0
      %2191 = vmatpush1.bf16.msra.mxu0 %v2160
      %2192 = vmatprep.subr.bf16.mxu0 0
      %2193 = vmatpush2.bf16.msra.mxu0 0
      %2194 = vmatprep.subr.bf16.mxu0 0
      %2195 = vmatpush2.bf16.msra.mxu0 0
      %2196 = vmatprep.subr.bf16.mxu0 0
      %2197 = vmatpush2.bf16.msra.mxu0 0
      %2198 = vmatprep.subr.bf16.mxu0 0
      %2199 = vmatpush2.bf16.msra.mxu0 0
      %2200 = vmatprep.subr.bf16.mxu0 0
      %2201 = vmatpush2.bf16.msra.mxu0 0
      %2202 = vmatprep.subr.bf16.mxu0 0
      %2203 = vmatpush2.bf16.msra.mxu0 0
      %2204 = vmatprep.subr.bf16.mxu0 0
      %2205 = vmatpush2.bf16.msra.mxu0 0
      %2206 = vmatprep.subr.bf16.mxu0 0
      %2207 = vmatpush2.bf16.msra.mxu0 0
      %2208 = vmatprep.mubr.bf16.mxu0 0
      %2209 = vmatmul.mubr.bf16.gmra.mxu0 %v2104
      %v2210 = vpop.f32.mrf.mxu0
      %v2211 = vadd.f32 %v2126, %v2210
      %v2212 = vpop.f32.mrf.mxu0
      %v2213 = vpop.f32.mrf.mxu0
      %v2214 = vpop.f32.mrf.mxu0
      %2215 = vdwg.mxu0
      %v2216 = vxor.u32 %v2211, 2147483648
      %v2217 = vmul.f32 %v2216, 1.442695
      %v2218 = vpow.pop %v2217
      %v2219 = vadd.f32 %v2218, 1.0
      %v2220 = vrcp.pop %v2219
      %v2221 = vmul.f32 1.0, %v2220
      %2222 = vst [vmem:[%s256] sm:$0x3] %v2221
      %p2223 = scmp.lt.s32.totalorder %s18, 15
      %s2224 = scalar_select %p2223, %s18, 15
      %s2225 = smul.addr %s2224, 2
      %s2226 = scalar_lea.vmem %s7, %s2225
      // Predicated region
      $region53: #{music_transcription_forward.5} parent=47 // pred_check
        %p2227 = pneg %p183
      $region54: #{music_transcription_forward.5} parent=47 // pred_check_branch
        %2229 = sbr.rel (%p2227) target = $region56
      $region55: #{music_transcription_forward.5} parent=47 // pred_region
        _
      $region56: #{music_transcription_forward.5} parent=47 // pred_fallthru
        _
    $region48: #{music_transcription_forward.5} parent=5 // pred_fallthru
      _
    %p2230 = scmp.le.s32.totalorder 2, %s13
    // Predicated region
    $region57: #{music_transcription_forward.5} parent=5 // pred_check
      %p2231 = pneg %p2230
    $region58: #{music_transcription_forward.5} parent=5 // pred_check_branch
      %2233 = sbr.rel (%p2231) target = $region60
    $region59: #{music_transcription_forward.5} parent=5 // pred_region
      %s2234 = ssub.s32 %s13, 2
      // Predicated region
      $region61: #{music_transcription_forward.5} parent=59 // pred_check
        %p2235 = pneg %p189
      $region62: #{music_transcription_forward.5} parent=59 // pred_check_branch
        %2237 = sbr.rel (%p2235) target = $region64
      $region63: #{music_transcription_forward.5} parent=59 // pred_region
        %p2238 = scmp.lt.s32.totalorder %s19, 15
        %s2239 = scalar_select %p2238, %s19, 15
        %s2240 = smul.addr %s2239, 2
        %s2241 = scalar_lea.vmem %s7, %s2240
      $region64: #{music_transcription_forward.5} parent=59 // pred_fallthru
        _
    $region60: #{music_transcription_forward.5} parent=5 // pred_fallthru
      _
  $region6: #{music_transcription_forward.5} parent=0 // loop_footer
    %s17 = sadd.s32 1, %s13
  $region7: #{music_transcription_forward.5} parent=0 // loop_footer_branch
    %12 = sbr.rel target = $region3
  $region8: #{music_transcription_forward.5} parent=0 // loop_exit
    _

</llo_original>
